<compile_context>
chip_gen: v7x
topology: tpu7x:2x2x1
jax: 0.10.0
libtpu: 0.0.40
codegen_flags: <defaults>
</compile_context>

<pallas_src>
import functools

import jax
import jax.numpy as jnp
from jax.experimental import pallas as pl
from jax.experimental.pallas import tpu as pltpu


# -----------------------------------------------------------------------------
# VMEM budgeting helpers
# -----------------------------------------------------------------------------
_VMEM_LIMIT_BYTES = 48 * 1024 * 1024   # explicit scoped limit; < v7x physical 64 MiB
_VMEM_TILE_BUDGET = 32 * 1024 * 1024   # conservative budget used for tile sizing


def _round_up(x, m):
    return (x + m - 1) // m * m


def _pick_time_chunk(T_pad, B, H, budget=_VMEM_TILE_BUDGET, cap=32):
    """Largest divisor of T_pad (<= cap) whose pipeline buffers fit the VMEM budget."""
    per_t = 2 * B * 4 * H * 2 + 2 * B * H * 2          # dbl-buffered gx + out blocks (bf16)
    fixed = (2 * H * 4 * H * 2                         # dbl-buffered W_hh (bf16)
             + 2 * B * H * 4                           # dbl-buffered h_fin output (f32)
             + B * H * (2 + 4)                         # h (bf16) / c (f32) scratch
             + (1 << 16))                              # headroom for internal scratch
    tc_max = max(1, min(cap, (budget - fixed) // per_t))
    for tc in range(min(tc_max, T_pad), 0, -1):
        if T_pad % tc == 0:
            return tc
    return 1


def _pick_row_tile(N, f_total, G8, budget=_VMEM_TILE_BUDGET, cap=512):
    """Row tile for the hoisted projection GEMM, sized against the VMEM budget."""
    per_row = 2 * f_total * 2 + 2 * G8 * 2 + G8 * 4    # dbl-buf X + dbl-buf out + f32 acc
    fixed = 2 * f_total * G8 * 2 + G8 * 4 + (1 << 16)  # dbl-buf weights + bias + headroom
    rt_max = max(8, min(cap, (budget - fixed) // max(per_row, 1)))
    for rt in range(min(rt_max, N), 7, -1):
        if N % rt == 0 and rt % 8 == 0:                # (8,128) sublane alignment
            return rt
    return N                                           # N is a padded multiple of 64


# -----------------------------------------------------------------------------
# Phase 1: hoisted input projection (one GEMM streams X once for BOTH directions)
#   gates_cat = sum_s X_s @ W_cat_s + b_cat      with W_cat (F, 8H), b_cat (1, 8H)
#   output stored direction-major (2, N, 4H) in bf16.
# -----------------------------------------------------------------------------
def make_proj_kernel(n_seg, G4):
    def kernel(*refs):
        xs = refs[:n_seg]
        ws = refs[n_seg:2 * n_seg]
        b_ref = refs[2 * n_seg]
        o_ref = refs[2 * n_seg + 1]                     # (2, rt, 4H) bf16
        rt = o_ref.shape[1]
        # NOTE: at production 4H, add a column-tile grid axis over G and accumulate
        # in a VMEM scratch to bound vreg/VMEM pressure (toy sizes: value acc is fine).
        acc = jnp.zeros((rt, 2 * G4), jnp.float32)
        for x_ref, w_ref in zip(xs, ws):
            x = x_ref[...]
            if x.dtype != jnp.bfloat16:                 # layer-0 f32 embeddings only
                x = x.astype(jnp.bfloat16)
            acc = acc + jnp.dot(x, w_ref[...], preferred_element_type=jnp.float32)
        acc = (acc + b_ref[...]).astype(jnp.bfloat16)   # bf16 gates_x: halves HBM stream
        o_ref[0] = acc[:, :G4]                          # forward-direction gates
        o_ref[1] = acc[:, G4:]                          # backward-direction gates
    return kernel


def input_projection(x_segs, w_segs, bias):
    """x_segs: list of (N, F_s); w_segs: list of (F_s, 8H) bf16; bias: (1, 8H) f32.
    Returns gates_x (2, N, 4H) bf16 (direction-major)."""
    N = x_segs[0].shape[0]
    G8 = bias.shape[-1]
    G4 = G8 // 2
    f_total = sum(x.shape[1] for x in x_segs)
    rt = _pick_row_tile(N, f_total, G8)
    n_seg = len(x_segs)
    in_specs = (
        [pl.BlockSpec((rt, x.shape[1]), lambda r: (r, 0)) for x in x_segs] +
        [pl.BlockSpec(w.shape, lambda r: (0, 0)) for w in w_segs] +
        [pl.BlockSpec((1, G8), lambda r: (0, 0))]
    )
    return pl.pallas_call(
        make_proj_kernel(n_seg, G4),
        out_shape=jax.ShapeDtypeStruct((2, N, G4), jnp.bfloat16),
        grid_spec=pltpu.PrefetchScalarGridSpec(
            num_scalar_prefetch=0,
            grid=(N // rt,),
            in_specs=in_specs,
            out_specs=pl.BlockSpec((2, rt, G4), lambda r: (0, r, 0)),
        ),
        compiler_params=pltpu.CompilerParams(
            dimension_semantics=("parallel",),
            vmem_limit_bytes=_VMEM_LIMIT_BYTES),
    )(*x_segs, *w_segs, bias)


# -----------------------------------------------------------------------------
# Phase 2: fused bidirectional recurrence.
# grid = (direction, time-chunk). Chunks carry (h bf16, c f32) in VMEM scratch; a
# partially-unrolled fori_loop walks the Tc steps of each chunk (forward order for
# d=0, reverse order for d=1 -> exactly the packed reversed traversal).
# -----------------------------------------------------------------------------
def lstm_recurrent_kernel(gx_ref, len_ref, whh_ref, out_ref, hfin_ref,
                          h_scr, c_scr, *, Tc, H, unroll):
    d = pl.program_id(0)
    c = pl.program_id(1)
    nc = pl.num_programs(1)

    @pl.when(c == 0)
    def _init():
        h_scr[...] = jnp.zeros_like(h_scr)
        c_scr[...] = jnp.zeros_like(c_scr)

    lengths = len_ref[...]                               # (B, 1) int32
    whh = whh_ref[...]                                   # (H, 4H) bf16, resident
    # hoisted scalar address math (no per-step selects)
    base = d * (Tc - 1)
    sign = 1 - 2 * d
    chunk_start = (c + d * (nc - 1 - 2 * c)) * Tc        # matches the block index map

    def step(k, carry):
        h, cell = carry                                  # h: bf16, cell: f32
        tl = base + sign * k                             # local time inside chunk
        t = chunk_start + tl                             # global time index
        gates = gx_ref[tl].astype(jnp.float32) + jnp.dot(
            h, whh, preferred_element_type=jnp.float32)
        ig = jax.nn.sigmoid(gates[:, 0:H])
        fg = jax.nn.sigmoid(gates[:, H:2 * H])
        gg = jnp.tanh(gates[:, 2 * H:3 * H])
        og = jax.nn.sigmoid(gates[:, 3 * H:4 * H])
        c_new = fg * cell + ig * gg
        h_new = (og * jnp.tanh(c_new)).astype(jnp.bfloat16)   # single cast, reused below
        valid = t < lengths                              # packed-sequence mask (B, 1)
        out_ref[tl] = jnp.where(valid, h_new, jnp.zeros_like(h_new))  # pad -> zeros
        return jnp.where(valid, h_new, h), jnp.where(valid, c_new, cell)

    h_last, c_last = jax.lax.fori_loop(
        0, Tc, step, (h_scr[...], c_scr[...]), unroll=unroll)
    h_scr[...] = h_last
    c_scr[...] = c_last

    @pl.when(c == nc - 1)                                # gated resident store
    def _final():
        hfin_ref[...] = h_last.astype(jnp.float32)


def bilstm_layer(gates_x, lengths2d, w_hh, T, B, H, Tc):
    """gates_x: (2, T, B, 4H) bf16; w_hh: (2, H, 4H) bf16.
    Returns out_seq (2, T, B, H) bf16 (direction-major), h_final (2, B, H) f32."""
    nc = T // Tc
    t_map = lambda d, c: (d, c + d * (nc - 1 - 2 * c), 0, 0)   # fwd: c ; bwd: nc-1-c

    # TODO(synk): on v7x use CORE_PARALLEL (or pl.core_map) for the direction axis so
    # each TensorCore runs one direction; kept "parallel" here for v5e/v6e portability.
    # TODO(synk): at production H, mark whh/lengths pipeline_mode=pl.Buffered(1)
    # (constant block within a direction) to reclaim VMEM; and on v7x consider fusing
    # the input projection per chunk to remove the gates_x HBM round-trip.
    out_seq, h_fin = pl.pallas_call(
        functools.partial(lstm_recurrent_kernel, Tc=Tc, H=H, unroll=min(Tc, 8)),
        out_shape=(jax.ShapeDtypeStruct((2, T, B, H), jnp.bfloat16),
                   jax.ShapeDtypeStruct((2, B, H), jnp.float32)),
        grid_spec=pltpu.PrefetchScalarGridSpec(
            num_scalar_prefetch=0,
            grid=(2, nc),
            in_specs=[
                pl.BlockSpec((None, Tc, B, 4 * H), t_map),
                pl.BlockSpec((B, 1), lambda d, c: (0, 0)),
                pl.BlockSpec((None, H, 4 * H), lambda d, c: (d, 0, 0)),
            ],
            out_specs=[
                pl.BlockSpec((None, Tc, B, H), t_map),
                pl.BlockSpec((None, B, H), lambda d, c: (d, 0, 0)),
            ],
            scratch_shapes=[pltpu.VMEM((B, H), jnp.bfloat16),   # h carried in bf16
                            pltpu.VMEM((B, H), jnp.float32)],   # c stays f32
        ),
        compiler_params=pltpu.CompilerParams(
            dimension_semantics=("parallel", "arbitrary"),
            vmem_limit_bytes=_VMEM_LIMIT_BYTES),
    )(gates_x, lengths2d, w_hh)
    return out_seq, h_fin


# -----------------------------------------------------------------------------
# Full forward pass (matches RNN.forward semantics, eval mode)
# -----------------------------------------------------------------------------
@jax.jit
def rnn_forward(params, text, text_lengths):
    T, B = text.shape
    H = params["lstm"][0]["w_hh"].shape[1]

    # Pad batch to a sublane multiple and time to a chunkable multiple; padded batch
    # entries get length 0 and padded timesteps are masked by the length test.
    # NOTE: production H should be a multiple of 128 (lane-aligned gate slices).
    B_pad = _round_up(B, 8)
    T_pad = _round_up(T, 8)
    Tc = _pick_time_chunk(T_pad, B_pad, H)

    text_p = jnp.pad(text, ((0, T_pad - T), (0, B_pad - B)))          # value is masked
    lengths2d = jnp.pad(text_lengths.astype(jnp.int32),
                        (0, B_pad - B)).reshape(B_pad, 1)

    # Embedding lookup (gather) is XLA glue; dropout is identity in eval mode.
    # TODO(synk): training-mode dropout (stochastic) is not implemented (eval only).
    emb = params["embedding"][text_p]                                  # (T_pad, B_pad, E)
    x_segs = [emb.reshape(T_pad * B_pad, emb.shape[-1])]

    h_fin = None
    for layer in params["lstm"]:
        gates = input_projection(x_segs, layer["w_ih_segs"], layer["b"])  # (2,N,4H) bf16
        gates = gates.reshape(2, T_pad, B_pad, 4 * H)
        out_seq, h_fin = bilstm_layer(gates, lengths2d, layer["w_hh"],
                                      T_pad, B_pad, H, Tc)
        # next layer consumes the two bf16 direction slabs directly (no concatenate)
        x_segs = [out_seq[0].reshape(T_pad * B_pad, H),
                  out_seq[1].reshape(T_pad * B_pad, H)]

    # hidden[-2] = fwd dir of last layer, hidden[-1] = bwd dir of last layer
    hidden = jnp.concatenate([h_fin[0], h_fin[1]], axis=-1)[:B]        # (B, 2H) f32
    # Tiny (B,2H)x(2H,O) matmul: left to XLA (a dedicated pallas_call here is
    # pure launch/DMA overhead, per perf review).
    return hidden @ params["fc_w"] + params["fc_b"]


# -----------------------------------------------------------------------------
# Deterministic parameter construction (shapes as in the nn.Module __init__)
# -----------------------------------------------------------------------------
def init_params(key, vocab_size, embedding_dim, hidden_dim, output_dim,
                n_layers, pad_idx):
    keys = iter(jax.random.split(key, 2 + 4 * n_layers))
    H = hidden_dim

    emb = 0.1 * jax.random.normal(next(keys), (vocab_size, embedding_dim), jnp.float32)
    emb = emb.at[pad_idx].set(0.0)          # padding_idx row zeroed like nn.Embedding

    layers = []
    for l in range(n_layers):
        d_in = embedding_dim if l == 0 else 2 * hidden_dim
        # direction-stacked weights: index 0 = forward, 1 = backward
        w_ih = 0.1 * jax.random.normal(next(keys), (2, d_in, 4 * H), jnp.float32)  # W_ih^T
        w_hh = 0.1 * jax.random.normal(next(keys), (2, H, 4 * H), jnp.float32)     # W_hh^T
        b_ih = 0.1 * jax.random.normal(next(keys), (2, 1, 4 * H), jnp.float32)
        b_hh = 0.1 * jax.random.normal(next(keys), (2, 1, 4 * H), jnp.float32)

        # fold directions along the output axis -> single (d_in, 8H) GEMM weight
        w_cat = jnp.concatenate([w_ih[0], w_ih[1]], axis=-1)           # (d_in, 8H)
        if l == 0:
            segs = [w_cat.astype(jnp.bfloat16)]                        # single input seg
        else:
            segs = [w_cat[:H].astype(jnp.bfloat16),                    # fwd-feature rows
                    w_cat[H:].astype(jnp.bfloat16)]                    # bwd-feature rows
        b_sum = b_ih + b_hh                                            # (2, 1, 4H)
        b_cat = jnp.concatenate([b_sum[0], b_sum[1]], axis=-1)         # (1, 8H)

        layers.append({
            "w_ih_segs": segs,                                         # bf16 MXU weights
            "w_hh": w_hh.astype(jnp.bfloat16),
            "b": b_cat.astype(jnp.float32),                            # combined bias f32
        })

    fc_w = 0.1 * jax.random.normal(next(keys), (2 * H, output_dim), jnp.float32)
    fc_b = 0.05 * jnp.ones((output_dim,), jnp.float32)

    return {"embedding": emb, "lstm": layers, "fc_w": fc_w, "fc_b": fc_b}


if __name__ == "__main__":
    VOCAB, EMB, HID, OUT, N_LAYERS, PAD_IDX = 64, 32, 32, 6, 2, 1
    T, B = 8, 2

    key = jax.random.PRNGKey(0)
    k_tok, k_par = jax.random.split(key)

    # text: [seq_len, batch] int tokens; lengths sorted descending (pack_padded_sequence)
    text = jax.random.randint(k_tok, (T, B), 0, VOCAB, dtype=jnp.int32)
    text_lengths = jnp.array([8, 5], dtype=jnp.int32)
    time_ix = jnp.arange(T)[:, None]
    text = jnp.where(time_ix < text_lengths[None, :], text, PAD_IDX)

    params = init_params(k_par, VOCAB, EMB, HID, OUT, N_LAYERS, PAD_IDX)

    out = rnn_forward(params, text, text_lengths)
    out = jax.block_until_ready(out)
    assert out.shape == (B, OUT) and out.dtype == jnp.float32
    print("KERNEL_OK")
</pallas_src>

<mosaic_0001>
module attributes {stable_mosaic.version = 11 : i64} {
  func.func @kernel(%arg0: i32, %arg1: memref<64x32xf32, #tpu.memory_space<vmem>>, %arg2: memref<32x256xbf16, #tpu.memory_space<vmem>>, %arg3: memref<1x256xf32, #tpu.memory_space<vmem>>, %arg4: memref<2x64x128xbf16, #tpu.memory_space<vmem>>) attributes {dimension_semantics = [#tpu.dimension_semantics<parallel>], iteration_bounds = array<i64: 1>, scalar_prefetch = 0 : i64, scratch_operands = 0 : i64, tpu.core_type = #tpu.core_type<tc>, window_params = [{transform_indices = @transform_0, window_bounds = array<i64: 64, 32>}, {pipeline_mode = #tpu.pipeline_mode<synchronous>, transform_indices = @transform_1, window_bounds = array<i64: 32, 256>}, {pipeline_mode = #tpu.pipeline_mode<synchronous>, transform_indices = @transform_2, window_bounds = array<i64: 1, 256>}, {transform_indices = @transform_3, window_bounds = array<i64: 2, 64, 128>}]} {
    %cst = arith.constant 0.000000e+00 : f32
    %0 = vector.broadcast %cst : f32 to vector<64x256xf32>
    %c0 = arith.constant 0 : index
    %c0_0 = arith.constant 0 : index
    %1 = vector.load %arg1[%c0, %c0_0] : memref<64x32xf32, #tpu.memory_space<vmem>>, vector<64x32xf32>
    %2 = arith.truncf %1 : vector<64x32xf32> to vector<64x32xbf16>
    %c0_1 = arith.constant 0 : index
    %c0_2 = arith.constant 0 : index
    %3 = vector.load %arg2[%c0_1, %c0_2] : memref<32x256xbf16, #tpu.memory_space<vmem>>, vector<32x256xbf16>
    %cst_3 = arith.constant dense<0.000000e+00> : vector<64x256xf32>
    %4 = tpu.matmul %2, %3, %cst_3 {dimension_numbers = #tpu.dot_dimension_numbers<[1], [0], [0], [1], [0, 0, 1, 1], [], []>} : vector<64x32xbf16>, vector<32x256xbf16>, vector<64x256xf32> -> vector<64x256xf32>
    %5 = arith.addf %0, %4 : vector<64x256xf32>
    %c0_4 = arith.constant 0 : index
    %c0_5 = arith.constant 0 : index
    %6 = vector.load %arg3[%c0_4, %c0_5] : memref<1x256xf32, #tpu.memory_space<vmem>>, vector<1x256xf32>
    %7 = vector.broadcast %6 : vector<1x256xf32> to vector<64x256xf32>
    %8 = arith.addf %5, %7 : vector<64x256xf32>
    %9 = arith.truncf %8 : vector<64x256xf32> to vector<64x256xbf16>
    %10 = vector.extract_strided_slice %9 {offsets = [0, 0], sizes = [64, 128], strides = [1, 1]} : vector<64x256xbf16> to vector<64x128xbf16>
    %c0_6 = arith.constant 0 : index
    %c0_7 = arith.constant 0 : index
    %c0_8 = arith.constant 0 : index
    %11 = vector.load %arg4[%c0_6, %c0_7, %c0_8] : memref<2x64x128xbf16, #tpu.memory_space<vmem>>, vector<1x64x128xbf16>
    %12 = vector.shape_cast %11 : vector<1x64x128xbf16> to vector<64x128xbf16>
    %13 = vector.shape_cast %10 : vector<64x128xbf16> to vector<1x64x128xbf16>
    tpu.vector_store %arg4[%c0_6, %c0_7, %c0_8], %13 {strides = array<i32>} : memref<2x64x128xbf16, #tpu.memory_space<vmem>>, vector<1x64x128xbf16>,
    %14 = vector.extract_strided_slice %9 {offsets = [0, 128], sizes = [64, 128], strides = [1, 1]} : vector<64x256xbf16> to vector<64x128xbf16>
    %c1 = arith.constant 1 : index
    %c0_9 = arith.constant 0 : index
    %c0_10 = arith.constant 0 : index
    %15 = vector.load %arg4[%c1, %c0_9, %c0_10] : memref<2x64x128xbf16, #tpu.memory_space<vmem>>, vector<1x64x128xbf16>
    %16 = vector.shape_cast %15 : vector<1x64x128xbf16> to vector<64x128xbf16>
    %17 = vector.shape_cast %14 : vector<64x128xbf16> to vector<1x64x128xbf16>
    tpu.vector_store %arg4[%c1, %c0_9, %c0_10], %17 {strides = array<i32>} : memref<2x64x128xbf16, #tpu.memory_space<vmem>>, vector<1x64x128xbf16>,
    return
  }
  func.func @transform_0(%arg0: i32) -> (i32, i32) {
    %c0_i32 = arith.constant 0 : i32
    %c0_i32_0 = arith.constant 0 : i32
    return %arg0, %c0_i32 : i32, i32
  }
  func.func @transform_1(%arg0: i32) -> (i32, i32) {
    %c0_i32 = arith.constant 0 : i32
    %c0_i32_0 = arith.constant 0 : i32
    %c0_i32_1 = arith.constant 0 : i32
    return %c0_i32, %c0_i32_0 : i32, i32
  }
  func.func @transform_2(%arg0: i32) -> (i32, i32) {
    %c0_i32 = arith.constant 0 : i32
    %c0_i32_0 = arith.constant 0 : i32
    %c0_i32_1 = arith.constant 0 : i32
    return %c0_i32, %c0_i32_0 : i32, i32
  }
  func.func @transform_3(%arg0: i32) -> (i32, i32, i32) {
    %c0_i32 = arith.constant 0 : i32
    %c0_i32_0 = arith.constant 0 : i32
    %c0_i32_1 = arith.constant 0 : i32
    return %c0_i32, %arg0, %c0_i32_0 : i32, i32, i32
  }
}

module attributes {stable_mosaic.version = 11 : i64} {
  func.func @kernel(%arg0: i32, %arg1: memref<64x32xbf16, #tpu.memory_space<vmem>>, %arg2: memref<64x32xbf16, #tpu.memory_space<vmem>>, %arg3: memref<32x256xbf16, #tpu.memory_space<vmem>>, %arg4: memref<32x256xbf16, #tpu.memory_space<vmem>>, %arg5: memref<1x256xf32, #tpu.memory_space<vmem>>, %arg6: memref<2x64x128xbf16, #tpu.memory_space<vmem>>) attributes {dimension_semantics = [#tpu.dimension_semantics<parallel>], iteration_bounds = array<i64: 1>, scalar_prefetch = 0 : i64, scratch_operands = 0 : i64, tpu.core_type = #tpu.core_type<tc>, window_params = [{transform_indices = @transform_0, window_bounds = array<i64: 64, 32>}, {transform_indices = @transform_1, window_bounds = array<i64: 64, 32>}, {pipeline_mode = #tpu.pipeline_mode<synchronous>, transform_indices = @transform_2, window_bounds = array<i64: 32, 256>}, {pipeline_mode = #tpu.pipeline_mode<synchronous>, transform_indices = @transform_3, window_bounds = array<i64: 32, 256>}, {pipeline_mode = #tpu.pipeline_mode<synchronous>, transform_indices = @transform_4, window_bounds = array<i64: 1, 256>}, {transform_indices = @transform_5, window_bounds = array<i64: 2, 64, 128>}]} {
    %cst = arith.constant 0.000000e+00 : f32
    %0 = vector.broadcast %cst : f32 to vector<64x256xf32>
    %c0 = arith.constant 0 : index
    %c0_0 = arith.constant 0 : index
    %1 = vector.load %arg1[%c0, %c0_0] : memref<64x32xbf16, #tpu.memory_space<vmem>>, vector<64x32xbf16>
    %c0_1 = arith.constant 0 : index
    %c0_2 = arith.constant 0 : index
    %2 = vector.load %arg3[%c0_1, %c0_2] : memref<32x256xbf16, #tpu.memory_space<vmem>>, vector<32x256xbf16>
    %cst_3 = arith.constant dense<0.000000e+00> : vector<64x256xf32>
    %3 = tpu.matmul %1, %2, %cst_3 {dimension_numbers = #tpu.dot_dimension_numbers<[1], [0], [0], [1], [0, 0, 1, 1], [], []>} : vector<64x32xbf16>, vector<32x256xbf16>, vector<64x256xf32> -> vector<64x256xf32>
    %4 = arith.addf %0, %3 : vector<64x256xf32>
    %c0_4 = arith.constant 0 : index
    %c0_5 = arith.constant 0 : index
    %5 = vector.load %arg2[%c0_4, %c0_5] : memref<64x32xbf16, #tpu.memory_space<vmem>>, vector<64x32xbf16>
    %c0_6 = arith.constant 0 : index
    %c0_7 = arith.constant 0 : index
    %6 = vector.load %arg4[%c0_6, %c0_7] : memref<32x256xbf16, #tpu.memory_space<vmem>>, vector<32x256xbf16>
    %cst_8 = arith.constant dense<0.000000e+00> : vector<64x256xf32>
    %7 = tpu.matmul %5, %6, %cst_8 {dimension_numbers = #tpu.dot_dimension_numbers<[1], [0], [0], [1], [0, 0, 1, 1], [], []>} : vector<64x32xbf16>, vector<32x256xbf16>, vector<64x256xf32> -> vector<64x256xf32>
    %8 = arith.addf %4, %7 : vector<64x256xf32>
    %c0_9 = arith.constant 0 : index
    %c0_10 = arith.constant 0 : index
    %9 = vector.load %arg5[%c0_9, %c0_10] : memref<1x256xf32, #tpu.memory_space<vmem>>, vector<1x256xf32>
    %10 = vector.broadcast %9 : vector<1x256xf32> to vector<64x256xf32>
    %11 = arith.addf %8, %10 : vector<64x256xf32>
    %12 = arith.truncf %11 : vector<64x256xf32> to vector<64x256xbf16>
    %13 = vector.extract_strided_slice %12 {offsets = [0, 0], sizes = [64, 128], strides = [1, 1]} : vector<64x256xbf16> to vector<64x128xbf16>
    %c0_11 = arith.constant 0 : index
    %c0_12 = arith.constant 0 : index
    %c0_13 = arith.constant 0 : index
    %14 = vector.load %arg6[%c0_11, %c0_12, %c0_13] : memref<2x64x128xbf16, #tpu.memory_space<vmem>>, vector<1x64x128xbf16>
    %15 = vector.shape_cast %14 : vector<1x64x128xbf16> to vector<64x128xbf16>
    %16 = vector.shape_cast %13 : vector<64x128xbf16> to vector<1x64x128xbf16>
    tpu.vector_store %arg6[%c0_11, %c0_12, %c0_13], %16 {strides = array<i32>} : memref<2x64x128xbf16, #tpu.memory_space<vmem>>, vector<1x64x128xbf16>,
    %17 = vector.extract_strided_slice %12 {offsets = [0, 128], sizes = [64, 128], strides = [1, 1]} : vector<64x256xbf16> to vector<64x128xbf16>
    %c1 = arith.constant 1 : index
    %c0_14 = arith.constant 0 : index
    %c0_15 = arith.constant 0 : index
    %18 = vector.load %arg6[%c1, %c0_14, %c0_15] : memref<2x64x128xbf16, #tpu.memory_space<vmem>>, vector<1x64x128xbf16>
    %19 = vector.shape_cast %18 : vector<1x64x128xbf16> to vector<64x128xbf16>
    %20 = vector.shape_cast %17 : vector<64x128xbf16> to vector<1x64x128xbf16>
    tpu.vector_store %arg6[%c1, %c0_14, %c0_15], %20 {strides = array<i32>} : memref<2x64x128xbf16, #tpu.memory_space<vmem>>, vector<1x64x128xbf16>,
    return
  }
  func.func @transform_0(%arg0: i32) -> (i32, i32) {
    %c0_i32 = arith.constant 0 : i32
    %c0_i32_0 = arith.constant 0 : i32
    return %arg0, %c0_i32 : i32, i32
  }
  func.func @transform_1(%arg0: i32) -> (i32, i32) {
    %c0_i32 = arith.constant 0 : i32
    %c0_i32_0 = arith.constant 0 : i32
    return %arg0, %c0_i32 : i32, i32
  }
  func.func @transform_2(%arg0: i32) -> (i32, i32) {
    %c0_i32 = arith.constant 0 : i32
    %c0_i32_0 = arith.constant 0 : i32
    %c0_i32_1 = arith.constant 0 : i32
    return %c0_i32, %c0_i32_0 : i32, i32
  }
  func.func @transform_3(%arg0: i32) -> (i32, i32) {
    %c0_i32 = arith.constant 0 : i32
    %c0_i32_0 = arith.constant 0 : i32
    %c0_i32_1 = arith.constant 0 : i32
    return %c0_i32, %c0_i32_0 : i32, i32
  }
  func.func @transform_4(%arg0: i32) -> (i32, i32) {
    %c0_i32 = arith.constant 0 : i32
    %c0_i32_0 = arith.constant 0 : i32
    %c0_i32_1 = arith.constant 0 : i32
    return %c0_i32, %c0_i32_0 : i32, i32
  }
  func.func @transform_5(%arg0: i32) -> (i32, i32, i32) {
    %c0_i32 = arith.constant 0 : i32
    %c0_i32_0 = arith.constant 0 : i32
    %c0_i32_1 = arith.constant 0 : i32
    return %c0_i32, %arg0, %c0_i32_0 : i32, i32, i32
  }
}

module attributes {stable_mosaic.version = 11 : i64} {
  func.func @lstm_recurrent_kernel(%arg0: i32, %arg1: i32, %arg2: memref<1x8x8x128xbf16, #tpu.memory_space<vmem>>, %arg3: memref<8x1xi32, #tpu.memory_space<vmem>>, %arg4: memref<1x32x128xbf16, #tpu.memory_space<vmem>>, %arg5: memref<1x8x8x32xbf16, #tpu.memory_space<vmem>>, %arg6: memref<1x8x32xf32, #tpu.memory_space<vmem>>, %arg7: memref<8x32xbf16, #tpu.memory_space<vmem>>, %arg8: memref<8x32xf32, #tpu.memory_space<vmem>>) attributes {dimension_semantics = [#tpu.dimension_semantics<parallel>, #tpu.dimension_semantics<arbitrary>], iteration_bounds = array<i64: 2, 1>, scalar_prefetch = 0 : i64, scratch_operands = 2 : i64, tpu.core_type = #tpu.core_type<tc>, window_params = [{transform_indices = @transform_0, window_bounds = array<i64: 1, 8, 8, 128>}, {pipeline_mode = #tpu.pipeline_mode<synchronous>, transform_indices = @transform_1, window_bounds = array<i64: 8, 1>}, {transform_indices = @transform_2, window_bounds = array<i64: 1, 32, 128>}, {transform_indices = @transform_3, window_bounds = array<i64: 1, 8, 8, 32>}, {transform_indices = @transform_4, window_bounds = array<i64: 1, 8, 32>}]} {
    %c0_i32 = arith.constant 0 : i32
    %0 = arith.cmpi eq, %arg1, %c0_i32 : i32
    %1 = arith.extui %0 : i1 to i32
    %c0_i32_0 = arith.constant 0 : i32
    %2 = arith.cmpi ne, %1, %c0_i32_0 : i32
    scf.if %2 {
      %cst_109 = arith.constant 0.000000e+00 : bf16
      %429 = vector.broadcast %cst_109 : bf16 to vector<8x32xbf16>
      %c0_110 = arith.constant 0 : index
      %c0_111 = arith.constant 0 : index
      %430 = vector.load %arg7[%c0_110, %c0_111] : memref<8x32xbf16, #tpu.memory_space<vmem>>, vector<8x32xbf16>
      tpu.vector_store %arg7[%c0_110, %c0_111], %429 {strides = array<i32>} : memref<8x32xbf16, #tpu.memory_space<vmem>>, vector<8x32xbf16>,
      %cst_112 = arith.constant 0.000000e+00 : f32
      %431 = vector.broadcast %cst_112 : f32 to vector<8x32xf32>
      %c0_113 = arith.constant 0 : index
      %c0_114 = arith.constant 0 : index
      %432 = vector.load %arg8[%c0_113, %c0_114] : memref<8x32xf32, #tpu.memory_space<vmem>>, vector<8x32xf32>
      tpu.vector_store %arg8[%c0_113, %c0_114], %431 {strides = array<i32>} : memref<8x32xf32, #tpu.memory_space<vmem>>, vector<8x32xf32>,
    } else {
    }
    %c0 = arith.constant 0 : index
    %c0_1 = arith.constant 0 : index
    %3 = vector.load %arg3[%c0, %c0_1] : memref<8x1xi32, #tpu.memory_space<vmem>>, vector<8x1xi32>
    %c0_2 = arith.constant 0 : index
    %c0_3 = arith.constant 0 : index
    %c0_4 = arith.constant 0 : index
    %4 = vector.load %arg4[%c0_2, %c0_3, %c0_4] : memref<1x32x128xbf16, #tpu.memory_space<vmem>>, vector<1x32x128xbf16>
    %5 = vector.shape_cast %4 : vector<1x32x128xbf16> to vector<32x128xbf16>
    %c7_i32 = arith.constant 7 : i32
    %6 = arith.muli %arg0, %c7_i32 : i32
    %c2_i32 = arith.constant 2 : i32
    %7 = arith.muli %c2_i32, %arg0 : i32
    %c1_i32 = arith.constant 1 : i32
    %8 = arith.subi %c1_i32, %7 : i32
    %c2_i32_5 = arith.constant 2 : i32
    %9 = arith.muli %c2_i32_5, %arg1 : i32
    %c0_i32_6 = arith.constant 0 : i32
    %10 = arith.subi %c0_i32_6, %9 : i32
    %11 = arith.muli %arg0, %10 : i32
    %12 = arith.addi %arg1, %11 : i32
    %c8_i32 = arith.constant 8 : i32
    %13 = arith.muli %12, %c8_i32 : i32
    %c0_7 = arith.constant 0 : index
    %c0_8 = arith.constant 0 : index
    %14 = vector.load %arg7[%c0_7, %c0_8] : memref<8x32xbf16, #tpu.memory_space<vmem>>, vector<8x32xbf16>
    %c0_9 = arith.constant 0 : index
    %c0_10 = arith.constant 0 : index
    %15 = vector.load %arg8[%c0_9, %c0_10] : memref<8x32xf32, #tpu.memory_space<vmem>>, vector<8x32xf32>
    %c0_i32_11 = arith.constant 0 : i32
    %16 = arith.muli %8, %c0_i32_11 : i32
    %17 = arith.addi %6, %16 : i32
    %18 = arith.addi %13, %17 : i32
    %c0_12 = arith.constant 0 : index
    %19 = arith.index_cast %17 : i32 to index
    %c0_13 = arith.constant 0 : index
    %c0_14 = arith.constant 0 : index
    %20 = vector.load %arg2[%c0_12, %19, %c0_13, %c0_14] : memref<1x8x8x128xbf16, #tpu.memory_space<vmem>>, vector<1x1x8x128xbf16>
    %21 = vector.shape_cast %20 : vector<1x1x8x128xbf16> to vector<8x128xbf16>
    %22 = arith.extf %21 : vector<8x128xbf16> to vector<8x128xf32>
    %cst = arith.constant dense<0.000000e+00> : vector<8x128xf32>
    %23 = tpu.matmul %14, %5, %cst {dimension_numbers = #tpu.dot_dimension_numbers<[1], [0], [0], [1], [0, 0, 1, 1], [], []>} : vector<8x32xbf16>, vector<32x128xbf16>, vector<8x128xf32> -> vector<8x128xf32>
    %24 = arith.addf %22, %23 : vector<8x128xf32>
    %25 = vector.extract_strided_slice %24 {offsets = [0, 0], sizes = [8, 32], strides = [1, 1]} : vector<8x128xf32> to vector<8x32xf32>
    %26 = arith.negf %25 : vector<8x32xf32>
    %27 = math.exp %26 : vector<8x32xf32>
    %cst_15 = arith.constant 1.000000e+00 : f32
    %28 = vector.broadcast %cst_15 : f32 to vector<8x32xf32>
    %29 = arith.addf %28, %27 : vector<8x32xf32>
    %30 = arith.divf %28, %29 : vector<8x32xf32>
    %31 = vector.extract_strided_slice %24 {offsets = [0, 32], sizes = [8, 32], strides = [1, 1]} : vector<8x128xf32> to vector<8x32xf32>
    %32 = arith.negf %31 : vector<8x32xf32>
    %33 = math.exp %32 : vector<8x32xf32>
    %cst_16 = arith.constant 1.000000e+00 : f32
    %34 = vector.broadcast %cst_16 : f32 to vector<8x32xf32>
    %35 = arith.addf %34, %33 : vector<8x32xf32>
    %36 = arith.divf %34, %35 : vector<8x32xf32>
    %37 = vector.extract_strided_slice %24 {offsets = [0, 64], sizes = [8, 32], strides = [1, 1]} : vector<8x128xf32> to vector<8x32xf32>
    %38 = math.tanh %37 : vector<8x32xf32>
    %39 = vector.extract_strided_slice %24 {offsets = [0, 96], sizes = [8, 32], strides = [1, 1]} : vector<8x128xf32> to vector<8x32xf32>
    %40 = arith.negf %39 : vector<8x32xf32>
    %41 = math.exp %40 : vector<8x32xf32>
    %cst_17 = arith.constant 1.000000e+00 : f32
    %42 = vector.broadcast %cst_17 : f32 to vector<8x32xf32>
    %43 = arith.addf %42, %41 : vector<8x32xf32>
    %44 = arith.divf %42, %43 : vector<8x32xf32>
    %45 = arith.mulf %36, %15 : vector<8x32xf32>
    %46 = arith.mulf %30, %38 : vector<8x32xf32>
    %47 = arith.addf %45, %46 : vector<8x32xf32>
    %48 = math.tanh %47 : vector<8x32xf32>
    %49 = arith.mulf %44, %48 : vector<8x32xf32>
    %50 = arith.truncf %49 : vector<8x32xf32> to vector<8x32xbf16>
    %51 = vector.broadcast %18 : i32 to vector<8x1xi32>
    %52 = arith.cmpi slt, %51, %3 : vector<8x1xi32>
    %cst_18 = arith.constant 0.000000e+00 : bf16
    %53 = vector.broadcast %cst_18 : bf16 to vector<8x32xbf16>
    %54 = vector.shape_cast %52 : vector<8x1xi1> to vector<8x1xi1>
    %55 = vector.broadcast %54 : vector<8x1xi1> to vector<8x32xi1>
    %56 = arith.select %55, %50, %53 : vector<8x32xi1>, vector<8x32xbf16>
    %c0_19 = arith.constant 0 : index
    %57 = arith.index_cast %17 : i32 to index
    %c0_20 = arith.constant 0 : index
    %c0_21 = arith.constant 0 : index
    %58 = vector.load %arg5[%c0_19, %57, %c0_20, %c0_21] : memref<1x8x8x32xbf16, #tpu.memory_space<vmem>>, vector<1x1x8x32xbf16>
    %59 = vector.shape_cast %58 : vector<1x1x8x32xbf16> to vector<8x32xbf16>
    %60 = vector.shape_cast %56 : vector<8x32xbf16> to vector<1x1x8x32xbf16>
    tpu.vector_store %arg5[%c0_19, %57, %c0_20, %c0_21], %60 {strides = array<i32>} : memref<1x8x8x32xbf16, #tpu.memory_space<vmem>>, vector<1x1x8x32xbf16>,
    %61 = vector.shape_cast %52 : vector<8x1xi1> to vector<8x1xi1>
    %62 = vector.broadcast %61 : vector<8x1xi1> to vector<8x32xi1>
    %63 = arith.select %62, %50, %14 : vector<8x32xi1>, vector<8x32xbf16>
    %64 = vector.shape_cast %52 : vector<8x1xi1> to vector<8x1xi1>
    %65 = vector.broadcast %64 : vector<8x1xi1> to vector<8x32xi1>
    %66 = arith.select %65, %47, %15 : vector<8x32xi1>, vector<8x32xf32>
    %c1_i32_22 = arith.constant 1 : i32
    %67 = arith.muli %8, %c1_i32_22 : i32
    %68 = arith.addi %6, %67 : i32
    %69 = arith.addi %13, %68 : i32
    %c0_23 = arith.constant 0 : index
    %70 = arith.index_cast %68 : i32 to index
    %c0_24 = arith.constant 0 : index
    %c0_25 = arith.constant 0 : index
    %71 = vector.load %arg2[%c0_23, %70, %c0_24, %c0_25] : memref<1x8x8x128xbf16, #tpu.memory_space<vmem>>, vector<1x1x8x128xbf16>
    %72 = vector.shape_cast %71 : vector<1x1x8x128xbf16> to vector<8x128xbf16>
    %73 = arith.extf %72 : vector<8x128xbf16> to vector<8x128xf32>
    %cst_26 = arith.constant dense<0.000000e+00> : vector<8x128xf32>
    %74 = tpu.matmul %63, %5, %cst_26 {dimension_numbers = #tpu.dot_dimension_numbers<[1], [0], [0], [1], [0, 0, 1, 1], [], []>} : vector<8x32xbf16>, vector<32x128xbf16>, vector<8x128xf32> -> vector<8x128xf32>
    %75 = arith.addf %73, %74 : vector<8x128xf32>
    %76 = vector.extract_strided_slice %75 {offsets = [0, 0], sizes = [8, 32], strides = [1, 1]} : vector<8x128xf32> to vector<8x32xf32>
    %77 = arith.negf %76 : vector<8x32xf32>
    %78 = math.exp %77 : vector<8x32xf32>
    %cst_27 = arith.constant 1.000000e+00 : f32
    %79 = vector.broadcast %cst_27 : f32 to vector<8x32xf32>
    %80 = arith.addf %79, %78 : vector<8x32xf32>
    %81 = arith.divf %79, %80 : vector<8x32xf32>
    %82 = vector.extract_strided_slice %75 {offsets = [0, 32], sizes = [8, 32], strides = [1, 1]} : vector<8x128xf32> to vector<8x32xf32>
    %83 = arith.negf %82 : vector<8x32xf32>
    %84 = math.exp %83 : vector<8x32xf32>
    %cst_28 = arith.constant 1.000000e+00 : f32
    %85 = vector.broadcast %cst_28 : f32 to vector<8x32xf32>
    %86 = arith.addf %85, %84 : vector<8x32xf32>
    %87 = arith.divf %85, %86 : vector<8x32xf32>
    %88 = vector.extract_strided_slice %75 {offsets = [0, 64], sizes = [8, 32], strides = [1, 1]} : vector<8x128xf32> to vector<8x32xf32>
    %89 = math.tanh %88 : vector<8x32xf32>
    %90 = vector.extract_strided_slice %75 {offsets = [0, 96], sizes = [8, 32], strides = [1, 1]} : vector<8x128xf32> to vector<8x32xf32>
    %91 = arith.negf %90 : vector<8x32xf32>
    %92 = math.exp %91 : vector<8x32xf32>
    %cst_29 = arith.constant 1.000000e+00 : f32
    %93 = vector.broadcast %cst_29 : f32 to vector<8x32xf32>
    %94 = arith.addf %93, %92 : vector<8x32xf32>
    %95 = arith.divf %93, %94 : vector<8x32xf32>
    %96 = arith.mulf %87, %66 : vector<8x32xf32>
    %97 = arith.mulf %81, %89 : vector<8x32xf32>
    %98 = arith.addf %96, %97 : vector<8x32xf32>
    %99 = math.tanh %98 : vector<8x32xf32>
    %100 = arith.mulf %95, %99 : vector<8x32xf32>
    %101 = arith.truncf %100 : vector<8x32xf32> to vector<8x32xbf16>
    %102 = vector.broadcast %69 : i32 to vector<8x1xi32>
    %103 = arith.cmpi slt, %102, %3 : vector<8x1xi32>
    %cst_30 = arith.constant 0.000000e+00 : bf16
    %104 = vector.broadcast %cst_30 : bf16 to vector<8x32xbf16>
    %105 = vector.shape_cast %103 : vector<8x1xi1> to vector<8x1xi1>
    %106 = vector.broadcast %105 : vector<8x1xi1> to vector<8x32xi1>
    %107 = arith.select %106, %101, %104 : vector<8x32xi1>, vector<8x32xbf16>
    %c0_31 = arith.constant 0 : index
    %108 = arith.index_cast %68 : i32 to index
    %c0_32 = arith.constant 0 : index
    %c0_33 = arith.constant 0 : index
    %109 = vector.load %arg5[%c0_31, %108, %c0_32, %c0_33] : memref<1x8x8x32xbf16, #tpu.memory_space<vmem>>, vector<1x1x8x32xbf16>
    %110 = vector.shape_cast %109 : vector<1x1x8x32xbf16> to vector<8x32xbf16>
    %111 = vector.shape_cast %107 : vector<8x32xbf16> to vector<1x1x8x32xbf16>
    tpu.vector_store %arg5[%c0_31, %108, %c0_32, %c0_33], %111 {strides = array<i32>} : memref<1x8x8x32xbf16, #tpu.memory_space<vmem>>, vector<1x1x8x32xbf16>,
    %112 = vector.shape_cast %103 : vector<8x1xi1> to vector<8x1xi1>
    %113 = vector.broadcast %112 : vector<8x1xi1> to vector<8x32xi1>
    %114 = arith.select %113, %101, %63 : vector<8x32xi1>, vector<8x32xbf16>
    %115 = vector.shape_cast %103 : vector<8x1xi1> to vector<8x1xi1>
    %116 = vector.broadcast %115 : vector<8x1xi1> to vector<8x32xi1>
    %117 = arith.select %116, %98, %66 : vector<8x32xi1>, vector<8x32xf32>
    %c2_i32_34 = arith.constant 2 : i32
    %118 = arith.muli %8, %c2_i32_34 : i32
    %119 = arith.addi %6, %118 : i32
    %120 = arith.addi %13, %119 : i32
    %c0_35 = arith.constant 0 : index
    %121 = arith.index_cast %119 : i32 to index
    %c0_36 = arith.constant 0 : index
    %c0_37 = arith.constant 0 : index
    %122 = vector.load %arg2[%c0_35, %121, %c0_36, %c0_37] : memref<1x8x8x128xbf16, #tpu.memory_space<vmem>>, vector<1x1x8x128xbf16>
    %123 = vector.shape_cast %122 : vector<1x1x8x128xbf16> to vector<8x128xbf16>
    %124 = arith.extf %123 : vector<8x128xbf16> to vector<8x128xf32>
    %cst_38 = arith.constant dense<0.000000e+00> : vector<8x128xf32>
    %125 = tpu.matmul %114, %5, %cst_38 {dimension_numbers = #tpu.dot_dimension_numbers<[1], [0], [0], [1], [0, 0, 1, 1], [], []>} : vector<8x32xbf16>, vector<32x128xbf16>, vector<8x128xf32> -> vector<8x128xf32>
    %126 = arith.addf %124, %125 : vector<8x128xf32>
    %127 = vector.extract_strided_slice %126 {offsets = [0, 0], sizes = [8, 32], strides = [1, 1]} : vector<8x128xf32> to vector<8x32xf32>
    %128 = arith.negf %127 : vector<8x32xf32>
    %129 = math.exp %128 : vector<8x32xf32>
    %cst_39 = arith.constant 1.000000e+00 : f32
    %130 = vector.broadcast %cst_39 : f32 to vector<8x32xf32>
    %131 = arith.addf %130, %129 : vector<8x32xf32>
    %132 = arith.divf %130, %131 : vector<8x32xf32>
    %133 = vector.extract_strided_slice %126 {offsets = [0, 32], sizes = [8, 32], strides = [1, 1]} : vector<8x128xf32> to vector<8x32xf32>
    %134 = arith.negf %133 : vector<8x32xf32>
    %135 = math.exp %134 : vector<8x32xf32>
    %cst_40 = arith.constant 1.000000e+00 : f32
    %136 = vector.broadcast %cst_40 : f32 to vector<8x32xf32>
    %137 = arith.addf %136, %135 : vector<8x32xf32>
    %138 = arith.divf %136, %137 : vector<8x32xf32>
    %139 = vector.extract_strided_slice %126 {offsets = [0, 64], sizes = [8, 32], strides = [1, 1]} : vector<8x128xf32> to vector<8x32xf32>
    %140 = math.tanh %139 : vector<8x32xf32>
    %141 = vector.extract_strided_slice %126 {offsets = [0, 96], sizes = [8, 32], strides = [1, 1]} : vector<8x128xf32> to vector<8x32xf32>
    %142 = arith.negf %141 : vector<8x32xf32>
    %143 = math.exp %142 : vector<8x32xf32>
    %cst_41 = arith.constant 1.000000e+00 : f32
    %144 = vector.broadcast %cst_41 : f32 to vector<8x32xf32>
    %145 = arith.addf %144, %143 : vector<8x32xf32>
    %146 = arith.divf %144, %145 : vector<8x32xf32>
    %147 = arith.mulf %138, %117 : vector<8x32xf32>
    %148 = arith.mulf %132, %140 : vector<8x32xf32>
    %149 = arith.addf %147, %148 : vector<8x32xf32>
    %150 = math.tanh %149 : vector<8x32xf32>
    %151 = arith.mulf %146, %150 : vector<8x32xf32>
    %152 = arith.truncf %151 : vector<8x32xf32> to vector<8x32xbf16>
    %153 = vector.broadcast %120 : i32 to vector<8x1xi32>
    %154 = arith.cmpi slt, %153, %3 : vector<8x1xi32>
    %cst_42 = arith.constant 0.000000e+00 : bf16
    %155 = vector.broadcast %cst_42 : bf16 to vector<8x32xbf16>
    %156 = vector.shape_cast %154 : vector<8x1xi1> to vector<8x1xi1>
    %157 = vector.broadcast %156 : vector<8x1xi1> to vector<8x32xi1>
    %158 = arith.select %157, %152, %155 : vector<8x32xi1>, vector<8x32xbf16>
    %c0_43 = arith.constant 0 : index
    %159 = arith.index_cast %119 : i32 to index
    %c0_44 = arith.constant 0 : index
    %c0_45 = arith.constant 0 : index
    %160 = vector.load %arg5[%c0_43, %159, %c0_44, %c0_45] : memref<1x8x8x32xbf16, #tpu.memory_space<vmem>>, vector<1x1x8x32xbf16>
    %161 = vector.shape_cast %160 : vector<1x1x8x32xbf16> to vector<8x32xbf16>
    %162 = vector.shape_cast %158 : vector<8x32xbf16> to vector<1x1x8x32xbf16>
    tpu.vector_store %arg5[%c0_43, %159, %c0_44, %c0_45], %162 {strides = array<i32>} : memref<1x8x8x32xbf16, #tpu.memory_space<vmem>>, vector<1x1x8x32xbf16>,
    %163 = vector.shape_cast %154 : vector<8x1xi1> to vector<8x1xi1>
    %164 = vector.broadcast %163 : vector<8x1xi1> to vector<8x32xi1>
    %165 = arith.select %164, %152, %114 : vector<8x32xi1>, vector<8x32xbf16>
    %166 = vector.shape_cast %154 : vector<8x1xi1> to vector<8x1xi1>
    %167 = vector.broadcast %166 : vector<8x1xi1> to vector<8x32xi1>
    %168 = arith.select %167, %149, %117 : vector<8x32xi1>, vector<8x32xf32>
    %c3_i32 = arith.constant 3 : i32
    %169 = arith.muli %8, %c3_i32 : i32
    %170 = arith.addi %6, %169 : i32
    %171 = arith.addi %13, %170 : i32
    %c0_46 = arith.constant 0 : index
    %172 = arith.index_cast %170 : i32 to index
    %c0_47 = arith.constant 0 : index
    %c0_48 = arith.constant 0 : index
    %173 = vector.load %arg2[%c0_46, %172, %c0_47, %c0_48] : memref<1x8x8x128xbf16, #tpu.memory_space<vmem>>, vector<1x1x8x128xbf16>
    %174 = vector.shape_cast %173 : vector<1x1x8x128xbf16> to vector<8x128xbf16>
    %175 = arith.extf %174 : vector<8x128xbf16> to vector<8x128xf32>
    %cst_49 = arith.constant dense<0.000000e+00> : vector<8x128xf32>
    %176 = tpu.matmul %165, %5, %cst_49 {dimension_numbers = #tpu.dot_dimension_numbers<[1], [0], [0], [1], [0, 0, 1, 1], [], []>} : vector<8x32xbf16>, vector<32x128xbf16>, vector<8x128xf32> -> vector<8x128xf32>
    %177 = arith.addf %175, %176 : vector<8x128xf32>
    %178 = vector.extract_strided_slice %177 {offsets = [0, 0], sizes = [8, 32], strides = [1, 1]} : vector<8x128xf32> to vector<8x32xf32>
    %179 = arith.negf %178 : vector<8x32xf32>
    %180 = math.exp %179 : vector<8x32xf32>
    %cst_50 = arith.constant 1.000000e+00 : f32
    %181 = vector.broadcast %cst_50 : f32 to vector<8x32xf32>
    %182 = arith.addf %181, %180 : vector<8x32xf32>
    %183 = arith.divf %181, %182 : vector<8x32xf32>
    %184 = vector.extract_strided_slice %177 {offsets = [0, 32], sizes = [8, 32], strides = [1, 1]} : vector<8x128xf32> to vector<8x32xf32>
    %185 = arith.negf %184 : vector<8x32xf32>
    %186 = math.exp %185 : vector<8x32xf32>
    %cst_51 = arith.constant 1.000000e+00 : f32
    %187 = vector.broadcast %cst_51 : f32 to vector<8x32xf32>
    %188 = arith.addf %187, %186 : vector<8x32xf32>
    %189 = arith.divf %187, %188 : vector<8x32xf32>
    %190 = vector.extract_strided_slice %177 {offsets = [0, 64], sizes = [8, 32], strides = [1, 1]} : vector<8x128xf32> to vector<8x32xf32>
    %191 = math.tanh %190 : vector<8x32xf32>
    %192 = vector.extract_strided_slice %177 {offsets = [0, 96], sizes = [8, 32], strides = [1, 1]} : vector<8x128xf32> to vector<8x32xf32>
    %193 = arith.negf %192 : vector<8x32xf32>
    %194 = math.exp %193 : vector<8x32xf32>
    %cst_52 = arith.constant 1.000000e+00 : f32
    %195 = vector.broadcast %cst_52 : f32 to vector<8x32xf32>
    %196 = arith.addf %195, %194 : vector<8x32xf32>
    %197 = arith.divf %195, %196 : vector<8x32xf32>
    %198 = arith.mulf %189, %168 : vector<8x32xf32>
    %199 = arith.mulf %183, %191 : vector<8x32xf32>
    %200 = arith.addf %198, %199 : vector<8x32xf32>
    %201 = math.tanh %200 : vector<8x32xf32>
    %202 = arith.mulf %197, %201 : vector<8x32xf32>
    %203 = arith.truncf %202 : vector<8x32xf32> to vector<8x32xbf16>
    %204 = vector.broadcast %171 : i32 to vector<8x1xi32>
    %205 = arith.cmpi slt, %204, %3 : vector<8x1xi32>
    %cst_53 = arith.constant 0.000000e+00 : bf16
    %206 = vector.broadcast %cst_53 : bf16 to vector<8x32xbf16>
    %207 = vector.shape_cast %205 : vector<8x1xi1> to vector<8x1xi1>
    %208 = vector.broadcast %207 : vector<8x1xi1> to vector<8x32xi1>
    %209 = arith.select %208, %203, %206 : vector<8x32xi1>, vector<8x32xbf16>
    %c0_54 = arith.constant 0 : index
    %210 = arith.index_cast %170 : i32 to index
    %c0_55 = arith.constant 0 : index
    %c0_56 = arith.constant 0 : index
    %211 = vector.load %arg5[%c0_54, %210, %c0_55, %c0_56] : memref<1x8x8x32xbf16, #tpu.memory_space<vmem>>, vector<1x1x8x32xbf16>
    %212 = vector.shape_cast %211 : vector<1x1x8x32xbf16> to vector<8x32xbf16>
    %213 = vector.shape_cast %209 : vector<8x32xbf16> to vector<1x1x8x32xbf16>
    tpu.vector_store %arg5[%c0_54, %210, %c0_55, %c0_56], %213 {strides = array<i32>} : memref<1x8x8x32xbf16, #tpu.memory_space<vmem>>, vector<1x1x8x32xbf16>,
    %214 = vector.shape_cast %205 : vector<8x1xi1> to vector<8x1xi1>
    %215 = vector.broadcast %214 : vector<8x1xi1> to vector<8x32xi1>
    %216 = arith.select %215, %203, %165 : vector<8x32xi1>, vector<8x32xbf16>
    %217 = vector.shape_cast %205 : vector<8x1xi1> to vector<8x1xi1>
    %218 = vector.broadcast %217 : vector<8x1xi1> to vector<8x32xi1>
    %219 = arith.select %218, %200, %168 : vector<8x32xi1>, vector<8x32xf32>
    %c4_i32 = arith.constant 4 : i32
    %220 = arith.muli %8, %c4_i32 : i32
    %221 = arith.addi %6, %220 : i32
    %222 = arith.addi %13, %221 : i32
    %c0_57 = arith.constant 0 : index
    %223 = arith.index_cast %221 : i32 to index
    %c0_58 = arith.constant 0 : index
    %c0_59 = arith.constant 0 : index
    %224 = vector.load %arg2[%c0_57, %223, %c0_58, %c0_59] : memref<1x8x8x128xbf16, #tpu.memory_space<vmem>>, vector<1x1x8x128xbf16>
    %225 = vector.shape_cast %224 : vector<1x1x8x128xbf16> to vector<8x128xbf16>
    %226 = arith.extf %225 : vector<8x128xbf16> to vector<8x128xf32>
    %cst_60 = arith.constant dense<0.000000e+00> : vector<8x128xf32>
    %227 = tpu.matmul %216, %5, %cst_60 {dimension_numbers = #tpu.dot_dimension_numbers<[1], [0], [0], [1], [0, 0, 1, 1], [], []>} : vector<8x32xbf16>, vector<32x128xbf16>, vector<8x128xf32> -> vector<8x128xf32>
    %228 = arith.addf %226, %227 : vector<8x128xf32>
    %229 = vector.extract_strided_slice %228 {offsets = [0, 0], sizes = [8, 32], strides = [1, 1]} : vector<8x128xf32> to vector<8x32xf32>
    %230 = arith.negf %229 : vector<8x32xf32>
    %231 = math.exp %230 : vector<8x32xf32>
    %cst_61 = arith.constant 1.000000e+00 : f32
    %232 = vector.broadcast %cst_61 : f32 to vector<8x32xf32>
    %233 = arith.addf %232, %231 : vector<8x32xf32>
    %234 = arith.divf %232, %233 : vector<8x32xf32>
    %235 = vector.extract_strided_slice %228 {offsets = [0, 32], sizes = [8, 32], strides = [1, 1]} : vector<8x128xf32> to vector<8x32xf32>
    %236 = arith.negf %235 : vector<8x32xf32>
    %237 = math.exp %236 : vector<8x32xf32>
    %cst_62 = arith.constant 1.000000e+00 : f32
    %238 = vector.broadcast %cst_62 : f32 to vector<8x32xf32>
    %239 = arith.addf %238, %237 : vector<8x32xf32>
    %240 = arith.divf %238, %239 : vector<8x32xf32>
    %241 = vector.extract_strided_slice %228 {offsets = [0, 64], sizes = [8, 32], strides = [1, 1]} : vector<8x128xf32> to vector<8x32xf32>
    %242 = math.tanh %241 : vector<8x32xf32>
    %243 = vector.extract_strided_slice %228 {offsets = [0, 96], sizes = [8, 32], strides = [1, 1]} : vector<8x128xf32> to vector<8x32xf32>
    %244 = arith.negf %243 : vector<8x32xf32>
    %245 = math.exp %244 : vector<8x32xf32>
    %cst_63 = arith.constant 1.000000e+00 : f32
    %246 = vector.broadcast %cst_63 : f32 to vector<8x32xf32>
    %247 = arith.addf %246, %245 : vector<8x32xf32>
    %248 = arith.divf %246, %247 : vector<8x32xf32>
    %249 = arith.mulf %240, %219 : vector<8x32xf32>
    %250 = arith.mulf %234, %242 : vector<8x32xf32>
    %251 = arith.addf %249, %250 : vector<8x32xf32>
    %252 = math.tanh %251 : vector<8x32xf32>
    %253 = arith.mulf %248, %252 : vector<8x32xf32>
    %254 = arith.truncf %253 : vector<8x32xf32> to vector<8x32xbf16>
    %255 = vector.broadcast %222 : i32 to vector<8x1xi32>
    %256 = arith.cmpi slt, %255, %3 : vector<8x1xi32>
    %cst_64 = arith.constant 0.000000e+00 : bf16
    %257 = vector.broadcast %cst_64 : bf16 to vector<8x32xbf16>
    %258 = vector.shape_cast %256 : vector<8x1xi1> to vector<8x1xi1>
    %259 = vector.broadcast %258 : vector<8x1xi1> to vector<8x32xi1>
    %260 = arith.select %259, %254, %257 : vector<8x32xi1>, vector<8x32xbf16>
    %c0_65 = arith.constant 0 : index
    %261 = arith.index_cast %221 : i32 to index
    %c0_66 = arith.constant 0 : index
    %c0_67 = arith.constant 0 : index
    %262 = vector.load %arg5[%c0_65, %261, %c0_66, %c0_67] : memref<1x8x8x32xbf16, #tpu.memory_space<vmem>>, vector<1x1x8x32xbf16>
    %263 = vector.shape_cast %262 : vector<1x1x8x32xbf16> to vector<8x32xbf16>
    %264 = vector.shape_cast %260 : vector<8x32xbf16> to vector<1x1x8x32xbf16>
    tpu.vector_store %arg5[%c0_65, %261, %c0_66, %c0_67], %264 {strides = array<i32>} : memref<1x8x8x32xbf16, #tpu.memory_space<vmem>>, vector<1x1x8x32xbf16>,
    %265 = vector.shape_cast %256 : vector<8x1xi1> to vector<8x1xi1>
    %266 = vector.broadcast %265 : vector<8x1xi1> to vector<8x32xi1>
    %267 = arith.select %266, %254, %216 : vector<8x32xi1>, vector<8x32xbf16>
    %268 = vector.shape_cast %256 : vector<8x1xi1> to vector<8x1xi1>
    %269 = vector.broadcast %268 : vector<8x1xi1> to vector<8x32xi1>
    %270 = arith.select %269, %251, %219 : vector<8x32xi1>, vector<8x32xf32>
    %c5_i32 = arith.constant 5 : i32
    %271 = arith.muli %8, %c5_i32 : i32
    %272 = arith.addi %6, %271 : i32
    %273 = arith.addi %13, %272 : i32
    %c0_68 = arith.constant 0 : index
    %274 = arith.index_cast %272 : i32 to index
    %c0_69 = arith.constant 0 : index
    %c0_70 = arith.constant 0 : index
    %275 = vector.load %arg2[%c0_68, %274, %c0_69, %c0_70] : memref<1x8x8x128xbf16, #tpu.memory_space<vmem>>, vector<1x1x8x128xbf16>
    %276 = vector.shape_cast %275 : vector<1x1x8x128xbf16> to vector<8x128xbf16>
    %277 = arith.extf %276 : vector<8x128xbf16> to vector<8x128xf32>
    %cst_71 = arith.constant dense<0.000000e+00> : vector<8x128xf32>
    %278 = tpu.matmul %267, %5, %cst_71 {dimension_numbers = #tpu.dot_dimension_numbers<[1], [0], [0], [1], [0, 0, 1, 1], [], []>} : vector<8x32xbf16>, vector<32x128xbf16>, vector<8x128xf32> -> vector<8x128xf32>
    %279 = arith.addf %277, %278 : vector<8x128xf32>
    %280 = vector.extract_strided_slice %279 {offsets = [0, 0], sizes = [8, 32], strides = [1, 1]} : vector<8x128xf32> to vector<8x32xf32>
    %281 = arith.negf %280 : vector<8x32xf32>
    %282 = math.exp %281 : vector<8x32xf32>
    %cst_72 = arith.constant 1.000000e+00 : f32
    %283 = vector.broadcast %cst_72 : f32 to vector<8x32xf32>
    %284 = arith.addf %283, %282 : vector<8x32xf32>
    %285 = arith.divf %283, %284 : vector<8x32xf32>
    %286 = vector.extract_strided_slice %279 {offsets = [0, 32], sizes = [8, 32], strides = [1, 1]} : vector<8x128xf32> to vector<8x32xf32>
    %287 = arith.negf %286 : vector<8x32xf32>
    %288 = math.exp %287 : vector<8x32xf32>
    %cst_73 = arith.constant 1.000000e+00 : f32
    %289 = vector.broadcast %cst_73 : f32 to vector<8x32xf32>
    %290 = arith.addf %289, %288 : vector<8x32xf32>
    %291 = arith.divf %289, %290 : vector<8x32xf32>
    %292 = vector.extract_strided_slice %279 {offsets = [0, 64], sizes = [8, 32], strides = [1, 1]} : vector<8x128xf32> to vector<8x32xf32>
    %293 = math.tanh %292 : vector<8x32xf32>
    %294 = vector.extract_strided_slice %279 {offsets = [0, 96], sizes = [8, 32], strides = [1, 1]} : vector<8x128xf32> to vector<8x32xf32>
    %295 = arith.negf %294 : vector<8x32xf32>
    %296 = math.exp %295 : vector<8x32xf32>
    %cst_74 = arith.constant 1.000000e+00 : f32
    %297 = vector.broadcast %cst_74 : f32 to vector<8x32xf32>
    %298 = arith.addf %297, %296 : vector<8x32xf32>
    %299 = arith.divf %297, %298 : vector<8x32xf32>
    %300 = arith.mulf %291, %270 : vector<8x32xf32>
    %301 = arith.mulf %285, %293 : vector<8x32xf32>
    %302 = arith.addf %300, %301 : vector<8x32xf32>
    %303 = math.tanh %302 : vector<8x32xf32>
    %304 = arith.mulf %299, %303 : vector<8x32xf32>
    %305 = arith.truncf %304 : vector<8x32xf32> to vector<8x32xbf16>
    %306 = vector.broadcast %273 : i32 to vector<8x1xi32>
    %307 = arith.cmpi slt, %306, %3 : vector<8x1xi32>
    %cst_75 = arith.constant 0.000000e+00 : bf16
    %308 = vector.broadcast %cst_75 : bf16 to vector<8x32xbf16>
    %309 = vector.shape_cast %307 : vector<8x1xi1> to vector<8x1xi1>
    %310 = vector.broadcast %309 : vector<8x1xi1> to vector<8x32xi1>
    %311 = arith.select %310, %305, %308 : vector<8x32xi1>, vector<8x32xbf16>
    %c0_76 = arith.constant 0 : index
    %312 = arith.index_cast %272 : i32 to index
    %c0_77 = arith.constant 0 : index
    %c0_78 = arith.constant 0 : index
    %313 = vector.load %arg5[%c0_76, %312, %c0_77, %c0_78] : memref<1x8x8x32xbf16, #tpu.memory_space<vmem>>, vector<1x1x8x32xbf16>
    %314 = vector.shape_cast %313 : vector<1x1x8x32xbf16> to vector<8x32xbf16>
    %315 = vector.shape_cast %311 : vector<8x32xbf16> to vector<1x1x8x32xbf16>
    tpu.vector_store %arg5[%c0_76, %312, %c0_77, %c0_78], %315 {strides = array<i32>} : memref<1x8x8x32xbf16, #tpu.memory_space<vmem>>, vector<1x1x8x32xbf16>,
    %316 = vector.shape_cast %307 : vector<8x1xi1> to vector<8x1xi1>
    %317 = vector.broadcast %316 : vector<8x1xi1> to vector<8x32xi1>
    %318 = arith.select %317, %305, %267 : vector<8x32xi1>, vector<8x32xbf16>
    %319 = vector.shape_cast %307 : vector<8x1xi1> to vector<8x1xi1>
    %320 = vector.broadcast %319 : vector<8x1xi1> to vector<8x32xi1>
    %321 = arith.select %320, %302, %270 : vector<8x32xi1>, vector<8x32xf32>
    %c6_i32 = arith.constant 6 : i32
    %322 = arith.muli %8, %c6_i32 : i32
    %323 = arith.addi %6, %322 : i32
    %324 = arith.addi %13, %323 : i32
    %c0_79 = arith.constant 0 : index
    %325 = arith.index_cast %323 : i32 to index
    %c0_80 = arith.constant 0 : index
    %c0_81 = arith.constant 0 : index
    %326 = vector.load %arg2[%c0_79, %325, %c0_80, %c0_81] : memref<1x8x8x128xbf16, #tpu.memory_space<vmem>>, vector<1x1x8x128xbf16>
    %327 = vector.shape_cast %326 : vector<1x1x8x128xbf16> to vector<8x128xbf16>
    %328 = arith.extf %327 : vector<8x128xbf16> to vector<8x128xf32>
    %cst_82 = arith.constant dense<0.000000e+00> : vector<8x128xf32>
    %329 = tpu.matmul %318, %5, %cst_82 {dimension_numbers = #tpu.dot_dimension_numbers<[1], [0], [0], [1], [0, 0, 1, 1], [], []>} : vector<8x32xbf16>, vector<32x128xbf16>, vector<8x128xf32> -> vector<8x128xf32>
    %330 = arith.addf %328, %329 : vector<8x128xf32>
    %331 = vector.extract_strided_slice %330 {offsets = [0, 0], sizes = [8, 32], strides = [1, 1]} : vector<8x128xf32> to vector<8x32xf32>
    %332 = arith.negf %331 : vector<8x32xf32>
    %333 = math.exp %332 : vector<8x32xf32>
    %cst_83 = arith.constant 1.000000e+00 : f32
    %334 = vector.broadcast %cst_83 : f32 to vector<8x32xf32>
    %335 = arith.addf %334, %333 : vector<8x32xf32>
    %336 = arith.divf %334, %335 : vector<8x32xf32>
    %337 = vector.extract_strided_slice %330 {offsets = [0, 32], sizes = [8, 32], strides = [1, 1]} : vector<8x128xf32> to vector<8x32xf32>
    %338 = arith.negf %337 : vector<8x32xf32>
    %339 = math.exp %338 : vector<8x32xf32>
    %cst_84 = arith.constant 1.000000e+00 : f32
    %340 = vector.broadcast %cst_84 : f32 to vector<8x32xf32>
    %341 = arith.addf %340, %339 : vector<8x32xf32>
    %342 = arith.divf %340, %341 : vector<8x32xf32>
    %343 = vector.extract_strided_slice %330 {offsets = [0, 64], sizes = [8, 32], strides = [1, 1]} : vector<8x128xf32> to vector<8x32xf32>
    %344 = math.tanh %343 : vector<8x32xf32>
    %345 = vector.extract_strided_slice %330 {offsets = [0, 96], sizes = [8, 32], strides = [1, 1]} : vector<8x128xf32> to vector<8x32xf32>
    %346 = arith.negf %345 : vector<8x32xf32>
    %347 = math.exp %346 : vector<8x32xf32>
    %cst_85 = arith.constant 1.000000e+00 : f32
    %348 = vector.broadcast %cst_85 : f32 to vector<8x32xf32>
    %349 = arith.addf %348, %347 : vector<8x32xf32>
    %350 = arith.divf %348, %349 : vector<8x32xf32>
    %351 = arith.mulf %342, %321 : vector<8x32xf32>
    %352 = arith.mulf %336, %344 : vector<8x32xf32>
    %353 = arith.addf %351, %352 : vector<8x32xf32>
    %354 = math.tanh %353 : vector<8x32xf32>
    %355 = arith.mulf %350, %354 : vector<8x32xf32>
    %356 = arith.truncf %355 : vector<8x32xf32> to vector<8x32xbf16>
    %357 = vector.broadcast %324 : i32 to vector<8x1xi32>
    %358 = arith.cmpi slt, %357, %3 : vector<8x1xi32>
    %cst_86 = arith.constant 0.000000e+00 : bf16
    %359 = vector.broadcast %cst_86 : bf16 to vector<8x32xbf16>
    %360 = vector.shape_cast %358 : vector<8x1xi1> to vector<8x1xi1>
    %361 = vector.broadcast %360 : vector<8x1xi1> to vector<8x32xi1>
    %362 = arith.select %361, %356, %359 : vector<8x32xi1>, vector<8x32xbf16>
    %c0_87 = arith.constant 0 : index
    %363 = arith.index_cast %323 : i32 to index
    %c0_88 = arith.constant 0 : index
    %c0_89 = arith.constant 0 : index
    %364 = vector.load %arg5[%c0_87, %363, %c0_88, %c0_89] : memref<1x8x8x32xbf16, #tpu.memory_space<vmem>>, vector<1x1x8x32xbf16>
    %365 = vector.shape_cast %364 : vector<1x1x8x32xbf16> to vector<8x32xbf16>
    %366 = vector.shape_cast %362 : vector<8x32xbf16> to vector<1x1x8x32xbf16>
    tpu.vector_store %arg5[%c0_87, %363, %c0_88, %c0_89], %366 {strides = array<i32>} : memref<1x8x8x32xbf16, #tpu.memory_space<vmem>>, vector<1x1x8x32xbf16>,
    %367 = vector.shape_cast %358 : vector<8x1xi1> to vector<8x1xi1>
    %368 = vector.broadcast %367 : vector<8x1xi1> to vector<8x32xi1>
    %369 = arith.select %368, %356, %318 : vector<8x32xi1>, vector<8x32xbf16>
    %370 = vector.shape_cast %358 : vector<8x1xi1> to vector<8x1xi1>
    %371 = vector.broadcast %370 : vector<8x1xi1> to vector<8x32xi1>
    %372 = arith.select %371, %353, %321 : vector<8x32xi1>, vector<8x32xf32>
    %c7_i32_90 = arith.constant 7 : i32
    %373 = arith.muli %8, %c7_i32_90 : i32
    %374 = arith.addi %6, %373 : i32
    %375 = arith.addi %13, %374 : i32
    %c0_91 = arith.constant 0 : index
    %376 = arith.index_cast %374 : i32 to index
    %c0_92 = arith.constant 0 : index
    %c0_93 = arith.constant 0 : index
    %377 = vector.load %arg2[%c0_91, %376, %c0_92, %c0_93] : memref<1x8x8x128xbf16, #tpu.memory_space<vmem>>, vector<1x1x8x128xbf16>
    %378 = vector.shape_cast %377 : vector<1x1x8x128xbf16> to vector<8x128xbf16>
    %379 = arith.extf %378 : vector<8x128xbf16> to vector<8x128xf32>
    %cst_94 = arith.constant dense<0.000000e+00> : vector<8x128xf32>
    %380 = tpu.matmul %369, %5, %cst_94 {dimension_numbers = #tpu.dot_dimension_numbers<[1], [0], [0], [1], [0, 0, 1, 1], [], []>} : vector<8x32xbf16>, vector<32x128xbf16>, vector<8x128xf32> -> vector<8x128xf32>
    %381 = arith.addf %379, %380 : vector<8x128xf32>
    %382 = vector.extract_strided_slice %381 {offsets = [0, 0], sizes = [8, 32], strides = [1, 1]} : vector<8x128xf32> to vector<8x32xf32>
    %383 = arith.negf %382 : vector<8x32xf32>
    %384 = math.exp %383 : vector<8x32xf32>
    %cst_95 = arith.constant 1.000000e+00 : f32
    %385 = vector.broadcast %cst_95 : f32 to vector<8x32xf32>
    %386 = arith.addf %385, %384 : vector<8x32xf32>
    %387 = arith.divf %385, %386 : vector<8x32xf32>
    %388 = vector.extract_strided_slice %381 {offsets = [0, 32], sizes = [8, 32], strides = [1, 1]} : vector<8x128xf32> to vector<8x32xf32>
    %389 = arith.negf %388 : vector<8x32xf32>
    %390 = math.exp %389 : vector<8x32xf32>
    %cst_96 = arith.constant 1.000000e+00 : f32
    %391 = vector.broadcast %cst_96 : f32 to vector<8x32xf32>
    %392 = arith.addf %391, %390 : vector<8x32xf32>
    %393 = arith.divf %391, %392 : vector<8x32xf32>
    %394 = vector.extract_strided_slice %381 {offsets = [0, 64], sizes = [8, 32], strides = [1, 1]} : vector<8x128xf32> to vector<8x32xf32>
    %395 = math.tanh %394 : vector<8x32xf32>
    %396 = vector.extract_strided_slice %381 {offsets = [0, 96], sizes = [8, 32], strides = [1, 1]} : vector<8x128xf32> to vector<8x32xf32>
    %397 = arith.negf %396 : vector<8x32xf32>
    %398 = math.exp %397 : vector<8x32xf32>
    %cst_97 = arith.constant 1.000000e+00 : f32
    %399 = vector.broadcast %cst_97 : f32 to vector<8x32xf32>
    %400 = arith.addf %399, %398 : vector<8x32xf32>
    %401 = arith.divf %399, %400 : vector<8x32xf32>
    %402 = arith.mulf %393, %372 : vector<8x32xf32>
    %403 = arith.mulf %387, %395 : vector<8x32xf32>
    %404 = arith.addf %402, %403 : vector<8x32xf32>
    %405 = math.tanh %404 : vector<8x32xf32>
    %406 = arith.mulf %401, %405 : vector<8x32xf32>
    %407 = arith.truncf %406 : vector<8x32xf32> to vector<8x32xbf16>
    %408 = vector.broadcast %375 : i32 to vector<8x1xi32>
    %409 = arith.cmpi slt, %408, %3 : vector<8x1xi32>
    %cst_98 = arith.constant 0.000000e+00 : bf16
    %410 = vector.broadcast %cst_98 : bf16 to vector<8x32xbf16>
    %411 = vector.shape_cast %409 : vector<8x1xi1> to vector<8x1xi1>
    %412 = vector.broadcast %411 : vector<8x1xi1> to vector<8x32xi1>
    %413 = arith.select %412, %407, %410 : vector<8x32xi1>, vector<8x32xbf16>
    %c0_99 = arith.constant 0 : index
    %414 = arith.index_cast %374 : i32 to index
    %c0_100 = arith.constant 0 : index
    %c0_101 = arith.constant 0 : index
    %415 = vector.load %arg5[%c0_99, %414, %c0_100, %c0_101] : memref<1x8x8x32xbf16, #tpu.memory_space<vmem>>, vector<1x1x8x32xbf16>
    %416 = vector.shape_cast %415 : vector<1x1x8x32xbf16> to vector<8x32xbf16>
    %417 = vector.shape_cast %413 : vector<8x32xbf16> to vector<1x1x8x32xbf16>
    tpu.vector_store %arg5[%c0_99, %414, %c0_100, %c0_101], %417 {strides = array<i32>} : memref<1x8x8x32xbf16, #tpu.memory_space<vmem>>, vector<1x1x8x32xbf16>,
    %418 = vector.shape_cast %409 : vector<8x1xi1> to vector<8x1xi1>
    %419 = vector.broadcast %418 : vector<8x1xi1> to vector<8x32xi1>
    %420 = arith.select %419, %407, %369 : vector<8x32xi1>, vector<8x32xbf16>
    %421 = vector.shape_cast %409 : vector<8x1xi1> to vector<8x1xi1>
    %422 = vector.broadcast %421 : vector<8x1xi1> to vector<8x32xi1>
    %423 = arith.select %422, %404, %372 : vector<8x32xi1>, vector<8x32xf32>
    %c8_i32_102 = arith.constant 8 : i32
    %c0_103 = arith.constant 0 : index
    %c0_104 = arith.constant 0 : index
    %424 = vector.load %arg7[%c0_103, %c0_104] : memref<8x32xbf16, #tpu.memory_space<vmem>>, vector<8x32xbf16>
    tpu.vector_store %arg7[%c0_103, %c0_104], %420 {strides = array<i32>} : memref<8x32xbf16, #tpu.memory_space<vmem>>, vector<8x32xbf16>,
    %c0_105 = arith.constant 0 : index
    %c0_106 = arith.constant 0 : index
    %425 = vector.load %arg8[%c0_105, %c0_106] : memref<8x32xf32, #tpu.memory_space<vmem>>, vector<8x32xf32>
    tpu.vector_store %arg8[%c0_105, %c0_106], %423 {strides = array<i32>} : memref<8x32xf32, #tpu.memory_space<vmem>>, vector<8x32xf32>,
    %c0_i32_107 = arith.constant 0 : i32
    %426 = arith.cmpi eq, %arg1, %c0_i32_107 : i32
    %427 = arith.extui %426 : i1 to i32
    %c0_i32_108 = arith.constant 0 : i32
    %428 = arith.cmpi ne, %427, %c0_i32_108 : i32
    scf.if %428 {
      %429 = arith.extf %420 : vector<8x32xbf16> to vector<8x32xf32>
      %c0_109 = arith.constant 0 : index
      %c0_110 = arith.constant 0 : index
      %c0_111 = arith.constant 0 : index
      %430 = vector.load %arg6[%c0_109, %c0_110, %c0_111] : memref<1x8x32xf32, #tpu.memory_space<vmem>>, vector<1x8x32xf32>
      %431 = vector.shape_cast %430 : vector<1x8x32xf32> to vector<8x32xf32>
      %432 = vector.shape_cast %429 : vector<8x32xf32> to vector<1x8x32xf32>
      tpu.vector_store %arg6[%c0_109, %c0_110, %c0_111], %432 {strides = array<i32>} : memref<1x8x32xf32, #tpu.memory_space<vmem>>, vector<1x8x32xf32>,
    } else {
    }
    return
  }
  func.func @transform_0(%arg0: i32, %arg1: i32) -> (i32, i32, i32, i32) {
    %c2_i32 = arith.constant 2 : i32
    %0 = arith.muli %c2_i32, %arg1 : i32
    %c0_i32 = arith.constant 0 : i32
    %1 = arith.subi %c0_i32, %0 : i32
    %2 = arith.muli %arg0, %1 : i32
    %3 = arith.addi %arg1, %2 : i32
    %c0_i32_0 = arith.constant 0 : i32
    %c0_i32_1 = arith.constant 0 : i32
    %c0_i32_2 = arith.constant 0 : i32
    return %arg0, %3, %c0_i32_0, %c0_i32_1 : i32, i32, i32, i32
  }
  func.func @transform_1(%arg0: i32, %arg1: i32) -> (i32, i32) {
    %c0_i32 = arith.constant 0 : i32
    %c0_i32_0 = arith.constant 0 : i32
    %c0_i32_1 = arith.constant 0 : i32
    return %c0_i32, %c0_i32_0 : i32, i32
  }
  func.func @transform_2(%arg0: i32, %arg1: i32) -> (i32, i32, i32) {
    %c0_i32 = arith.constant 0 : i32
    %c0_i32_0 = arith.constant 0 : i32
    %c0_i32_1 = arith.constant 0 : i32
    return %arg0, %c0_i32, %c0_i32_0 : i32, i32, i32
  }
  func.func @transform_3(%arg0: i32, %arg1: i32) -> (i32, i32, i32, i32) {
    %c2_i32 = arith.constant 2 : i32
    %0 = arith.muli %c2_i32, %arg1 : i32
    %c0_i32 = arith.constant 0 : i32
    %1 = arith.subi %c0_i32, %0 : i32
    %2 = arith.muli %arg0, %1 : i32
    %3 = arith.addi %arg1, %2 : i32
    %c0_i32_0 = arith.constant 0 : i32
    %c0_i32_1 = arith.constant 0 : i32
    %c0_i32_2 = arith.constant 0 : i32
    return %arg0, %3, %c0_i32_0, %c0_i32_1 : i32, i32, i32, i32
  }
  func.func @transform_4(%arg0: i32, %arg1: i32) -> (i32, i32, i32) {
    %c0_i32 = arith.constant 0 : i32
    %c0_i32_0 = arith.constant 0 : i32
    %c0_i32_1 = arith.constant 0 : i32
    return %arg0, %c0_i32, %c0_i32_0 : i32, i32, i32
  }
}

module attributes {stable_mosaic.version = 11 : i64} {
  func.func @lstm_recurrent_kernel(%arg0: i32, %arg1: i32, %arg2: memref<1x8x8x128xbf16, #tpu.memory_space<vmem>>, %arg3: memref<8x1xi32, #tpu.memory_space<vmem>>, %arg4: memref<1x32x128xbf16, #tpu.memory_space<vmem>>, %arg5: memref<1x8x8x32xbf16, #tpu.memory_space<vmem>>, %arg6: memref<1x8x32xf32, #tpu.memory_space<vmem>>, %arg7: memref<8x32xbf16, #tpu.memory_space<vmem>>, %arg8: memref<8x32xf32, #tpu.memory_space<vmem>>) attributes {dimension_semantics = [#tpu.dimension_semantics<parallel>, #tpu.dimension_semantics<arbitrary>], iteration_bounds = array<i64: 2, 1>, scalar_prefetch = 0 : i64, scratch_operands = 2 : i64, tpu.core_type = #tpu.core_type<tc>, window_params = [{transform_indices = @transform_0, window_bounds = array<i64: 1, 8, 8, 128>}, {pipeline_mode = #tpu.pipeline_mode<synchronous>, transform_indices = @transform_1, window_bounds = array<i64: 8, 1>}, {transform_indices = @transform_2, window_bounds = array<i64: 1, 32, 128>}, {transform_indices = @transform_3, window_bounds = array<i64: 1, 8, 8, 32>}, {transform_indices = @transform_4, window_bounds = array<i64: 1, 8, 32>}]} {
    %c0_i32 = arith.constant 0 : i32
    %0 = arith.cmpi eq, %arg1, %c0_i32 : i32
    %1 = arith.extui %0 : i1 to i32
    %c0_i32_0 = arith.constant 0 : i32
    %2 = arith.cmpi ne, %1, %c0_i32_0 : i32
    scf.if %2 {
      %cst_109 = arith.constant 0.000000e+00 : bf16
      %429 = vector.broadcast %cst_109 : bf16 to vector<8x32xbf16>
      %c0_110 = arith.constant 0 : index
      %c0_111 = arith.constant 0 : index
      %430 = vector.load %arg7[%c0_110, %c0_111] : memref<8x32xbf16, #tpu.memory_space<vmem>>, vector<8x32xbf16>
      tpu.vector_store %arg7[%c0_110, %c0_111], %429 {strides = array<i32>} : memref<8x32xbf16, #tpu.memory_space<vmem>>, vector<8x32xbf16>,
      %cst_112 = arith.constant 0.000000e+00 : f32
      %431 = vector.broadcast %cst_112 : f32 to vector<8x32xf32>
      %c0_113 = arith.constant 0 : index
      %c0_114 = arith.constant 0 : index
      %432 = vector.load %arg8[%c0_113, %c0_114] : memref<8x32xf32, #tpu.memory_space<vmem>>, vector<8x32xf32>
      tpu.vector_store %arg8[%c0_113, %c0_114], %431 {strides = array<i32>} : memref<8x32xf32, #tpu.memory_space<vmem>>, vector<8x32xf32>,
    } else {
    }
    %c0 = arith.constant 0 : index
    %c0_1 = arith.constant 0 : index
    %3 = vector.load %arg3[%c0, %c0_1] : memref<8x1xi32, #tpu.memory_space<vmem>>, vector<8x1xi32>
    %c0_2 = arith.constant 0 : index
    %c0_3 = arith.constant 0 : index
    %c0_4 = arith.constant 0 : index
    %4 = vector.load %arg4[%c0_2, %c0_3, %c0_4] : memref<1x32x128xbf16, #tpu.memory_space<vmem>>, vector<1x32x128xbf16>
    %5 = vector.shape_cast %4 : vector<1x32x128xbf16> to vector<32x128xbf16>
    %c7_i32 = arith.constant 7 : i32
    %6 = arith.muli %arg0, %c7_i32 : i32
    %c2_i32 = arith.constant 2 : i32
    %7 = arith.muli %c2_i32, %arg0 : i32
    %c1_i32 = arith.constant 1 : i32
    %8 = arith.subi %c1_i32, %7 : i32
    %c2_i32_5 = arith.constant 2 : i32
    %9 = arith.muli %c2_i32_5, %arg1 : i32
    %c0_i32_6 = arith.constant 0 : i32
    %10 = arith.subi %c0_i32_6, %9 : i32
    %11 = arith.muli %arg0, %10 : i32
    %12 = arith.addi %arg1, %11 : i32
    %c8_i32 = arith.constant 8 : i32
    %13 = arith.muli %12, %c8_i32 : i32
    %c0_7 = arith.constant 0 : index
    %c0_8 = arith.constant 0 : index
    %14 = vector.load %arg7[%c0_7, %c0_8] : memref<8x32xbf16, #tpu.memory_space<vmem>>, vector<8x32xbf16>
    %c0_9 = arith.constant 0 : index
    %c0_10 = arith.constant 0 : index
    %15 = vector.load %arg8[%c0_9, %c0_10] : memref<8x32xf32, #tpu.memory_space<vmem>>, vector<8x32xf32>
    %c0_i32_11 = arith.constant 0 : i32
    %16 = arith.muli %8, %c0_i32_11 : i32
    %17 = arith.addi %6, %16 : i32
    %18 = arith.addi %13, %17 : i32
    %c0_12 = arith.constant 0 : index
    %19 = arith.index_cast %17 : i32 to index
    %c0_13 = arith.constant 0 : index
    %c0_14 = arith.constant 0 : index
    %20 = vector.load %arg2[%c0_12, %19, %c0_13, %c0_14] : memref<1x8x8x128xbf16, #tpu.memory_space<vmem>>, vector<1x1x8x128xbf16>
    %21 = vector.shape_cast %20 : vector<1x1x8x128xbf16> to vector<8x128xbf16>
    %22 = arith.extf %21 : vector<8x128xbf16> to vector<8x128xf32>
    %cst = arith.constant dense<0.000000e+00> : vector<8x128xf32>
    %23 = tpu.matmul %14, %5, %cst {dimension_numbers = #tpu.dot_dimension_numbers<[1], [0], [0], [1], [0, 0, 1, 1], [], []>} : vector<8x32xbf16>, vector<32x128xbf16>, vector<8x128xf32> -> vector<8x128xf32>
    %24 = arith.addf %22, %23 : vector<8x128xf32>
    %25 = vector.extract_strided_slice %24 {offsets = [0, 0], sizes = [8, 32], strides = [1, 1]} : vector<8x128xf32> to vector<8x32xf32>
    %26 = arith.negf %25 : vector<8x32xf32>
    %27 = math.exp %26 : vector<8x32xf32>
    %cst_15 = arith.constant 1.000000e+00 : f32
    %28 = vector.broadcast %cst_15 : f32 to vector<8x32xf32>
    %29 = arith.addf %28, %27 : vector<8x32xf32>
    %30 = arith.divf %28, %29 : vector<8x32xf32>
    %31 = vector.extract_strided_slice %24 {offsets = [0, 32], sizes = [8, 32], strides = [1, 1]} : vector<8x128xf32> to vector<8x32xf32>
    %32 = arith.negf %31 : vector<8x32xf32>
    %33 = math.exp %32 : vector<8x32xf32>
    %cst_16 = arith.constant 1.000000e+00 : f32
    %34 = vector.broadcast %cst_16 : f32 to vector<8x32xf32>
    %35 = arith.addf %34, %33 : vector<8x32xf32>
    %36 = arith.divf %34, %35 : vector<8x32xf32>
    %37 = vector.extract_strided_slice %24 {offsets = [0, 64], sizes = [8, 32], strides = [1, 1]} : vector<8x128xf32> to vector<8x32xf32>
    %38 = math.tanh %37 : vector<8x32xf32>
    %39 = vector.extract_strided_slice %24 {offsets = [0, 96], sizes = [8, 32], strides = [1, 1]} : vector<8x128xf32> to vector<8x32xf32>
    %40 = arith.negf %39 : vector<8x32xf32>
    %41 = math.exp %40 : vector<8x32xf32>
    %cst_17 = arith.constant 1.000000e+00 : f32
    %42 = vector.broadcast %cst_17 : f32 to vector<8x32xf32>
    %43 = arith.addf %42, %41 : vector<8x32xf32>
    %44 = arith.divf %42, %43 : vector<8x32xf32>
    %45 = arith.mulf %36, %15 : vector<8x32xf32>
    %46 = arith.mulf %30, %38 : vector<8x32xf32>
    %47 = arith.addf %45, %46 : vector<8x32xf32>
    %48 = math.tanh %47 : vector<8x32xf32>
    %49 = arith.mulf %44, %48 : vector<8x32xf32>
    %50 = arith.truncf %49 : vector<8x32xf32> to vector<8x32xbf16>
    %51 = vector.broadcast %18 : i32 to vector<8x1xi32>
    %52 = arith.cmpi slt, %51, %3 : vector<8x1xi32>
    %cst_18 = arith.constant 0.000000e+00 : bf16
    %53 = vector.broadcast %cst_18 : bf16 to vector<8x32xbf16>
    %54 = vector.shape_cast %52 : vector<8x1xi1> to vector<8x1xi1>
    %55 = vector.broadcast %54 : vector<8x1xi1> to vector<8x32xi1>
    %56 = arith.select %55, %50, %53 : vector<8x32xi1>, vector<8x32xbf16>
    %c0_19 = arith.constant 0 : index
    %57 = arith.index_cast %17 : i32 to index
    %c0_20 = arith.constant 0 : index
    %c0_21 = arith.constant 0 : index
    %58 = vector.load %arg5[%c0_19, %57, %c0_20, %c0_21] : memref<1x8x8x32xbf16, #tpu.memory_space<vmem>>, vector<1x1x8x32xbf16>
    %59 = vector.shape_cast %58 : vector<1x1x8x32xbf16> to vector<8x32xbf16>
    %60 = vector.shape_cast %56 : vector<8x32xbf16> to vector<1x1x8x32xbf16>
    tpu.vector_store %arg5[%c0_19, %57, %c0_20, %c0_21], %60 {strides = array<i32>} : memref<1x8x8x32xbf16, #tpu.memory_space<vmem>>, vector<1x1x8x32xbf16>,
    %61 = vector.shape_cast %52 : vector<8x1xi1> to vector<8x1xi1>
    %62 = vector.broadcast %61 : vector<8x1xi1> to vector<8x32xi1>
    %63 = arith.select %62, %50, %14 : vector<8x32xi1>, vector<8x32xbf16>
    %64 = vector.shape_cast %52 : vector<8x1xi1> to vector<8x1xi1>
    %65 = vector.broadcast %64 : vector<8x1xi1> to vector<8x32xi1>
    %66 = arith.select %65, %47, %15 : vector<8x32xi1>, vector<8x32xf32>
    %c1_i32_22 = arith.constant 1 : i32
    %67 = arith.muli %8, %c1_i32_22 : i32
    %68 = arith.addi %6, %67 : i32
    %69 = arith.addi %13, %68 : i32
    %c0_23 = arith.constant 0 : index
    %70 = arith.index_cast %68 : i32 to index
    %c0_24 = arith.constant 0 : index
    %c0_25 = arith.constant 0 : index
    %71 = vector.load %arg2[%c0_23, %70, %c0_24, %c0_25] : memref<1x8x8x128xbf16, #tpu.memory_space<vmem>>, vector<1x1x8x128xbf16>
    %72 = vector.shape_cast %71 : vector<1x1x8x128xbf16> to vector<8x128xbf16>
    %73 = arith.extf %72 : vector<8x128xbf16> to vector<8x128xf32>
    %cst_26 = arith.constant dense<0.000000e+00> : vector<8x128xf32>
    %74 = tpu.matmul %63, %5, %cst_26 {dimension_numbers = #tpu.dot_dimension_numbers<[1], [0], [0], [1], [0, 0, 1, 1], [], []>} : vector<8x32xbf16>, vector<32x128xbf16>, vector<8x128xf32> -> vector<8x128xf32>
    %75 = arith.addf %73, %74 : vector<8x128xf32>
    %76 = vector.extract_strided_slice %75 {offsets = [0, 0], sizes = [8, 32], strides = [1, 1]} : vector<8x128xf32> to vector<8x32xf32>
    %77 = arith.negf %76 : vector<8x32xf32>
    %78 = math.exp %77 : vector<8x32xf32>
    %cst_27 = arith.constant 1.000000e+00 : f32
    %79 = vector.broadcast %cst_27 : f32 to vector<8x32xf32>
    %80 = arith.addf %79, %78 : vector<8x32xf32>
    %81 = arith.divf %79, %80 : vector<8x32xf32>
    %82 = vector.extract_strided_slice %75 {offsets = [0, 32], sizes = [8, 32], strides = [1, 1]} : vector<8x128xf32> to vector<8x32xf32>
    %83 = arith.negf %82 : vector<8x32xf32>
    %84 = math.exp %83 : vector<8x32xf32>
    %cst_28 = arith.constant 1.000000e+00 : f32
    %85 = vector.broadcast %cst_28 : f32 to vector<8x32xf32>
    %86 = arith.addf %85, %84 : vector<8x32xf32>
    %87 = arith.divf %85, %86 : vector<8x32xf32>
    %88 = vector.extract_strided_slice %75 {offsets = [0, 64], sizes = [8, 32], strides = [1, 1]} : vector<8x128xf32> to vector<8x32xf32>
    %89 = math.tanh %88 : vector<8x32xf32>
    %90 = vector.extract_strided_slice %75 {offsets = [0, 96], sizes = [8, 32], strides = [1, 1]} : vector<8x128xf32> to vector<8x32xf32>
    %91 = arith.negf %90 : vector<8x32xf32>
    %92 = math.exp %91 : vector<8x32xf32>
    %cst_29 = arith.constant 1.000000e+00 : f32
    %93 = vector.broadcast %cst_29 : f32 to vector<8x32xf32>
    %94 = arith.addf %93, %92 : vector<8x32xf32>
    %95 = arith.divf %93, %94 : vector<8x32xf32>
    %96 = arith.mulf %87, %66 : vector<8x32xf32>
    %97 = arith.mulf %81, %89 : vector<8x32xf32>
    %98 = arith.addf %96, %97 : vector<8x32xf32>
    %99 = math.tanh %98 : vector<8x32xf32>
    %100 = arith.mulf %95, %99 : vector<8x32xf32>
    %101 = arith.truncf %100 : vector<8x32xf32> to vector<8x32xbf16>
    %102 = vector.broadcast %69 : i32 to vector<8x1xi32>
    %103 = arith.cmpi slt, %102, %3 : vector<8x1xi32>
    %cst_30 = arith.constant 0.000000e+00 : bf16
    %104 = vector.broadcast %cst_30 : bf16 to vector<8x32xbf16>
    %105 = vector.shape_cast %103 : vector<8x1xi1> to vector<8x1xi1>
    %106 = vector.broadcast %105 : vector<8x1xi1> to vector<8x32xi1>
    %107 = arith.select %106, %101, %104 : vector<8x32xi1>, vector<8x32xbf16>
    %c0_31 = arith.constant 0 : index
    %108 = arith.index_cast %68 : i32 to index
    %c0_32 = arith.constant 0 : index
    %c0_33 = arith.constant 0 : index
    %109 = vector.load %arg5[%c0_31, %108, %c0_32, %c0_33] : memref<1x8x8x32xbf16, #tpu.memory_space<vmem>>, vector<1x1x8x32xbf16>
    %110 = vector.shape_cast %109 : vector<1x1x8x32xbf16> to vector<8x32xbf16>
    %111 = vector.shape_cast %107 : vector<8x32xbf16> to vector<1x1x8x32xbf16>
    tpu.vector_store %arg5[%c0_31, %108, %c0_32, %c0_33], %111 {strides = array<i32>} : memref<1x8x8x32xbf16, #tpu.memory_space<vmem>>, vector<1x1x8x32xbf16>,
    %112 = vector.shape_cast %103 : vector<8x1xi1> to vector<8x1xi1>
    %113 = vector.broadcast %112 : vector<8x1xi1> to vector<8x32xi1>
    %114 = arith.select %113, %101, %63 : vector<8x32xi1>, vector<8x32xbf16>
    %115 = vector.shape_cast %103 : vector<8x1xi1> to vector<8x1xi1>
    %116 = vector.broadcast %115 : vector<8x1xi1> to vector<8x32xi1>
    %117 = arith.select %116, %98, %66 : vector<8x32xi1>, vector<8x32xf32>
    %c2_i32_34 = arith.constant 2 : i32
    %118 = arith.muli %8, %c2_i32_34 : i32
    %119 = arith.addi %6, %118 : i32
    %120 = arith.addi %13, %119 : i32
    %c0_35 = arith.constant 0 : index
    %121 = arith.index_cast %119 : i32 to index
    %c0_36 = arith.constant 0 : index
    %c0_37 = arith.constant 0 : index
    %122 = vector.load %arg2[%c0_35, %121, %c0_36, %c0_37] : memref<1x8x8x128xbf16, #tpu.memory_space<vmem>>, vector<1x1x8x128xbf16>
    %123 = vector.shape_cast %122 : vector<1x1x8x128xbf16> to vector<8x128xbf16>
    %124 = arith.extf %123 : vector<8x128xbf16> to vector<8x128xf32>
    %cst_38 = arith.constant dense<0.000000e+00> : vector<8x128xf32>
    %125 = tpu.matmul %114, %5, %cst_38 {dimension_numbers = #tpu.dot_dimension_numbers<[1], [0], [0], [1], [0, 0, 1, 1], [], []>} : vector<8x32xbf16>, vector<32x128xbf16>, vector<8x128xf32> -> vector<8x128xf32>
    %126 = arith.addf %124, %125 : vector<8x128xf32>
    %127 = vector.extract_strided_slice %126 {offsets = [0, 0], sizes = [8, 32], strides = [1, 1]} : vector<8x128xf32> to vector<8x32xf32>
    %128 = arith.negf %127 : vector<8x32xf32>
    %129 = math.exp %128 : vector<8x32xf32>
    %cst_39 = arith.constant 1.000000e+00 : f32
    %130 = vector.broadcast %cst_39 : f32 to vector<8x32xf32>
    %131 = arith.addf %130, %129 : vector<8x32xf32>
    %132 = arith.divf %130, %131 : vector<8x32xf32>
    %133 = vector.extract_strided_slice %126 {offsets = [0, 32], sizes = [8, 32], strides = [1, 1]} : vector<8x128xf32> to vector<8x32xf32>
    %134 = arith.negf %133 : vector<8x32xf32>
    %135 = math.exp %134 : vector<8x32xf32>
    %cst_40 = arith.constant 1.000000e+00 : f32
    %136 = vector.broadcast %cst_40 : f32 to vector<8x32xf32>
    %137 = arith.addf %136, %135 : vector<8x32xf32>
    %138 = arith.divf %136, %137 : vector<8x32xf32>
    %139 = vector.extract_strided_slice %126 {offsets = [0, 64], sizes = [8, 32], strides = [1, 1]} : vector<8x128xf32> to vector<8x32xf32>
    %140 = math.tanh %139 : vector<8x32xf32>
    %141 = vector.extract_strided_slice %126 {offsets = [0, 96], sizes = [8, 32], strides = [1, 1]} : vector<8x128xf32> to vector<8x32xf32>
    %142 = arith.negf %141 : vector<8x32xf32>
    %143 = math.exp %142 : vector<8x32xf32>
    %cst_41 = arith.constant 1.000000e+00 : f32
    %144 = vector.broadcast %cst_41 : f32 to vector<8x32xf32>
    %145 = arith.addf %144, %143 : vector<8x32xf32>
    %146 = arith.divf %144, %145 : vector<8x32xf32>
    %147 = arith.mulf %138, %117 : vector<8x32xf32>
    %148 = arith.mulf %132, %140 : vector<8x32xf32>
    %149 = arith.addf %147, %148 : vector<8x32xf32>
    %150 = math.tanh %149 : vector<8x32xf32>
    %151 = arith.mulf %146, %150 : vector<8x32xf32>
    %152 = arith.truncf %151 : vector<8x32xf32> to vector<8x32xbf16>
    %153 = vector.broadcast %120 : i32 to vector<8x1xi32>
    %154 = arith.cmpi slt, %153, %3 : vector<8x1xi32>
    %cst_42 = arith.constant 0.000000e+00 : bf16
    %155 = vector.broadcast %cst_42 : bf16 to vector<8x32xbf16>
    %156 = vector.shape_cast %154 : vector<8x1xi1> to vector<8x1xi1>
    %157 = vector.broadcast %156 : vector<8x1xi1> to vector<8x32xi1>
    %158 = arith.select %157, %152, %155 : vector<8x32xi1>, vector<8x32xbf16>
    %c0_43 = arith.constant 0 : index
    %159 = arith.index_cast %119 : i32 to index
    %c0_44 = arith.constant 0 : index
    %c0_45 = arith.constant 0 : index
    %160 = vector.load %arg5[%c0_43, %159, %c0_44, %c0_45] : memref<1x8x8x32xbf16, #tpu.memory_space<vmem>>, vector<1x1x8x32xbf16>
    %161 = vector.shape_cast %160 : vector<1x1x8x32xbf16> to vector<8x32xbf16>
    %162 = vector.shape_cast %158 : vector<8x32xbf16> to vector<1x1x8x32xbf16>
    tpu.vector_store %arg5[%c0_43, %159, %c0_44, %c0_45], %162 {strides = array<i32>} : memref<1x8x8x32xbf16, #tpu.memory_space<vmem>>, vector<1x1x8x32xbf16>,
    %163 = vector.shape_cast %154 : vector<8x1xi1> to vector<8x1xi1>
    %164 = vector.broadcast %163 : vector<8x1xi1> to vector<8x32xi1>
    %165 = arith.select %164, %152, %114 : vector<8x32xi1>, vector<8x32xbf16>
    %166 = vector.shape_cast %154 : vector<8x1xi1> to vector<8x1xi1>
    %167 = vector.broadcast %166 : vector<8x1xi1> to vector<8x32xi1>
    %168 = arith.select %167, %149, %117 : vector<8x32xi1>, vector<8x32xf32>
    %c3_i32 = arith.constant 3 : i32
    %169 = arith.muli %8, %c3_i32 : i32
    %170 = arith.addi %6, %169 : i32
    %171 = arith.addi %13, %170 : i32
    %c0_46 = arith.constant 0 : index
    %172 = arith.index_cast %170 : i32 to index
    %c0_47 = arith.constant 0 : index
    %c0_48 = arith.constant 0 : index
    %173 = vector.load %arg2[%c0_46, %172, %c0_47, %c0_48] : memref<1x8x8x128xbf16, #tpu.memory_space<vmem>>, vector<1x1x8x128xbf16>
    %174 = vector.shape_cast %173 : vector<1x1x8x128xbf16> to vector<8x128xbf16>
    %175 = arith.extf %174 : vector<8x128xbf16> to vector<8x128xf32>
    %cst_49 = arith.constant dense<0.000000e+00> : vector<8x128xf32>
    %176 = tpu.matmul %165, %5, %cst_49 {dimension_numbers = #tpu.dot_dimension_numbers<[1], [0], [0], [1], [0, 0, 1, 1], [], []>} : vector<8x32xbf16>, vector<32x128xbf16>, vector<8x128xf32> -> vector<8x128xf32>
    %177 = arith.addf %175, %176 : vector<8x128xf32>
    %178 = vector.extract_strided_slice %177 {offsets = [0, 0], sizes = [8, 32], strides = [1, 1]} : vector<8x128xf32> to vector<8x32xf32>
    %179 = arith.negf %178 : vector<8x32xf32>
    %180 = math.exp %179 : vector<8x32xf32>
    %cst_50 = arith.constant 1.000000e+00 : f32
    %181 = vector.broadcast %cst_50 : f32 to vector<8x32xf32>
    %182 = arith.addf %181, %180 : vector<8x32xf32>
    %183 = arith.divf %181, %182 : vector<8x32xf32>
    %184 = vector.extract_strided_slice %177 {offsets = [0, 32], sizes = [8, 32], strides = [1, 1]} : vector<8x128xf32> to vector<8x32xf32>
    %185 = arith.negf %184 : vector<8x32xf32>
    %186 = math.exp %185 : vector<8x32xf32>
    %cst_51 = arith.constant 1.000000e+00 : f32
    %187 = vector.broadcast %cst_51 : f32 to vector<8x32xf32>
    %188 = arith.addf %187, %186 : vector<8x32xf32>
    %189 = arith.divf %187, %188 : vector<8x32xf32>
    %190 = vector.extract_strided_slice %177 {offsets = [0, 64], sizes = [8, 32], strides = [1, 1]} : vector<8x128xf32> to vector<8x32xf32>
    %191 = math.tanh %190 : vector<8x32xf32>
    %192 = vector.extract_strided_slice %177 {offsets = [0, 96], sizes = [8, 32], strides = [1, 1]} : vector<8x128xf32> to vector<8x32xf32>
    %193 = arith.negf %192 : vector<8x32xf32>
    %194 = math.exp %193 : vector<8x32xf32>
    %cst_52 = arith.constant 1.000000e+00 : f32
    %195 = vector.broadcast %cst_52 : f32 to vector<8x32xf32>
    %196 = arith.addf %195, %194 : vector<8x32xf32>
    %197 = arith.divf %195, %196 : vector<8x32xf32>
    %198 = arith.mulf %189, %168 : vector<8x32xf32>
    %199 = arith.mulf %183, %191 : vector<8x32xf32>
    %200 = arith.addf %198, %199 : vector<8x32xf32>
    %201 = math.tanh %200 : vector<8x32xf32>
    %202 = arith.mulf %197, %201 : vector<8x32xf32>
    %203 = arith.truncf %202 : vector<8x32xf32> to vector<8x32xbf16>
    %204 = vector.broadcast %171 : i32 to vector<8x1xi32>
    %205 = arith.cmpi slt, %204, %3 : vector<8x1xi32>
    %cst_53 = arith.constant 0.000000e+00 : bf16
    %206 = vector.broadcast %cst_53 : bf16 to vector<8x32xbf16>
    %207 = vector.shape_cast %205 : vector<8x1xi1> to vector<8x1xi1>
    %208 = vector.broadcast %207 : vector<8x1xi1> to vector<8x32xi1>
    %209 = arith.select %208, %203, %206 : vector<8x32xi1>, vector<8x32xbf16>
    %c0_54 = arith.constant 0 : index
    %210 = arith.index_cast %170 : i32 to index
    %c0_55 = arith.constant 0 : index
    %c0_56 = arith.constant 0 : index
    %211 = vector.load %arg5[%c0_54, %210, %c0_55, %c0_56] : memref<1x8x8x32xbf16, #tpu.memory_space<vmem>>, vector<1x1x8x32xbf16>
    %212 = vector.shape_cast %211 : vector<1x1x8x32xbf16> to vector<8x32xbf16>
    %213 = vector.shape_cast %209 : vector<8x32xbf16> to vector<1x1x8x32xbf16>
    tpu.vector_store %arg5[%c0_54, %210, %c0_55, %c0_56], %213 {strides = array<i32>} : memref<1x8x8x32xbf16, #tpu.memory_space<vmem>>, vector<1x1x8x32xbf16>,
    %214 = vector.shape_cast %205 : vector<8x1xi1> to vector<8x1xi1>
    %215 = vector.broadcast %214 : vector<8x1xi1> to vector<8x32xi1>
    %216 = arith.select %215, %203, %165 : vector<8x32xi1>, vector<8x32xbf16>
    %217 = vector.shape_cast %205 : vector<8x1xi1> to vector<8x1xi1>
    %218 = vector.broadcast %217 : vector<8x1xi1> to vector<8x32xi1>
    %219 = arith.select %218, %200, %168 : vector<8x32xi1>, vector<8x32xf32>
    %c4_i32 = arith.constant 4 : i32
    %220 = arith.muli %8, %c4_i32 : i32
    %221 = arith.addi %6, %220 : i32
    %222 = arith.addi %13, %221 : i32
    %c0_57 = arith.constant 0 : index
    %223 = arith.index_cast %221 : i32 to index
    %c0_58 = arith.constant 0 : index
    %c0_59 = arith.constant 0 : index
    %224 = vector.load %arg2[%c0_57, %223, %c0_58, %c0_59] : memref<1x8x8x128xbf16, #tpu.memory_space<vmem>>, vector<1x1x8x128xbf16>
    %225 = vector.shape_cast %224 : vector<1x1x8x128xbf16> to vector<8x128xbf16>
    %226 = arith.extf %225 : vector<8x128xbf16> to vector<8x128xf32>
    %cst_60 = arith.constant dense<0.000000e+00> : vector<8x128xf32>
    %227 = tpu.matmul %216, %5, %cst_60 {dimension_numbers = #tpu.dot_dimension_numbers<[1], [0], [0], [1], [0, 0, 1, 1], [], []>} : vector<8x32xbf16>, vector<32x128xbf16>, vector<8x128xf32> -> vector<8x128xf32>
    %228 = arith.addf %226, %227 : vector<8x128xf32>
    %229 = vector.extract_strided_slice %228 {offsets = [0, 0], sizes = [8, 32], strides = [1, 1]} : vector<8x128xf32> to vector<8x32xf32>
    %230 = arith.negf %229 : vector<8x32xf32>
    %231 = math.exp %230 : vector<8x32xf32>
    %cst_61 = arith.constant 1.000000e+00 : f32
    %232 = vector.broadcast %cst_61 : f32 to vector<8x32xf32>
    %233 = arith.addf %232, %231 : vector<8x32xf32>
    %234 = arith.divf %232, %233 : vector<8x32xf32>
    %235 = vector.extract_strided_slice %228 {offsets = [0, 32], sizes = [8, 32], strides = [1, 1]} : vector<8x128xf32> to vector<8x32xf32>
    %236 = arith.negf %235 : vector<8x32xf32>
    %237 = math.exp %236 : vector<8x32xf32>
    %cst_62 = arith.constant 1.000000e+00 : f32
    %238 = vector.broadcast %cst_62 : f32 to vector<8x32xf32>
    %239 = arith.addf %238, %237 : vector<8x32xf32>
    %240 = arith.divf %238, %239 : vector<8x32xf32>
    %241 = vector.extract_strided_slice %228 {offsets = [0, 64], sizes = [8, 32], strides = [1, 1]} : vector<8x128xf32> to vector<8x32xf32>
    %242 = math.tanh %241 : vector<8x32xf32>
    %243 = vector.extract_strided_slice %228 {offsets = [0, 96], sizes = [8, 32], strides = [1, 1]} : vector<8x128xf32> to vector<8x32xf32>
    %244 = arith.negf %243 : vector<8x32xf32>
    %245 = math.exp %244 : vector<8x32xf32>
    %cst_63 = arith.constant 1.000000e+00 : f32
    %246 = vector.broadcast %cst_63 : f32 to vector<8x32xf32>
    %247 = arith.addf %246, %245 : vector<8x32xf32>
    %248 = arith.divf %246, %247 : vector<8x32xf32>
    %249 = arith.mulf %240, %219 : vector<8x32xf32>
    %250 = arith.mulf %234, %242 : vector<8x32xf32>
    %251 = arith.addf %249, %250 : vector<8x32xf32>
    %252 = math.tanh %251 : vector<8x32xf32>
    %253 = arith.mulf %248, %252 : vector<8x32xf32>
    %254 = arith.truncf %253 : vector<8x32xf32> to vector<8x32xbf16>
    %255 = vector.broadcast %222 : i32 to vector<8x1xi32>
    %256 = arith.cmpi slt, %255, %3 : vector<8x1xi32>
    %cst_64 = arith.constant 0.000000e+00 : bf16
    %257 = vector.broadcast %cst_64 : bf16 to vector<8x32xbf16>
    %258 = vector.shape_cast %256 : vector<8x1xi1> to vector<8x1xi1>
    %259 = vector.broadcast %258 : vector<8x1xi1> to vector<8x32xi1>
    %260 = arith.select %259, %254, %257 : vector<8x32xi1>, vector<8x32xbf16>
    %c0_65 = arith.constant 0 : index
    %261 = arith.index_cast %221 : i32 to index
    %c0_66 = arith.constant 0 : index
    %c0_67 = arith.constant 0 : index
    %262 = vector.load %arg5[%c0_65, %261, %c0_66, %c0_67] : memref<1x8x8x32xbf16, #tpu.memory_space<vmem>>, vector<1x1x8x32xbf16>
    %263 = vector.shape_cast %262 : vector<1x1x8x32xbf16> to vector<8x32xbf16>
    %264 = vector.shape_cast %260 : vector<8x32xbf16> to vector<1x1x8x32xbf16>
    tpu.vector_store %arg5[%c0_65, %261, %c0_66, %c0_67], %264 {strides = array<i32>} : memref<1x8x8x32xbf16, #tpu.memory_space<vmem>>, vector<1x1x8x32xbf16>,
    %265 = vector.shape_cast %256 : vector<8x1xi1> to vector<8x1xi1>
    %266 = vector.broadcast %265 : vector<8x1xi1> to vector<8x32xi1>
    %267 = arith.select %266, %254, %216 : vector<8x32xi1>, vector<8x32xbf16>
    %268 = vector.shape_cast %256 : vector<8x1xi1> to vector<8x1xi1>
    %269 = vector.broadcast %268 : vector<8x1xi1> to vector<8x32xi1>
    %270 = arith.select %269, %251, %219 : vector<8x32xi1>, vector<8x32xf32>
    %c5_i32 = arith.constant 5 : i32
    %271 = arith.muli %8, %c5_i32 : i32
    %272 = arith.addi %6, %271 : i32
    %273 = arith.addi %13, %272 : i32
    %c0_68 = arith.constant 0 : index
    %274 = arith.index_cast %272 : i32 to index
    %c0_69 = arith.constant 0 : index
    %c0_70 = arith.constant 0 : index
    %275 = vector.load %arg2[%c0_68, %274, %c0_69, %c0_70] : memref<1x8x8x128xbf16, #tpu.memory_space<vmem>>, vector<1x1x8x128xbf16>
    %276 = vector.shape_cast %275 : vector<1x1x8x128xbf16> to vector<8x128xbf16>
    %277 = arith.extf %276 : vector<8x128xbf16> to vector<8x128xf32>
    %cst_71 = arith.constant dense<0.000000e+00> : vector<8x128xf32>
    %278 = tpu.matmul %267, %5, %cst_71 {dimension_numbers = #tpu.dot_dimension_numbers<[1], [0], [0], [1], [0, 0, 1, 1], [], []>} : vector<8x32xbf16>, vector<32x128xbf16>, vector<8x128xf32> -> vector<8x128xf32>
    %279 = arith.addf %277, %278 : vector<8x128xf32>
    %280 = vector.extract_strided_slice %279 {offsets = [0, 0], sizes = [8, 32], strides = [1, 1]} : vector<8x128xf32> to vector<8x32xf32>
    %281 = arith.negf %280 : vector<8x32xf32>
    %282 = math.exp %281 : vector<8x32xf32>
    %cst_72 = arith.constant 1.000000e+00 : f32
    %283 = vector.broadcast %cst_72 : f32 to vector<8x32xf32>
    %284 = arith.addf %283, %282 : vector<8x32xf32>
    %285 = arith.divf %283, %284 : vector<8x32xf32>
    %286 = vector.extract_strided_slice %279 {offsets = [0, 32], sizes = [8, 32], strides = [1, 1]} : vector<8x128xf32> to vector<8x32xf32>
    %287 = arith.negf %286 : vector<8x32xf32>
    %288 = math.exp %287 : vector<8x32xf32>
    %cst_73 = arith.constant 1.000000e+00 : f32
    %289 = vector.broadcast %cst_73 : f32 to vector<8x32xf32>
    %290 = arith.addf %289, %288 : vector<8x32xf32>
    %291 = arith.divf %289, %290 : vector<8x32xf32>
    %292 = vector.extract_strided_slice %279 {offsets = [0, 64], sizes = [8, 32], strides = [1, 1]} : vector<8x128xf32> to vector<8x32xf32>
    %293 = math.tanh %292 : vector<8x32xf32>
    %294 = vector.extract_strided_slice %279 {offsets = [0, 96], sizes = [8, 32], strides = [1, 1]} : vector<8x128xf32> to vector<8x32xf32>
    %295 = arith.negf %294 : vector<8x32xf32>
    %296 = math.exp %295 : vector<8x32xf32>
    %cst_74 = arith.constant 1.000000e+00 : f32
    %297 = vector.broadcast %cst_74 : f32 to vector<8x32xf32>
    %298 = arith.addf %297, %296 : vector<8x32xf32>
    %299 = arith.divf %297, %298 : vector<8x32xf32>
    %300 = arith.mulf %291, %270 : vector<8x32xf32>
    %301 = arith.mulf %285, %293 : vector<8x32xf32>
    %302 = arith.addf %300, %301 : vector<8x32xf32>
    %303 = math.tanh %302 : vector<8x32xf32>
    %304 = arith.mulf %299, %303 : vector<8x32xf32>
    %305 = arith.truncf %304 : vector<8x32xf32> to vector<8x32xbf16>
    %306 = vector.broadcast %273 : i32 to vector<8x1xi32>
    %307 = arith.cmpi slt, %306, %3 : vector<8x1xi32>
    %cst_75 = arith.constant 0.000000e+00 : bf16
    %308 = vector.broadcast %cst_75 : bf16 to vector<8x32xbf16>
    %309 = vector.shape_cast %307 : vector<8x1xi1> to vector<8x1xi1>
    %310 = vector.broadcast %309 : vector<8x1xi1> to vector<8x32xi1>
    %311 = arith.select %310, %305, %308 : vector<8x32xi1>, vector<8x32xbf16>
    %c0_76 = arith.constant 0 : index
    %312 = arith.index_cast %272 : i32 to index
    %c0_77 = arith.constant 0 : index
    %c0_78 = arith.constant 0 : index
    %313 = vector.load %arg5[%c0_76, %312, %c0_77, %c0_78] : memref<1x8x8x32xbf16, #tpu.memory_space<vmem>>, vector<1x1x8x32xbf16>
    %314 = vector.shape_cast %313 : vector<1x1x8x32xbf16> to vector<8x32xbf16>
    %315 = vector.shape_cast %311 : vector<8x32xbf16> to vector<1x1x8x32xbf16>
    tpu.vector_store %arg5[%c0_76, %312, %c0_77, %c0_78], %315 {strides = array<i32>} : memref<1x8x8x32xbf16, #tpu.memory_space<vmem>>, vector<1x1x8x32xbf16>,
    %316 = vector.shape_cast %307 : vector<8x1xi1> to vector<8x1xi1>
    %317 = vector.broadcast %316 : vector<8x1xi1> to vector<8x32xi1>
    %318 = arith.select %317, %305, %267 : vector<8x32xi1>, vector<8x32xbf16>
    %319 = vector.shape_cast %307 : vector<8x1xi1> to vector<8x1xi1>
    %320 = vector.broadcast %319 : vector<8x1xi1> to vector<8x32xi1>
    %321 = arith.select %320, %302, %270 : vector<8x32xi1>, vector<8x32xf32>
    %c6_i32 = arith.constant 6 : i32
    %322 = arith.muli %8, %c6_i32 : i32
    %323 = arith.addi %6, %322 : i32
    %324 = arith.addi %13, %323 : i32
    %c0_79 = arith.constant 0 : index
    %325 = arith.index_cast %323 : i32 to index
    %c0_80 = arith.constant 0 : index
    %c0_81 = arith.constant 0 : index
    %326 = vector.load %arg2[%c0_79, %325, %c0_80, %c0_81] : memref<1x8x8x128xbf16, #tpu.memory_space<vmem>>, vector<1x1x8x128xbf16>
    %327 = vector.shape_cast %326 : vector<1x1x8x128xbf16> to vector<8x128xbf16>
    %328 = arith.extf %327 : vector<8x128xbf16> to vector<8x128xf32>
    %cst_82 = arith.constant dense<0.000000e+00> : vector<8x128xf32>
    %329 = tpu.matmul %318, %5, %cst_82 {dimension_numbers = #tpu.dot_dimension_numbers<[1], [0], [0], [1], [0, 0, 1, 1], [], []>} : vector<8x32xbf16>, vector<32x128xbf16>, vector<8x128xf32> -> vector<8x128xf32>
    %330 = arith.addf %328, %329 : vector<8x128xf32>
    %331 = vector.extract_strided_slice %330 {offsets = [0, 0], sizes = [8, 32], strides = [1, 1]} : vector<8x128xf32> to vector<8x32xf32>
    %332 = arith.negf %331 : vector<8x32xf32>
    %333 = math.exp %332 : vector<8x32xf32>
    %cst_83 = arith.constant 1.000000e+00 : f32
    %334 = vector.broadcast %cst_83 : f32 to vector<8x32xf32>
    %335 = arith.addf %334, %333 : vector<8x32xf32>
    %336 = arith.divf %334, %335 : vector<8x32xf32>
    %337 = vector.extract_strided_slice %330 {offsets = [0, 32], sizes = [8, 32], strides = [1, 1]} : vector<8x128xf32> to vector<8x32xf32>
    %338 = arith.negf %337 : vector<8x32xf32>
    %339 = math.exp %338 : vector<8x32xf32>
    %cst_84 = arith.constant 1.000000e+00 : f32
    %340 = vector.broadcast %cst_84 : f32 to vector<8x32xf32>
    %341 = arith.addf %340, %339 : vector<8x32xf32>
    %342 = arith.divf %340, %341 : vector<8x32xf32>
    %343 = vector.extract_strided_slice %330 {offsets = [0, 64], sizes = [8, 32], strides = [1, 1]} : vector<8x128xf32> to vector<8x32xf32>
    %344 = math.tanh %343 : vector<8x32xf32>
    %345 = vector.extract_strided_slice %330 {offsets = [0, 96], sizes = [8, 32], strides = [1, 1]} : vector<8x128xf32> to vector<8x32xf32>
    %346 = arith.negf %345 : vector<8x32xf32>
    %347 = math.exp %346 : vector<8x32xf32>
    %cst_85 = arith.constant 1.000000e+00 : f32
    %348 = vector.broadcast %cst_85 : f32 to vector<8x32xf32>
    %349 = arith.addf %348, %347 : vector<8x32xf32>
    %350 = arith.divf %348, %349 : vector<8x32xf32>
    %351 = arith.mulf %342, %321 : vector<8x32xf32>
    %352 = arith.mulf %336, %344 : vector<8x32xf32>
    %353 = arith.addf %351, %352 : vector<8x32xf32>
    %354 = math.tanh %353 : vector<8x32xf32>
    %355 = arith.mulf %350, %354 : vector<8x32xf32>
    %356 = arith.truncf %355 : vector<8x32xf32> to vector<8x32xbf16>
    %357 = vector.broadcast %324 : i32 to vector<8x1xi32>
    %358 = arith.cmpi slt, %357, %3 : vector<8x1xi32>
    %cst_86 = arith.constant 0.000000e+00 : bf16
    %359 = vector.broadcast %cst_86 : bf16 to vector<8x32xbf16>
    %360 = vector.shape_cast %358 : vector<8x1xi1> to vector<8x1xi1>
    %361 = vector.broadcast %360 : vector<8x1xi1> to vector<8x32xi1>
    %362 = arith.select %361, %356, %359 : vector<8x32xi1>, vector<8x32xbf16>
    %c0_87 = arith.constant 0 : index
    %363 = arith.index_cast %323 : i32 to index
    %c0_88 = arith.constant 0 : index
    %c0_89 = arith.constant 0 : index
    %364 = vector.load %arg5[%c0_87, %363, %c0_88, %c0_89] : memref<1x8x8x32xbf16, #tpu.memory_space<vmem>>, vector<1x1x8x32xbf16>
    %365 = vector.shape_cast %364 : vector<1x1x8x32xbf16> to vector<8x32xbf16>
    %366 = vector.shape_cast %362 : vector<8x32xbf16> to vector<1x1x8x32xbf16>
    tpu.vector_store %arg5[%c0_87, %363, %c0_88, %c0_89], %366 {strides = array<i32>} : memref<1x8x8x32xbf16, #tpu.memory_space<vmem>>, vector<1x1x8x32xbf16>,
    %367 = vector.shape_cast %358 : vector<8x1xi1> to vector<8x1xi1>
    %368 = vector.broadcast %367 : vector<8x1xi1> to vector<8x32xi1>
    %369 = arith.select %368, %356, %318 : vector<8x32xi1>, vector<8x32xbf16>
    %370 = vector.shape_cast %358 : vector<8x1xi1> to vector<8x1xi1>
    %371 = vector.broadcast %370 : vector<8x1xi1> to vector<8x32xi1>
    %372 = arith.select %371, %353, %321 : vector<8x32xi1>, vector<8x32xf32>
    %c7_i32_90 = arith.constant 7 : i32
    %373 = arith.muli %8, %c7_i32_90 : i32
    %374 = arith.addi %6, %373 : i32
    %375 = arith.addi %13, %374 : i32
    %c0_91 = arith.constant 0 : index
    %376 = arith.index_cast %374 : i32 to index
    %c0_92 = arith.constant 0 : index
    %c0_93 = arith.constant 0 : index
    %377 = vector.load %arg2[%c0_91, %376, %c0_92, %c0_93] : memref<1x8x8x128xbf16, #tpu.memory_space<vmem>>, vector<1x1x8x128xbf16>
    %378 = vector.shape_cast %377 : vector<1x1x8x128xbf16> to vector<8x128xbf16>
    %379 = arith.extf %378 : vector<8x128xbf16> to vector<8x128xf32>
    %cst_94 = arith.constant dense<0.000000e+00> : vector<8x128xf32>
    %380 = tpu.matmul %369, %5, %cst_94 {dimension_numbers = #tpu.dot_dimension_numbers<[1], [0], [0], [1], [0, 0, 1, 1], [], []>} : vector<8x32xbf16>, vector<32x128xbf16>, vector<8x128xf32> -> vector<8x128xf32>
    %381 = arith.addf %379, %380 : vector<8x128xf32>
    %382 = vector.extract_strided_slice %381 {offsets = [0, 0], sizes = [8, 32], strides = [1, 1]} : vector<8x128xf32> to vector<8x32xf32>
    %383 = arith.negf %382 : vector<8x32xf32>
    %384 = math.exp %383 : vector<8x32xf32>
    %cst_95 = arith.constant 1.000000e+00 : f32
    %385 = vector.broadcast %cst_95 : f32 to vector<8x32xf32>
    %386 = arith.addf %385, %384 : vector<8x32xf32>
    %387 = arith.divf %385, %386 : vector<8x32xf32>
    %388 = vector.extract_strided_slice %381 {offsets = [0, 32], sizes = [8, 32], strides = [1, 1]} : vector<8x128xf32> to vector<8x32xf32>
    %389 = arith.negf %388 : vector<8x32xf32>
    %390 = math.exp %389 : vector<8x32xf32>
    %cst_96 = arith.constant 1.000000e+00 : f32
    %391 = vector.broadcast %cst_96 : f32 to vector<8x32xf32>
    %392 = arith.addf %391, %390 : vector<8x32xf32>
    %393 = arith.divf %391, %392 : vector<8x32xf32>
    %394 = vector.extract_strided_slice %381 {offsets = [0, 64], sizes = [8, 32], strides = [1, 1]} : vector<8x128xf32> to vector<8x32xf32>
    %395 = math.tanh %394 : vector<8x32xf32>
    %396 = vector.extract_strided_slice %381 {offsets = [0, 96], sizes = [8, 32], strides = [1, 1]} : vector<8x128xf32> to vector<8x32xf32>
    %397 = arith.negf %396 : vector<8x32xf32>
    %398 = math.exp %397 : vector<8x32xf32>
    %cst_97 = arith.constant 1.000000e+00 : f32
    %399 = vector.broadcast %cst_97 : f32 to vector<8x32xf32>
    %400 = arith.addf %399, %398 : vector<8x32xf32>
    %401 = arith.divf %399, %400 : vector<8x32xf32>
    %402 = arith.mulf %393, %372 : vector<8x32xf32>
    %403 = arith.mulf %387, %395 : vector<8x32xf32>
    %404 = arith.addf %402, %403 : vector<8x32xf32>
    %405 = math.tanh %404 : vector<8x32xf32>
    %406 = arith.mulf %401, %405 : vector<8x32xf32>
    %407 = arith.truncf %406 : vector<8x32xf32> to vector<8x32xbf16>
    %408 = vector.broadcast %375 : i32 to vector<8x1xi32>
    %409 = arith.cmpi slt, %408, %3 : vector<8x1xi32>
    %cst_98 = arith.constant 0.000000e+00 : bf16
    %410 = vector.broadcast %cst_98 : bf16 to vector<8x32xbf16>
    %411 = vector.shape_cast %409 : vector<8x1xi1> to vector<8x1xi1>
    %412 = vector.broadcast %411 : vector<8x1xi1> to vector<8x32xi1>
    %413 = arith.select %412, %407, %410 : vector<8x32xi1>, vector<8x32xbf16>
    %c0_99 = arith.constant 0 : index
    %414 = arith.index_cast %374 : i32 to index
    %c0_100 = arith.constant 0 : index
    %c0_101 = arith.constant 0 : index
    %415 = vector.load %arg5[%c0_99, %414, %c0_100, %c0_101] : memref<1x8x8x32xbf16, #tpu.memory_space<vmem>>, vector<1x1x8x32xbf16>
    %416 = vector.shape_cast %415 : vector<1x1x8x32xbf16> to vector<8x32xbf16>
    %417 = vector.shape_cast %413 : vector<8x32xbf16> to vector<1x1x8x32xbf16>
    tpu.vector_store %arg5[%c0_99, %414, %c0_100, %c0_101], %417 {strides = array<i32>} : memref<1x8x8x32xbf16, #tpu.memory_space<vmem>>, vector<1x1x8x32xbf16>,
    %418 = vector.shape_cast %409 : vector<8x1xi1> to vector<8x1xi1>
    %419 = vector.broadcast %418 : vector<8x1xi1> to vector<8x32xi1>
    %420 = arith.select %419, %407, %369 : vector<8x32xi1>, vector<8x32xbf16>
    %421 = vector.shape_cast %409 : vector<8x1xi1> to vector<8x1xi1>
    %422 = vector.broadcast %421 : vector<8x1xi1> to vector<8x32xi1>
    %423 = arith.select %422, %404, %372 : vector<8x32xi1>, vector<8x32xf32>
    %c8_i32_102 = arith.constant 8 : i32
    %c0_103 = arith.constant 0 : index
    %c0_104 = arith.constant 0 : index
    %424 = vector.load %arg7[%c0_103, %c0_104] : memref<8x32xbf16, #tpu.memory_space<vmem>>, vector<8x32xbf16>
    tpu.vector_store %arg7[%c0_103, %c0_104], %420 {strides = array<i32>} : memref<8x32xbf16, #tpu.memory_space<vmem>>, vector<8x32xbf16>,
    %c0_105 = arith.constant 0 : index
    %c0_106 = arith.constant 0 : index
    %425 = vector.load %arg8[%c0_105, %c0_106] : memref<8x32xf32, #tpu.memory_space<vmem>>, vector<8x32xf32>
    tpu.vector_store %arg8[%c0_105, %c0_106], %423 {strides = array<i32>} : memref<8x32xf32, #tpu.memory_space<vmem>>, vector<8x32xf32>,
    %c0_i32_107 = arith.constant 0 : i32
    %426 = arith.cmpi eq, %arg1, %c0_i32_107 : i32
    %427 = arith.extui %426 : i1 to i32
    %c0_i32_108 = arith.constant 0 : i32
    %428 = arith.cmpi ne, %427, %c0_i32_108 : i32
    scf.if %428 {
      %429 = arith.extf %420 : vector<8x32xbf16> to vector<8x32xf32>
      %c0_109 = arith.constant 0 : index
      %c0_110 = arith.constant 0 : index
      %c0_111 = arith.constant 0 : index
      %430 = vector.load %arg6[%c0_109, %c0_110, %c0_111] : memref<1x8x32xf32, #tpu.memory_space<vmem>>, vector<1x8x32xf32>
      %431 = vector.shape_cast %430 : vector<1x8x32xf32> to vector<8x32xf32>
      %432 = vector.shape_cast %429 : vector<8x32xf32> to vector<1x8x32xf32>
      tpu.vector_store %arg6[%c0_109, %c0_110, %c0_111], %432 {strides = array<i32>} : memref<1x8x32xf32, #tpu.memory_space<vmem>>, vector<1x8x32xf32>,
    } else {
    }
    return
  }
  func.func @transform_0(%arg0: i32, %arg1: i32) -> (i32, i32, i32, i32) {
    %c2_i32 = arith.constant 2 : i32
    %0 = arith.muli %c2_i32, %arg1 : i32
    %c0_i32 = arith.constant 0 : i32
    %1 = arith.subi %c0_i32, %0 : i32
    %2 = arith.muli %arg0, %1 : i32
    %3 = arith.addi %arg1, %2 : i32
    %c0_i32_0 = arith.constant 0 : i32
    %c0_i32_1 = arith.constant 0 : i32
    %c0_i32_2 = arith.constant 0 : i32
    return %arg0, %3, %c0_i32_0, %c0_i32_1 : i32, i32, i32, i32
  }
  func.func @transform_1(%arg0: i32, %arg1: i32) -> (i32, i32) {
    %c0_i32 = arith.constant 0 : i32
    %c0_i32_0 = arith.constant 0 : i32
    %c0_i32_1 = arith.constant 0 : i32
    return %c0_i32, %c0_i32_0 : i32, i32
  }
  func.func @transform_2(%arg0: i32, %arg1: i32) -> (i32, i32, i32) {
    %c0_i32 = arith.constant 0 : i32
    %c0_i32_0 = arith.constant 0 : i32
    %c0_i32_1 = arith.constant 0 : i32
    return %arg0, %c0_i32, %c0_i32_0 : i32, i32, i32
  }
  func.func @transform_3(%arg0: i32, %arg1: i32) -> (i32, i32, i32, i32) {
    %c2_i32 = arith.constant 2 : i32
    %0 = arith.muli %c2_i32, %arg1 : i32
    %c0_i32 = arith.constant 0 : i32
    %1 = arith.subi %c0_i32, %0 : i32
    %2 = arith.muli %arg0, %1 : i32
    %3 = arith.addi %arg1, %2 : i32
    %c0_i32_0 = arith.constant 0 : i32
    %c0_i32_1 = arith.constant 0 : i32
    %c0_i32_2 = arith.constant 0 : i32
    return %arg0, %3, %c0_i32_0, %c0_i32_1 : i32, i32, i32, i32
  }
  func.func @transform_4(%arg0: i32, %arg1: i32) -> (i32, i32, i32) {
    %c0_i32 = arith.constant 0 : i32
    %c0_i32_0 = arith.constant 0 : i32
    %c0_i32_1 = arith.constant 0 : i32
    return %arg0, %c0_i32, %c0_i32_0 : i32, i32, i32
  }
}

</mosaic_0001>

<llo_original>
// kernel: rnn_forward.4
$region0: #{rnn_forward.4}
  #allocation0 [shape = 'u32[]', space=smem, size = 0x4, offset = 0x4, fixed_abs, tag = 'smem constant byte address 0x4 - core index']
  #allocation1 [shape = 'u32[144,128]{1,0:T(1,128)}', space=vmem, size = 0x12000, scoped, tag = 'internal scratch']
  %s0 = inlined_call_operand.vmem [shape: f32[64,32], index: 0, kind: input, shape index: {}]
  %s1 = inlined_call_operand.vmem [shape: bf16[32,256], index: 1, kind: input, shape index: {}]
  %s2 = inlined_call_operand.vmem [shape: f32[1,256], index: 2, kind: input, shape index: {}]
  %s3 = inlined_call_operand.vmem [shape: bf16[2,64,128], index: 3, kind: output, shape index: {}]
  %s4 = sld [smem:[#allocation0]]
  $region22: #{rnn_forward.4} parent=0
    _
  %s6 = ssub.s32 1, %s4
  %s7 = scalar_select 0, %s6, %s4
  // Predicated region
  $region2: #{rnn_forward.4} parent=0 // pred_check
    _
  $region3: #{rnn_forward.4} parent=0 // pred_check_branch
    %9 = sbr.rel (0) target = $region5
  $region4: #{rnn_forward.4} parent=0 // pred_region
    _
  $region5: #{rnn_forward.4} parent=0 // pred_fallthru
    _
  // Predicated region
  $region6: #{rnn_forward.4} parent=0 // pred_check
    _
  $region7: #{rnn_forward.4} parent=0 // pred_check_branch
    %11 = sbr.rel (0) target = $region9
  $region8: #{rnn_forward.4} parent=0 // pred_region
    _
  $region9: #{rnn_forward.4} parent=0 // pred_fallthru
    _
  // Predicated region
  $region10: #{rnn_forward.4} parent=0 // pred_check
    _
  $region11: #{rnn_forward.4} parent=0 // pred_check_branch
    %13 = sbr.rel (0) target = $region13
  $region12: #{rnn_forward.4} parent=0 // pred_region
    _
  $region13: #{rnn_forward.4} parent=0 // pred_fallthru
    _
  %v15 = vld [vmem:[%s0] sm:$0xff]
  %v16 = vld [vmem:[%s0 + $0x8] sm:$0xff]
  %v17 = vld [vmem:[%s0 + $0x10] sm:$0xff]
  %v18 = vld [vmem:[%s0 + $0x18] sm:$0xff]
  %v19 = vld [vmem:[%s0 + $0x20] sm:$0xff]
  %v20 = vld [vmem:[%s0 + $0x28] sm:$0xff]
  %v21 = vld [vmem:[%s0 + $0x30] sm:$0xff]
  %v22 = vld [vmem:[%s0 + $0x38] sm:$0xff]
  %v23 = vpack.c.bf16 %v16, %v15
  %v24 = vpack.c.bf16 %v18, %v17
  %v25 = vpack.c.bf16 %v20, %v19
  %v26 = vpack.c.bf16 %v22, %v21
  %v27 = vld [vmem:[%s1] sm:$0xff]
  %v28 = vld [vmem:[%s1 + $0x8] sm:$0xff]
  %v29 = vld [vmem:[%s1 + $0x10] sm:$0xff]
  %v30 = vld [vmem:[%s1 + $0x18] sm:$0xff]
  %v31 = vld [vmem:[%s2] sm:$0x3]
  %v33 = vlaneseq
  %v34 = vshrl.u32 %v33, 7
  %v35 = vsub.s32 0, %v34
  %v36 = vrot.slane %v31, %v35
  %v37 = vlaneseq
  %v38 = vshrl.u32 %v37, 7
  %v39 = vsub.s32 1, %v38
  %v40 = vrot.slane %v31, %v39
  %v47 = vunpack.c.l.b16 %v27
  %v48 = vunpack.c.h.b16 %v27
  %v49 = vunpack.c.l.b16 %v28
  %v50 = vunpack.c.h.b16 %v28
  %v51 = vunpack.c.l.b16 %v29
  %v52 = vunpack.c.h.b16 %v29
  %v53 = vunpack.c.l.b16 %v30
  %v54 = vunpack.c.h.b16 %v30
  %v55 = vpack.c.b16 %v49, %v47
  %v56 = vpack.c.b16 %v50, %v48
  %v57 = vpack.c.b16 %v53, %v51
  %v58 = vpack.c.b16 %v54, %v52
  %vm63 = vcmask 261120
  %v65 = vsel %vm63, %v23, 0
  %v68 = vsel %vm63, %v24, 0
  %v71 = vsel %vm63, %v25, 0
  %v74 = vsel %vm63, %v26, 0
  %76 = vmatprep.subr.bf16.mxu0 %v56
  %77 = vmatpush1.bf16.msra.mxu0 %v55
  %78 = vmatprep.subr.bf16.mxu0 %v58
  %79 = vmatpush1.bf16.msra.mxu0 %v57
  %80 = vmatprep.subr.bf16.mxu0 0
  %81 = vmatpush1.bf16.msra.mxu0 0
  %82 = vmatprep.subr.bf16.mxu0 0
  %83 = vmatpush1.bf16.msra.mxu0 0
  %84 = vmatprep.subr.bf16.mxu0 0
  %85 = vmatpush1.bf16.msra.mxu0 0
  %86 = vmatprep.subr.bf16.mxu0 0
  %87 = vmatpush1.bf16.msra.mxu0 0
  %88 = vmatprep.subr.bf16.mxu0 0
  %89 = vmatpush1.bf16.msra.mxu0 0
  %90 = vmatprep.subr.bf16.mxu0 0
  %91 = vmatpush1.bf16.msra.mxu0 0
  %92 = vmatprep.subr.bf16.mxu0 0
  %93 = vmatpush1.bf16.msra.mxu0 0
  %94 = vmatprep.subr.bf16.mxu0 0
  %95 = vmatpush1.bf16.msra.mxu0 0
  %96 = vmatprep.subr.bf16.mxu0 0
  %97 = vmatpush1.bf16.msra.mxu0 0
  %98 = vmatprep.subr.bf16.mxu0 0
  %99 = vmatpush1.bf16.msra.mxu0 0
  %100 = vmatprep.subr.bf16.mxu0 0
  %101 = vmatpush1.bf16.msra.mxu0 0
  %102 = vmatprep.subr.bf16.mxu0 0
  %103 = vmatpush1.bf16.msra.mxu0 0
  %104 = vmatprep.subr.bf16.mxu0 0
  %105 = vmatpush1.bf16.msra.mxu0 0
  %106 = vmatprep.subr.bf16.mxu0 0
  %107 = vmatpush1.bf16.msra.mxu0 0
  %108 = vmatprep.mubr.bf16.mxu0 0
  %109 = vmatmul.mubr.bf16.gmra.mrb[0].mxu0 %v65
  %v110 = vpop.f32.mrb[0].mxu0
  %v111 = vadd.f32 %v36, %v110
  %v112 = vpop.f32.mrb[0].mxu0
  %v113 = vadd.f32 %v40, %v112
  %v114 = vpop.f32.mrb[0].mxu0
  %v115 = vadd.f32 %v36, %v114
  %v116 = vpop.f32.mrb[0].mxu0
  %v117 = vadd.f32 %v40, %v116
  %118 = vmatprep.mubr.bf16.mxu0 0
  %119 = vmatmul.mubr.bf16.gmra.mrb[0].mxu0 %v68
  %v120 = vpop.f32.mrb[0].mxu0
  %v121 = vadd.f32 %v36, %v120
  %v122 = vpop.f32.mrb[0].mxu0
  %v123 = vadd.f32 %v40, %v122
  %v124 = vpop.f32.mrb[0].mxu0
  %v125 = vadd.f32 %v36, %v124
  %v126 = vpop.f32.mrb[0].mxu0
  %v127 = vadd.f32 %v40, %v126
  %128 = vmatprep.mubr.bf16.mxu0 0
  %129 = vmatmul.mubr.bf16.gmra.mrb[0].mxu0 %v71
  %v130 = vpop.f32.mrb[0].mxu0
  %v131 = vadd.f32 %v36, %v130
  %v132 = vpop.f32.mrb[0].mxu0
  %v133 = vadd.f32 %v40, %v132
  %v134 = vpop.f32.mrb[0].mxu0
  %v135 = vadd.f32 %v36, %v134
  %v136 = vpop.f32.mrb[0].mxu0
  %v137 = vadd.f32 %v40, %v136
  %138 = vmatprep.mubr.bf16.mxu0 0
  %139 = vmatmul.mubr.bf16.gmra.mrb[0].mxu0 %v74
  %v140 = vpop.f32.mrb[0].mxu0
  %v141 = vadd.f32 %v36, %v140
  %v142 = vpop.f32.mrb[0].mxu0
  %v143 = vadd.f32 %v40, %v142
  %v144 = vpop.f32.mrb[0].mxu0
  %v145 = vadd.f32 %v36, %v144
  %v146 = vpop.f32.mrb[0].mxu0
  %v147 = vadd.f32 %v40, %v146
  %148 = vdwg.mxu0
  %v149 = vpack.c.bf16 %v115, %v111
  %v150 = vpack.c.bf16 %v117, %v113
  %v151 = vpack.c.bf16 %v125, %v121
  %v152 = vpack.c.bf16 %v127, %v123
  %v153 = vpack.c.bf16 %v135, %v131
  %v154 = vpack.c.bf16 %v137, %v133
  %v155 = vpack.c.bf16 %v145, %v141
  %v156 = vpack.c.bf16 %v147, %v143
  %v161 = vunpack.c.l.b16 %v149
  %v162 = vunpack.c.h.b16 %v149
  %v163 = vunpack.c.l.b16 %v151
  %v164 = vunpack.c.h.b16 %v151
  %v165 = vunpack.c.l.b16 %v153
  %v166 = vunpack.c.h.b16 %v153
  %v167 = vunpack.c.l.b16 %v155
  %v168 = vunpack.c.h.b16 %v155
  %v169 = vpack.c.b16 %v161, %v161
  %v170 = vpack.c.b16 %v162, %v162
  %v171 = vpack.c.b16 %v163, %v163
  %v172 = vpack.c.b16 %v164, %v164
  %v173 = vpack.c.b16 %v165, %v165
  %v174 = vpack.c.b16 %v166, %v166
  %v175 = vpack.c.b16 %v167, %v167
  %v176 = vpack.c.b16 %v168, %v168
  %185 = vst [vmem:[%s3] sm:$0xf] %v169
  %186 = vst [vmem:[%s3 + $0x4] sm:$0xf] %v170
  %187 = vst [vmem:[%s3 + $0x8] sm:$0xf] %v171
  %188 = vst [vmem:[%s3 + $0xc] sm:$0xf] %v172
  %189 = vst [vmem:[%s3 + $0x10] sm:$0xf] %v173
  %190 = vst [vmem:[%s3 + $0x14] sm:$0xf] %v174
  %191 = vst [vmem:[%s3 + $0x18] sm:$0xf] %v175
  %192 = vst [vmem:[%s3 + $0x1c] sm:$0xf] %v176
  %v197 = vunpack.c.l.b16 %v150
  %v198 = vunpack.c.h.b16 %v150
  %v199 = vunpack.c.l.b16 %v152
  %v200 = vunpack.c.h.b16 %v152
  %v201 = vunpack.c.l.b16 %v154
  %v202 = vunpack.c.h.b16 %v154
  %v203 = vunpack.c.l.b16 %v156
  %v204 = vunpack.c.h.b16 %v156
  %v205 = vpack.c.b16 %v197, %v197
  %v206 = vpack.c.b16 %v198, %v198
  %v207 = vpack.c.b16 %v199, %v199
  %v208 = vpack.c.b16 %v200, %v200
  %v209 = vpack.c.b16 %v201, %v201
  %v210 = vpack.c.b16 %v202, %v202
  %v211 = vpack.c.b16 %v203, %v203
  %v212 = vpack.c.b16 %v204, %v204
  %s221 = scalar_lea.vmem %s3, 32
  %222 = vst [vmem:[%s221] sm:$0xf] %v205
  %223 = vst [vmem:[%s221 + $0x4] sm:$0xf] %v206
  %224 = vst [vmem:[%s221 + $0x8] sm:$0xf] %v207
  %225 = vst [vmem:[%s221 + $0xc] sm:$0xf] %v208
  %226 = vst [vmem:[%s221 + $0x10] sm:$0xf] %v209
  %227 = vst [vmem:[%s221 + $0x14] sm:$0xf] %v210
  %228 = vst [vmem:[%s221 + $0x18] sm:$0xf] %v211
  %229 = vst [vmem:[%s221 + $0x1c] sm:$0xf] %v212
  // Predicated region
  $region14: #{rnn_forward.4} parent=0 // pred_check
    _
  $region15: #{rnn_forward.4} parent=0 // pred_check_branch
    %231 = sbr.rel (0) target = $region17
  $region16: #{rnn_forward.4} parent=0 // pred_region
    _
  $region17: #{rnn_forward.4} parent=0 // pred_fallthru
    _
  // Predicated region
  $region18: #{rnn_forward.4} parent=0 // pred_check
    _
  $region19: #{rnn_forward.4} parent=0 // pred_check_branch
    %233 = sbr.rel (0) target = $region21
  $region20: #{rnn_forward.4} parent=0 // pred_region
    _
  $region21: #{rnn_forward.4} parent=0 // pred_fallthru
    _

// kernel: rnn_forward.6
$region0: #{rnn_forward.6}
  #allocation0 [shape = 'u32[]', space=smem, size = 0x4, offset = 0x4, fixed_abs, tag = 'smem constant byte address 0x4 - core index']
  #allocation1 [shape = 'u32[144,128]{1,0:T(1,128)}', space=vmem, size = 0x12000, scoped, tag = 'internal scratch']
  %s0 = inlined_call_operand.vmem [shape: bf16[64,32], index: 0, kind: input, shape index: {}]
  %s1 = inlined_call_operand.vmem [shape: bf16[64,32], index: 1, kind: input, shape index: {}]
  %s2 = inlined_call_operand.vmem [shape: bf16[32,256], index: 2, kind: input, shape index: {}]
  %s3 = inlined_call_operand.vmem [shape: bf16[32,256], index: 3, kind: input, shape index: {}]
  %s4 = inlined_call_operand.vmem [shape: f32[1,256], index: 4, kind: input, shape index: {}]
  %s5 = inlined_call_operand.vmem [shape: bf16[2,64,128], index: 5, kind: output, shape index: {}]
  %s6 = sld [smem:[#allocation0]]
  $region30: #{rnn_forward.6} parent=0
    _
  %s8 = ssub.s32 1, %s6
  %s9 = scalar_select 0, %s8, %s6
  // Predicated region
  $region2: #{rnn_forward.6} parent=0 // pred_check
    _
  $region3: #{rnn_forward.6} parent=0 // pred_check_branch
    %11 = sbr.rel (0) target = $region5
  $region4: #{rnn_forward.6} parent=0 // pred_region
    _
  $region5: #{rnn_forward.6} parent=0 // pred_fallthru
    _
  // Predicated region
  $region6: #{rnn_forward.6} parent=0 // pred_check
    _
  $region7: #{rnn_forward.6} parent=0 // pred_check_branch
    %13 = sbr.rel (0) target = $region9
  $region8: #{rnn_forward.6} parent=0 // pred_region
    _
  $region9: #{rnn_forward.6} parent=0 // pred_fallthru
    _
  // Predicated region
  $region10: #{rnn_forward.6} parent=0 // pred_check
    _
  $region11: #{rnn_forward.6} parent=0 // pred_check_branch
    %15 = sbr.rel (0) target = $region13
  $region12: #{rnn_forward.6} parent=0 // pred_region
    _
  $region13: #{rnn_forward.6} parent=0 // pred_fallthru
    _
  // Predicated region
  $region14: #{rnn_forward.6} parent=0 // pred_check
    _
  $region15: #{rnn_forward.6} parent=0 // pred_check_branch
    %17 = sbr.rel (0) target = $region17
  $region16: #{rnn_forward.6} parent=0 // pred_region
    _
  $region17: #{rnn_forward.6} parent=0 // pred_fallthru
    _
  // Predicated region
  $region18: #{rnn_forward.6} parent=0 // pred_check
    _
  $region19: #{rnn_forward.6} parent=0 // pred_check_branch
    %19 = sbr.rel (0) target = $region21
  $region20: #{rnn_forward.6} parent=0 // pred_region
    _
  $region21: #{rnn_forward.6} parent=0 // pred_fallthru
    _
  %v21 = vld [vmem:[%s0] sm:$0xf]
  %v22 = vld [vmem:[%s0 + $0x4] sm:$0xf]
  %v23 = vld [vmem:[%s0 + $0x8] sm:$0xf]
  %v24 = vld [vmem:[%s0 + $0xc] sm:$0xf]
  %v25 = vld [vmem:[%s0 + $0x10] sm:$0xf]
  %v26 = vld [vmem:[%s0 + $0x14] sm:$0xf]
  %v27 = vld [vmem:[%s0 + $0x18] sm:$0xf]
  %v28 = vld [vmem:[%s0 + $0x1c] sm:$0xf]
  %v29 = vld [vmem:[%s2] sm:$0xff]
  %v30 = vld [vmem:[%s2 + $0x8] sm:$0xff]
  %v31 = vld [vmem:[%s2 + $0x10] sm:$0xff]
  %v32 = vld [vmem:[%s2 + $0x18] sm:$0xff]
  %v33 = vld [vmem:[%s1] sm:$0xf]
  %v34 = vld [vmem:[%s1 + $0x4] sm:$0xf]
  %v35 = vld [vmem:[%s1 + $0x8] sm:$0xf]
  %v36 = vld [vmem:[%s1 + $0xc] sm:$0xf]
  %v37 = vld [vmem:[%s1 + $0x10] sm:$0xf]
  %v38 = vld [vmem:[%s1 + $0x14] sm:$0xf]
  %v39 = vld [vmem:[%s1 + $0x18] sm:$0xf]
  %v40 = vld [vmem:[%s1 + $0x1c] sm:$0xf]
  %v41 = vld [vmem:[%s3] sm:$0xff]
  %v42 = vld [vmem:[%s3 + $0x8] sm:$0xff]
  %v43 = vld [vmem:[%s3 + $0x10] sm:$0xff]
  %v44 = vld [vmem:[%s3 + $0x18] sm:$0xff]
  %v53 = vunpack.c.l.b16 %v33
  %v54 = vunpack.c.l.b16 %v34
  %v55 = vunpack.c.l.b16 %v35
  %v56 = vunpack.c.l.b16 %v36
  %v57 = vunpack.c.l.b16 %v37
  %v58 = vunpack.c.l.b16 %v38
  %v59 = vunpack.c.l.b16 %v39
  %v60 = vunpack.c.l.b16 %v40
  %v61 = vpack.c.b16 %v54, %v53
  %v62 = vpack.c.b16 %v56, %v55
  %v63 = vpack.c.b16 %v58, %v57
  %v64 = vpack.c.b16 %v60, %v59
  %v69 = vunpack.c.l.b16 %v41
  %v70 = vunpack.c.h.b16 %v41
  %v71 = vunpack.c.l.b16 %v42
  %v72 = vunpack.c.h.b16 %v42
  %v73 = vunpack.c.l.b16 %v43
  %v74 = vunpack.c.h.b16 %v43
  %v75 = vunpack.c.l.b16 %v44
  %v76 = vunpack.c.h.b16 %v44
  %v77 = vpack.c.b16 %v71, %v69
  %v78 = vpack.c.b16 %v72, %v70
  %v79 = vpack.c.b16 %v75, %v73
  %v80 = vpack.c.b16 %v76, %v74
  %vm85 = vcmask 261120
  %v87 = vsel %vm85, %v61, 0
  %v90 = vsel %vm85, %v62, 0
  %v93 = vsel %vm85, %v63, 0
  %v96 = vsel %vm85, %v64, 0
  %98 = vmatprep.subr.bf16.mxu0 %v78
  %99 = vmatpush1.bf16.msra.mxu0 %v77
  %100 = vmatprep.subr.bf16.mxu0 %v80
  %101 = vmatpush1.bf16.msra.mxu0 %v79
  %102 = vmatprep.subr.bf16.mxu0 0
  %103 = vmatpush1.bf16.msra.mxu0 0
  %104 = vmatprep.subr.bf16.mxu0 0
  %105 = vmatpush1.bf16.msra.mxu0 0
  %106 = vmatprep.subr.bf16.mxu0 0
  %107 = vmatpush1.bf16.msra.mxu0 0
  %108 = vmatprep.subr.bf16.mxu0 0
  %109 = vmatpush1.bf16.msra.mxu0 0
  %110 = vmatprep.subr.bf16.mxu0 0
  %111 = vmatpush1.bf16.msra.mxu0 0
  %112 = vmatprep.subr.bf16.mxu0 0
  %113 = vmatpush1.bf16.msra.mxu0 0
  %114 = vmatprep.subr.bf16.mxu0 0
  %115 = vmatpush1.bf16.msra.mxu0 0
  %116 = vmatprep.subr.bf16.mxu0 0
  %117 = vmatpush1.bf16.msra.mxu0 0
  %118 = vmatprep.subr.bf16.mxu0 0
  %119 = vmatpush1.bf16.msra.mxu0 0
  %120 = vmatprep.subr.bf16.mxu0 0
  %121 = vmatpush1.bf16.msra.mxu0 0
  %122 = vmatprep.subr.bf16.mxu0 0
  %123 = vmatpush1.bf16.msra.mxu0 0
  %124 = vmatprep.subr.bf16.mxu0 0
  %125 = vmatpush1.bf16.msra.mxu0 0
  %126 = vmatprep.subr.bf16.mxu0 0
  %127 = vmatpush1.bf16.msra.mxu0 0
  %128 = vmatprep.subr.bf16.mxu0 0
  %129 = vmatpush1.bf16.msra.mxu0 0
  %130 = vmatprep.mubr.bf16.mxu0 0
  %131 = vmatmul.mubr.bf16.gmra.mrb[0].mxu0 %v87
  %v132 = vpop.f32.mrb[0].mxu0
  %v133 = vadd.f32 0.0, %v132
  %v134 = vpop.f32.mrb[0].mxu0
  %v135 = vadd.f32 0.0, %v134
  %v136 = vpop.f32.mrb[0].mxu0
  %v137 = vadd.f32 0.0, %v136
  %v138 = vpop.f32.mrb[0].mxu0
  %v139 = vadd.f32 0.0, %v138
  %140 = vmatprep.mubr.bf16.mxu0 0
  %141 = vmatmul.mubr.bf16.gmra.mrb[0].mxu0 %v90
  %v142 = vpop.f32.mrb[0].mxu0
  %v143 = vadd.f32 0.0, %v142
  %v144 = vpop.f32.mrb[0].mxu0
  %v145 = vadd.f32 0.0, %v144
  %v146 = vpop.f32.mrb[0].mxu0
  %v147 = vadd.f32 0.0, %v146
  %v148 = vpop.f32.mrb[0].mxu0
  %v149 = vadd.f32 0.0, %v148
  %150 = vmatprep.mubr.bf16.mxu0 0
  %151 = vmatmul.mubr.bf16.gmra.mrb[0].mxu0 %v93
  %v152 = vpop.f32.mrb[0].mxu0
  %v153 = vadd.f32 0.0, %v152
  %v154 = vpop.f32.mrb[0].mxu0
  %v155 = vadd.f32 0.0, %v154
  %v156 = vpop.f32.mrb[0].mxu0
  %v157 = vadd.f32 0.0, %v156
  %v158 = vpop.f32.mrb[0].mxu0
  %v159 = vadd.f32 0.0, %v158
  %160 = vmatprep.mubr.bf16.mxu0 0
  %161 = vmatmul.mubr.bf16.gmra.mrb[0].mxu0 %v96
  %v162 = vpop.f32.mrb[0].mxu0
  %v163 = vadd.f32 0.0, %v162
  %v164 = vpop.f32.mrb[0].mxu0
  %v165 = vadd.f32 0.0, %v164
  %v166 = vpop.f32.mrb[0].mxu0
  %v167 = vadd.f32 0.0, %v166
  %v168 = vpop.f32.mrb[0].mxu0
  %v169 = vadd.f32 0.0, %v168
  %170 = vdwg.mxu0
  %v179 = vunpack.c.l.b16 %v21
  %v180 = vunpack.c.l.b16 %v22
  %v181 = vunpack.c.l.b16 %v23
  %v182 = vunpack.c.l.b16 %v24
  %v183 = vunpack.c.l.b16 %v25
  %v184 = vunpack.c.l.b16 %v26
  %v185 = vunpack.c.l.b16 %v27
  %v186 = vunpack.c.l.b16 %v28
  %v187 = vpack.c.b16 %v180, %v179
  %v188 = vpack.c.b16 %v182, %v181
  %v189 = vpack.c.b16 %v184, %v183
  %v190 = vpack.c.b16 %v186, %v185
  %v195 = vunpack.c.l.b16 %v29
  %v196 = vunpack.c.h.b16 %v29
  %v197 = vunpack.c.l.b16 %v30
  %v198 = vunpack.c.h.b16 %v30
  %v199 = vunpack.c.l.b16 %v31
  %v200 = vunpack.c.h.b16 %v31
  %v201 = vunpack.c.l.b16 %v32
  %v202 = vunpack.c.h.b16 %v32
  %v203 = vpack.c.b16 %v197, %v195
  %v204 = vpack.c.b16 %v198, %v196
  %v205 = vpack.c.b16 %v201, %v199
  %v206 = vpack.c.b16 %v202, %v200
  %v212 = vsel %vm85, %v187, 0
  %v215 = vsel %vm85, %v188, 0
  %v218 = vsel %vm85, %v189, 0
  %v221 = vsel %vm85, %v190, 0
  %223 = vmatprep.subr.bf16.mxu0 %v204
  %224 = vmatpush1.bf16.msra.mxu0 %v203
  %225 = vmatprep.subr.bf16.mxu0 %v206
  %226 = vmatpush1.bf16.msra.mxu0 %v205
  %227 = vmatprep.subr.bf16.mxu0 0
  %228 = vmatpush1.bf16.msra.mxu0 0
  %229 = vmatprep.subr.bf16.mxu0 0
  %230 = vmatpush1.bf16.msra.mxu0 0
  %231 = vmatprep.subr.bf16.mxu0 0
  %232 = vmatpush1.bf16.msra.mxu0 0
  %233 = vmatprep.subr.bf16.mxu0 0
  %234 = vmatpush1.bf16.msra.mxu0 0
  %235 = vmatprep.subr.bf16.mxu0 0
  %236 = vmatpush1.bf16.msra.mxu0 0
  %237 = vmatprep.subr.bf16.mxu0 0
  %238 = vmatpush1.bf16.msra.mxu0 0
  %239 = vmatprep.subr.bf16.mxu0 0
  %240 = vmatpush1.bf16.msra.mxu0 0
  %241 = vmatprep.subr.bf16.mxu0 0
  %242 = vmatpush1.bf16.msra.mxu0 0
  %243 = vmatprep.subr.bf16.mxu0 0
  %244 = vmatpush1.bf16.msra.mxu0 0
  %245 = vmatprep.subr.bf16.mxu0 0
  %246 = vmatpush1.bf16.msra.mxu0 0
  %247 = vmatprep.subr.bf16.mxu0 0
  %248 = vmatpush1.bf16.msra.mxu0 0
  %249 = vmatprep.subr.bf16.mxu0 0
  %250 = vmatpush1.bf16.msra.mxu0 0
  %251 = vmatprep.subr.bf16.mxu0 0
  %252 = vmatpush1.bf16.msra.mxu0 0
  %253 = vmatprep.subr.bf16.mxu0 0
  %254 = vmatpush1.bf16.msra.mxu0 0
  %255 = vmatprep.mubr.bf16.mxu0 0
  %256 = vmatmul.mubr.bf16.gmra.mrb[0].mxu0 %v212
  %v257 = vpop.f32.mrb[0].mxu0
  %v258 = vadd.f32 %v133, %v257
  %v259 = vpop.f32.mrb[0].mxu0
  %v260 = vadd.f32 %v135, %v259
  %v261 = vpop.f32.mrb[0].mxu0
  %v262 = vadd.f32 %v137, %v261
  %v263 = vpop.f32.mrb[0].mxu0
  %v264 = vadd.f32 %v139, %v263
  %265 = vmatprep.mubr.bf16.mxu0 0
  %266 = vmatmul.mubr.bf16.gmra.mrb[0].mxu0 %v215
  %v267 = vpop.f32.mrb[0].mxu0
  %v268 = vadd.f32 %v143, %v267
  %v269 = vpop.f32.mrb[0].mxu0
  %v270 = vadd.f32 %v145, %v269
  %v271 = vpop.f32.mrb[0].mxu0
  %v272 = vadd.f32 %v147, %v271
  %v273 = vpop.f32.mrb[0].mxu0
  %v274 = vadd.f32 %v149, %v273
  %275 = vmatprep.mubr.bf16.mxu0 0
  %276 = vmatmul.mubr.bf16.gmra.mrb[0].mxu0 %v218
  %v277 = vpop.f32.mrb[0].mxu0
  %v278 = vadd.f32 %v153, %v277
  %v279 = vpop.f32.mrb[0].mxu0
  %v280 = vadd.f32 %v155, %v279
  %v281 = vpop.f32.mrb[0].mxu0
  %v282 = vadd.f32 %v157, %v281
  %v283 = vpop.f32.mrb[0].mxu0
  %v284 = vadd.f32 %v159, %v283
  %285 = vmatprep.mubr.bf16.mxu0 0
  %286 = vmatmul.mubr.bf16.gmra.mrb[0].mxu0 %v221
  %v287 = vpop.f32.mrb[0].mxu0
  %v288 = vadd.f32 %v163, %v287
  %v289 = vpop.f32.mrb[0].mxu0
  %v290 = vadd.f32 %v165, %v289
  %v291 = vpop.f32.mrb[0].mxu0
  %v292 = vadd.f32 %v167, %v291
  %v293 = vpop.f32.mrb[0].mxu0
  %v294 = vadd.f32 %v169, %v293
  %295 = vdwg.mxu0
  %v296 = vld [vmem:[%s4] sm:$0x3]
  %v298 = vlaneseq
  %v299 = vshrl.u32 %v298, 7
  %v300 = vsub.s32 0, %v299
  %v301 = vrot.slane %v296, %v300
  %v302 = vlaneseq
  %v303 = vshrl.u32 %v302, 7
  %v304 = vsub.s32 1, %v303
  %v305 = vrot.slane %v296, %v304
  %v308 = vadd.f32 %v258, %v301
  %v309 = vadd.f32 %v260, %v305
  %v310 = vadd.f32 %v262, %v301
  %v311 = vadd.f32 %v264, %v305
  %v312 = vadd.f32 %v268, %v301
  %v313 = vadd.f32 %v270, %v305
  %v314 = vadd.f32 %v272, %v301
  %v315 = vadd.f32 %v274, %v305
  %v316 = vadd.f32 %v278, %v301
  %v317 = vadd.f32 %v280, %v305
  %v318 = vadd.f32 %v282, %v301
  %v319 = vadd.f32 %v284, %v305
  %v320 = vadd.f32 %v288, %v301
  %v321 = vadd.f32 %v290, %v305
  %v322 = vadd.f32 %v292, %v301
  %v323 = vadd.f32 %v294, %v305
  %v324 = vpack.c.bf16 %v310, %v308
  %v325 = vpack.c.bf16 %v311, %v309
  %v326 = vpack.c.bf16 %v314, %v312
  %v327 = vpack.c.bf16 %v315, %v313
  %v328 = vpack.c.bf16 %v318, %v316
  %v329 = vpack.c.bf16 %v319, %v317
  %v330 = vpack.c.bf16 %v322, %v320
  %v331 = vpack.c.bf16 %v323, %v321
  %v336 = vunpack.c.l.b16 %v324
  %v337 = vunpack.c.h.b16 %v324
  %v338 = vunpack.c.l.b16 %v326
  %v339 = vunpack.c.h.b16 %v326
  %v340 = vunpack.c.l.b16 %v328
  %v341 = vunpack.c.h.b16 %v328
  %v342 = vunpack.c.l.b16 %v330
  %v343 = vunpack.c.h.b16 %v330
  %v344 = vpack.c.b16 %v336, %v336
  %v345 = vpack.c.b16 %v337, %v337
  %v346 = vpack.c.b16 %v338, %v338
  %v347 = vpack.c.b16 %v339, %v339
  %v348 = vpack.c.b16 %v340, %v340
  %v349 = vpack.c.b16 %v341, %v341
  %v350 = vpack.c.b16 %v342, %v342
  %v351 = vpack.c.b16 %v343, %v343
  %360 = vst [vmem:[%s5] sm:$0xf] %v344
  %361 = vst [vmem:[%s5 + $0x4] sm:$0xf] %v345
  %362 = vst [vmem:[%s5 + $0x8] sm:$0xf] %v346
  %363 = vst [vmem:[%s5 + $0xc] sm:$0xf] %v347
  %364 = vst [vmem:[%s5 + $0x10] sm:$0xf] %v348
  %365 = vst [vmem:[%s5 + $0x14] sm:$0xf] %v349
  %366 = vst [vmem:[%s5 + $0x18] sm:$0xf] %v350
  %367 = vst [vmem:[%s5 + $0x1c] sm:$0xf] %v351
  %v372 = vunpack.c.l.b16 %v325
  %v373 = vunpack.c.h.b16 %v325
  %v374 = vunpack.c.l.b16 %v327
  %v375 = vunpack.c.h.b16 %v327
  %v376 = vunpack.c.l.b16 %v329
  %v377 = vunpack.c.h.b16 %v329
  %v378 = vunpack.c.l.b16 %v331
  %v379 = vunpack.c.h.b16 %v331
  %v380 = vpack.c.b16 %v372, %v372
  %v381 = vpack.c.b16 %v373, %v373
  %v382 = vpack.c.b16 %v374, %v374
  %v383 = vpack.c.b16 %v375, %v375
  %v384 = vpack.c.b16 %v376, %v376
  %v385 = vpack.c.b16 %v377, %v377
  %v386 = vpack.c.b16 %v378, %v378
  %v387 = vpack.c.b16 %v379, %v379
  %s396 = scalar_lea.vmem %s5, 32
  %397 = vst [vmem:[%s396] sm:$0xf] %v380
  %398 = vst [vmem:[%s396 + $0x4] sm:$0xf] %v381
  %399 = vst [vmem:[%s396 + $0x8] sm:$0xf] %v382
  %400 = vst [vmem:[%s396 + $0xc] sm:$0xf] %v383
  %401 = vst [vmem:[%s396 + $0x10] sm:$0xf] %v384
  %402 = vst [vmem:[%s396 + $0x14] sm:$0xf] %v385
  %403 = vst [vmem:[%s396 + $0x18] sm:$0xf] %v386
  %404 = vst [vmem:[%s396 + $0x1c] sm:$0xf] %v387
  // Predicated region
  $region22: #{rnn_forward.6} parent=0 // pred_check
    _
  $region23: #{rnn_forward.6} parent=0 // pred_check_branch
    %406 = sbr.rel (0) target = $region25
  $region24: #{rnn_forward.6} parent=0 // pred_region
    _
  $region25: #{rnn_forward.6} parent=0 // pred_fallthru
    _
  // Predicated region
  $region26: #{rnn_forward.6} parent=0 // pred_check
    _
  $region27: #{rnn_forward.6} parent=0 // pred_check_branch
    %408 = sbr.rel (0) target = $region29
  $region28: #{rnn_forward.6} parent=0 // pred_region
    _
  $region29: #{rnn_forward.6} parent=0 // pred_fallthru
    _

// kernel: rnn_forward.5
$region0: #{rnn_forward.5}
  #allocation0 [shape = 'u32[]', space=smem, size = 0x4, offset = 0x4, fixed_abs, tag = 'smem constant byte address 0x4 - core index']
  #allocation1 [shape = 'u32[144,128]{1,0:T(1,128)}', space=vmem, size = 0x12000, scoped, tag = 'internal scratch']
  #allocation2 [shape = 'bf16[8,32]{1,0:T(8,128)(2,1)}', space=vmem, size = 0x800, scoped, tag = 'scratch operand']
  #allocation3 [shape = 'f32[8,32]{1,0:T(8,128)}', space=vmem, size = 0x1000, scoped, tag = 'scratch operand']
  %s0 = inlined_call_operand.vmem [shape: bf16[2,8,8,128], index: 0, kind: input, shape index: {}]
  %s1 = inlined_call_operand.vmem [shape: s32[8,1], index: 1, kind: input, shape index: {}]
  %s2 = inlined_call_operand.vmem [shape: bf16[2,32,128], index: 2, kind: input, shape index: {}]
  %s3 = inlined_call_operand.vmem [shape: bf16[2,8,8,32], index: 3, kind: output, shape index: {0}]
  %s4 = inlined_call_operand.hbm [shape: f32[2,8,32], index: 4, kind: output, shape index: {1}]
  %5 = xla_tuple %s3, %s4
  %s6 = sld [smem:[#allocation0]]
  $region61: #{rnn_forward.5} parent=0
    _
  %s8 = ssub.s32 1, %s6
  %s9 = scalar_select 0, %s8, %s6
  $region1: #{rnn_forward.5} parent=0
    #allocation4 [shape = 'u8[8192]{0}', space=vmem, size = 0x2000, scoped, tag = 'output window, operand 1']
    #allocation5 [shape = 's32[2]{0}', space=sflag, size = 0x8, scoped, tag = 'scoped memory for rnn_forward.5']
    %10 = vsyncpa [#allocation5], 0
    %s11 = scalar_lea.sflag [#allocation5], 1
    %12 = vsyncpa %s11, 0
    loop: start=0, step=1, limit=4
    $region2: #{rnn_forward.5} parent=1 // loop_pre_header
      _
    $region3: #{rnn_forward.5} parent=1 // loop_header
      %s14 = sphi 0, %s18
      %p15 = scmp.ge.s32.totalorder %s14, 4
      %s21 = sphi 0, %s33
      %s22 = sphi 0, %s29
      %s23 = sphi 0, %s21
      %s24 = sphi 0, %s22
      %s25 = sphi 0, %s23
      %s26 = sphi 0, %s24
      %s46 = sphi 0, %s48
      %s49 = sphi 0, %s46
      %s50 = sphi 0, %s49
      %s66 = sphi 0, %s50
      %s70 = sphi 0, %s70
      %s72 = sphi 0, %s70
      %s73 = sphi 0, %s72
      %s87 = sphi 0, %s73
      %s93 = sphi 0, %s95
      %s96 = sphi 0, %s93
      %s97 = sphi 0, %s96
      %s113 = sphi 0, %s97
      %s129 = sphi 0, %s131
      %s132 = sphi 0, %s129
      %s133 = sphi 0, %s132
      %s149 = sphi 0, %s133
      %s155 = sphi 0, %s157
      %s158 = sphi 0, %s155
      %s159 = sphi 0, %s158
      %s175 = sphi 0, %s159
    $region4: #{rnn_forward.5} parent=1 // loop_header_branch
      %17 = sbr.rel (%p15) target = $region8
    $region5: #{rnn_forward.5} parent=1 // loop_body
      %s19 = ssub.s32 %s14, 1
      %s20 = ssub.s32 %s14, 2
      %s27 = sadd.s32 1, %s22
      %p28 = scmp.ge.s32.totalorder %s27, 1
      %s29 = scalar_select %p28, 0, %s27
      %s30 = sadd.s32 1, %s21
      %s31 = scalar_select %p28, %s30, %s21
      %p32 = scmp.ge.s32.totalorder %s31, 2
      %s33 = scalar_select %p32, 0, %s31
      %s34 = smul.u32 %s22, 2
      %s35 = ssub.s32 0, %s34
      %s36 = smul.u32 %s21, %s35
      %s37 = sadd.s32 %s22, %s36
      %s38 = smul.u32 %s29, 2
      %s39 = ssub.s32 0, %s38
      %s40 = smul.u32 %s33, %s39
      %s41 = sadd.s32 %s29, %s40
      %s42 = ssub.s32 %s21, %s33
      %s43 = ssub.s32 %s37, %s41
      %s44 = sor.u32 %s42, %s43
      %p45 = scmp.eq.s32.totalorder %s44, 0
      %s47 = sadd.s32 %s46, 1
      %s48 = scalar_select %p45, %s46, %s47
      %p51 = pneg %p45
      %p52 = scmp.eq.s32.totalorder %s14, 1
      %p53 = por %p51, %p52
      %p54 = scmp.ne.s32.totalorder %s46, %s49
      %p55 = scmp.eq.s32.totalorder %s14, 0
      %p56 = por %p54, %p55
      %p57 = scmp.ne.s32.totalorder %s46, %s49
      %p58 = scmp.eq.s32.totalorder %s19, 1
      %p59 = por %p57, %p58
      %p60 = scmp.ne.s32.totalorder %s49, %s50
      %p61 = scmp.eq.s32.totalorder %s19, 0
      %p62 = por %p60, %p61
      %p63 = scmp.ne.s32.totalorder %s49, %s50
      %p64 = scmp.eq.s32.totalorder %s20, 1
      %p65 = por %p63, %p64
      %p67 = scmp.ne.s32.totalorder %s50, %s66
      %p68 = scmp.eq.s32.totalorder %s20, 0
      %p69 = por %p67, %p68
      %s71 = sadd.s32 %s70, 1
      %p74 = scmp.eq.s32.totalorder %s14, 1
      %p75 = scmp.ne.s32.totalorder %s70, %s72
      %p76 = scmp.eq.s32.totalorder %s14, 0
      %p77 = por %p75, %p76
      %p78 = scmp.ne.s32.totalorder %s70, %s72
      %p79 = scmp.eq.s32.totalorder %s19, 1
      %p80 = por %p78, %p79
      %p81 = scmp.ne.s32.totalorder %s72, %s73
      %p82 = scmp.eq.s32.totalorder %s19, 0
      %p83 = por %p81, %p82
      %p84 = scmp.ne.s32.totalorder %s72, %s73
      %p85 = scmp.eq.s32.totalorder %s20, 1
      %p86 = por %p84, %p85
      %p88 = scmp.ne.s32.totalorder %s73, %s87
      %p89 = scmp.eq.s32.totalorder %s20, 0
      %p90 = por %p88, %p89
      %s91 = ssub.s32 %s21, %s33
      %p92 = scmp.eq.s32.totalorder %s91, 0
      %s94 = sadd.s32 %s93, 1
      %s95 = scalar_select %p92, %s93, %s94
      %p98 = pneg %p92
      %p99 = scmp.eq.s32.totalorder %s14, 1
      %p100 = por %p98, %p99
      %p101 = scmp.ne.s32.totalorder %s93, %s96
      %p102 = scmp.eq.s32.totalorder %s14, 0
      %p103 = por %p101, %p102
      %p104 = scmp.ne.s32.totalorder %s93, %s96
      %p105 = scmp.eq.s32.totalorder %s19, 1
      %p106 = por %p104, %p105
      %p107 = scmp.ne.s32.totalorder %s96, %s97
      %p108 = scmp.eq.s32.totalorder %s19, 0
      %p109 = por %p107, %p108
      %p110 = scmp.ne.s32.totalorder %s96, %s97
      %p111 = scmp.eq.s32.totalorder %s20, 1
      %p112 = por %p110, %p111
      %p114 = scmp.ne.s32.totalorder %s97, %s113
      %p115 = scmp.eq.s32.totalorder %s20, 0
      %p116 = por %p114, %p115
      %s117 = smul.u32 %s22, 2
      %s118 = ssub.s32 0, %s117
      %s119 = smul.u32 %s21, %s118
      %s120 = sadd.s32 %s22, %s119
      %s121 = smul.u32 %s29, 2
      %s122 = ssub.s32 0, %s121
      %s123 = smul.u32 %s33, %s122
      %s124 = sadd.s32 %s29, %s123
      %s125 = ssub.s32 %s21, %s33
      %s126 = ssub.s32 %s120, %s124
      %s127 = sor.u32 %s125, %s126
      %p128 = scmp.eq.s32.totalorder %s127, 0
      %s130 = sadd.s32 %s129, 1
      %s131 = scalar_select %p128, %s129, %s130
      %p134 = pneg %p128
      %p135 = scmp.eq.s32.totalorder %s14, 1
      %p136 = por %p134, %p135
      %p137 = scmp.ne.s32.totalorder %s129, %s132
      %p138 = scmp.eq.s32.totalorder %s14, 0
      %p139 = por %p137, %p138
      %p140 = scmp.ne.s32.totalorder %s129, %s132
      %p141 = scmp.eq.s32.totalorder %s19, 1
      %p142 = por %p140, %p141
      %p143 = scmp.ne.s32.totalorder %s132, %s133
      %p144 = scmp.eq.s32.totalorder %s19, 0
      %p145 = por %p143, %p144
      %p146 = scmp.ne.s32.totalorder %s132, %s133
      %p147 = scmp.eq.s32.totalorder %s20, 1
      %p148 = por %p146, %p147
      %p150 = scmp.ne.s32.totalorder %s133, %s149
      %p151 = scmp.eq.s32.totalorder %s20, 0
      %p152 = por %p150, %p151
      %s153 = ssub.s32 %s21, %s33
      %p154 = scmp.eq.s32.totalorder %s153, 0
      %s156 = sadd.s32 %s155, 1
      %s157 = scalar_select %p154, %s155, %s156
      %p160 = pneg %p154
      %p161 = scmp.eq.s32.totalorder %s14, 1
      %p162 = por %p160, %p161
      %p163 = scmp.ne.s32.totalorder %s155, %s158
      %p164 = scmp.eq.s32.totalorder %s14, 0
      %p165 = por %p163, %p164
      %p166 = scmp.ne.s32.totalorder %s155, %s158
      %p167 = scmp.eq.s32.totalorder %s19, 1
      %p168 = por %p166, %p167
      %p169 = scmp.ne.s32.totalorder %s158, %s159
      %p170 = scmp.eq.s32.totalorder %s19, 0
      %p171 = por %p169, %p170
      %p172 = scmp.ne.s32.totalorder %s158, %s159
      %p173 = scmp.eq.s32.totalorder %s20, 1
      %p174 = por %p172, %p173
      %p176 = scmp.ne.s32.totalorder %s159, %s175
      %p177 = scmp.eq.s32.totalorder %s20, 0
      %p178 = por %p176, %p177
      %p179 = scmp.le.s32.totalorder 1, %s14
      %p180 = scmp.lt.s32.totalorder %s14, 3
      %p181 = pnand %p179, %p180
      %p182 = pneg %p181
      // Predicated region
      $region9: #{rnn_forward.5} parent=5 // pred_check
        _
      $region10: #{rnn_forward.5} parent=5 // pred_check_branch
        %184 = sbr.rel (%p181) target = $region12
      $region11: #{rnn_forward.5} parent=5 // pred_region
        %s185 = ssub.s32 %s14, 1
        // Predicated region
        $region13: #{rnn_forward.5} parent=11 // pred_check
          %p186 = pneg %p83
        $region14: #{rnn_forward.5} parent=11 // pred_check_branch
          %188 = sbr.rel (%p186) target = $region16
        $region15: #{rnn_forward.5} parent=11 // pred_region
          _
        $region16: #{rnn_forward.5} parent=11 // pred_fallthru
          _
      $region12: #{rnn_forward.5} parent=5 // pred_fallthru
        _
      %p189 = scmp.lt.s32.totalorder %s14, 2
      // Predicated region
      $region17: #{rnn_forward.5} parent=5 // pred_check
        %p190 = pneg %p189
      $region18: #{rnn_forward.5} parent=5 // pred_check_branch
        %192 = sbr.rel (%p190) target = $region20
      $region19: #{rnn_forward.5} parent=5 // pred_region
        // Predicated region
        $region21: #{rnn_forward.5} parent=19 // pred_check
          %p193 = pneg %p56
        $region22: #{rnn_forward.5} parent=19 // pred_check_branch
          %195 = sbr.rel (%p193) target = $region24
        $region23: #{rnn_forward.5} parent=19 // pred_region
          %s196 = smul.u32 %s22, 2
          %s197 = ssub.s32 0, %s196
          %s198 = smul.u32 %s21, %s197
          %s199 = sadd.s32 %s22, %s198
          %s200 = smul.u32 8, %s199
          %p201 = scmp.lt.s32.totalorder %s21, 1
          %s202 = scalar_select %p201, %s21, 1
          %p203 = scmp.lt.s32.totalorder %s200, 7
          %s204 = scalar_select %p203, %s200, 7
          %s205 = smul.addr %s202, 8
          %s206 = sadd.s32 %s204, %s205
          %s207 = smul.addr %s206, 4
          %s208 = scalar_lea.vmem %s0, %s207
          %s209 = smul.u32 %s22, 2
          %s210 = ssub.s32 0, %s209
          %s211 = smul.u32 %s21, %s210
          %s212 = sadd.s32 %s22, %s211
          %s213 = smul.u32 8, %s212
        $region24: #{rnn_forward.5} parent=19 // pred_fallthru
          _
        // Predicated region
        $region25: #{rnn_forward.5} parent=19 // pred_check
          %p214 = pneg %p103
        $region26: #{rnn_forward.5} parent=19 // pred_check_branch
          %216 = sbr.rel (%p214) target = $region28
        $region27: #{rnn_forward.5} parent=19 // pred_region
          %p217 = scmp.lt.s32.totalorder %s21, 1
          %s218 = scalar_select %p217, %s21, 1
          %s219 = smul.addr %s218, 4
          %s220 = smul.addr %s219, 4
          %s221 = scalar_lea.vmem %s2, %s220
        $region28: #{rnn_forward.5} parent=19 // pred_fallthru
          _
      $region20: #{rnn_forward.5} parent=5 // pred_fallthru
        _
      %p222 = scmp.le.s32.totalorder 1, %s14
      %p223 = scmp.lt.s32.totalorder %s14, 3
      %p224 = pnand %p222, %p223
      %p225 = pneg %p224
      // Predicated region
      $region29: #{rnn_forward.5} parent=5 // pred_check
        _
      $region30: #{rnn_forward.5} parent=5 // pred_check_branch
        %227 = sbr.rel (%p224) target = $region32
      $region31: #{rnn_forward.5} parent=5 // pred_region
        %s228 = ssub.s32 %s14, 1
        %s229 = smul.u32 %s24, 2
        %s230 = ssub.s32 0, %s229
        %s231 = smul.u32 %s23, %s230
        %s232 = sadd.s32 %s24, %s231
        %s233 = smul.u32 8, %s232
        %p234 = scmp.lt.s32.totalorder %s23, 1
        %s235 = scalar_select %p234, %s23, 1
        %p236 = scmp.lt.s32.totalorder %s233, 7
        %s237 = scalar_select %p236, %s233, 7
        %s238 = smul.addr %s235, 8
        %s239 = sadd.s32 %s237, %s238
        %s240 = smul.addr %s239, 4
        %s241 = scalar_lea.vmem %s0, %s240
        %p242 = pneg %p62
        %p243 = pneg %p59
        %p244 = pneg %p83
        %p245 = pneg %p80
        %p246 = scmp.lt.s32.totalorder %s23, 1
        %s247 = scalar_select %p246, %s23, 1
        %s248 = smul.addr %s247, 4
        %s249 = smul.addr %s248, 4
        %s250 = scalar_lea.vmem %s2, %s249
        %p251 = pneg %p109
        %p252 = pneg %p106
        %p253 = pneg %p145
        %p254 = pneg %p142
        %s255 = smul.u32 %s24, 2
        %s256 = ssub.s32 0, %s255
        %s257 = smul.u32 %s23, %s256
        %s258 = sadd.s32 %s24, %s257
        %s259 = smul.u32 8, %s258
        %p260 = scmp.lt.s32.totalorder %s23, 1
        %s261 = scalar_select %p260, %s23, 1
        %p262 = scmp.lt.s32.totalorder %s259, 7
        %s263 = scalar_select %p262, %s259, 7
        %s264 = smul.addr %s261, 8
        %s265 = sadd.s32 %s263, %s264
        %s266 = smul.addr %s265, 4
        %s267 = scalar_lea.vmem %s3, %s266
        %p268 = pneg %p171
        %p269 = pneg %p168
        %s270 = sand.u32 %s158, 1
        %s271 = scalar_lea.sflag [#allocation5], %s270
        %s272 = sand.u32 %s158, 1
        %s273 = smul.addr %s272, 8
        %s274 = scalar_lea.vmem [#allocation4], %s273
        %s275 = smul.u32 %s24, 2
        %s276 = ssub.s32 0, %s275
        %s277 = smul.u32 %s23, %s276
        %s278 = sadd.s32 %s24, %s277
        %s279 = smul.u32 8, %s278
        %p280 = scmp.lt.s32.totalorder %s23, 1
        %s281 = scalar_select %p280, %s23, 1
        %p282 = scmp.lt.s32.totalorder %s279, 7
        %s283 = scalar_select %p282, %s279, 7
        %s284 = smul.addr %s281, 8
        %s285 = sadd.s32 %s283, %s284
        %s286 = smul.addr %s285, 4
        %s287 = scalar_lea.vmem %s0, %s286
        %s288 = smul.u32 %s24, 2
        %s289 = ssub.s32 0, %s288
        %s290 = smul.u32 %s23, %s289
        %s291 = sadd.s32 %s24, %s290
        %s292 = smul.u32 8, %s291
        %p293 = scmp.lt.s32.totalorder %s23, 1
        %s294 = scalar_select %p293, %s23, 1
        %s295 = smul.addr %s294, 4
        %s296 = smul.addr %s295, 4
        %s297 = scalar_lea.vmem %s2, %s296
        %s298 = smul.u32 %s24, 2
        %s299 = ssub.s32 0, %s298
        %s300 = smul.u32 %s23, %s299
        %s301 = sadd.s32 %s24, %s300
        %s302 = smul.u32 8, %s301
        %p303 = scmp.lt.s32.totalorder %s23, 1
        %s304 = scalar_select %p303, %s23, 1
        %p305 = scmp.lt.s32.totalorder %s302, 7
        %s306 = scalar_select %p305, %s302, 7
        %s307 = smul.addr %s304, 8
        %s308 = sadd.s32 %s306, %s307
        %s309 = smul.addr %s308, 4
        %s310 = scalar_lea.vmem %s3, %s309
        %s311 = smul.u32 %s24, 2
        %s312 = ssub.s32 0, %s311
        %s313 = smul.u32 %s23, %s312
        %s314 = sadd.s32 %s24, %s313
        %s315 = smul.u32 8, %s314
        %p317 = scmp.eq.s32.totalorder %s24, 0
        // Predicated region
        $region33: #{rnn_forward.5} parent=31 // pred_check
          %p318 = pneg %p317
        $region34: #{rnn_forward.5} parent=31 // pred_check_branch
          %320 = sbr.rel (%p318) target = $region36
        $region35: #{rnn_forward.5} parent=31 // pred_region
          %vm321 = vcmask 257024
          %322 = vst.msk [vmem:[#allocation2] sm:$0xf] %vm321, 0
          %vm323 = vcmask 261120
          %324 = vst.msk [vmem:[#allocation3] sm:$0xff] %vm323, 0.0
        $region36: #{rnn_forward.5} parent=31 // pred_fallthru
          _
        %v325 = vld [vmem:[%s1] sm:$0xff]
        %v326 = vld [vmem:[%s297] sm:$0xf]
        %v327 = vld [vmem:[%s297 + $0x4] sm:$0xf]
        %v328 = vld [vmem:[%s297 + $0x8] sm:$0xf]
        %v329 = vld [vmem:[%s297 + $0xc] sm:$0xf]
        %s330 = smul.u32 %s23, 7
        %s331 = smul.u32 %s23, 2
        %s332 = ssub.s32 1, %s331
        %s333 = smul.u32 %s24, 2
        %s334 = ssub.s32 0, %s333
        %s335 = smul.u32 %s23, %s334
        %s336 = sadd.s32 %s24, %s335
        %s337 = smul.u32 %s336, 8
        %v338 = vld [vmem:[#allocation2] sm:$0xf]
        %v339 = vld [vmem:[#allocation3] sm:$0xff]
        %s340 = sadd.s32 %s337, %s330
        %s341 = smul.addr %s330, 4
        %s342 = scalar_lea.vmem %s287, %s341
        %v343 = vld [vmem:[%s342] sm:$0xf]
        %v344 = vunpack.c.l.bf16 %v343
        %v349 = vunpack.c.l.b16 %v326
        %v350 = vunpack.c.l.b16 %v327
        %v351 = vunpack.c.l.b16 %v328
        %v352 = vunpack.c.l.b16 %v329
        %v353 = vpack.c.b16 %v350, %v349
        %v354 = vpack.c.b16 %v352, %v351
        %vm357 = vcmask 261120
        %v359 = vsel %vm357, %v338, 0
        %361 = vmatprep.subr.bf16.mxu0 0
        %362 = vmatpush1.bf16.msra.mxu0 %v353
        %363 = vmatprep.subr.bf16.mxu0 0
        %364 = vmatpush1.bf16.msra.mxu0 %v354
        %365 = vmatprep.subr.bf16.mxu0 0
        %366 = vmatpush1.bf16.msra.mxu0 0
        %367 = vmatprep.subr.bf16.mxu0 0
        %368 = vmatpush1.bf16.msra.mxu0 0
        %369 = vmatprep.subr.bf16.mxu0 0
        %370 = vmatpush1.bf16.msra.mxu0 0
        %371 = vmatprep.subr.bf16.mxu0 0
        %372 = vmatpush1.bf16.msra.mxu0 0
        %373 = vmatprep.subr.bf16.mxu0 0
        %374 = vmatpush1.bf16.msra.mxu0 0
        %375 = vmatprep.subr.bf16.mxu0 0
        %376 = vmatpush1.bf16.msra.mxu0 0
        %377 = vmatprep.subr.bf16.mxu0 0
        %378 = vmatpush1.bf16.msra.mxu0 0
        %379 = vmatprep.subr.bf16.mxu0 0
        %380 = vmatpush1.bf16.msra.mxu0 0
        %381 = vmatprep.subr.bf16.mxu0 0
        %382 = vmatpush1.bf16.msra.mxu0 0
        %383 = vmatprep.subr.bf16.mxu0 0
        %384 = vmatpush1.bf16.msra.mxu0 0
        %385 = vmatprep.subr.bf16.mxu0 0
        %386 = vmatpush1.bf16.msra.mxu0 0
        %387 = vmatprep.subr.bf16.mxu0 0
        %388 = vmatpush1.bf16.msra.mxu0 0
        %389 = vmatprep.subr.bf16.mxu0 0
        %390 = vmatpush1.bf16.msra.mxu0 0
        %391 = vmatprep.subr.bf16.mxu0 0
        %392 = vmatpush1.bf16.msra.mxu0 0
        %393 = vmatprep.mubr.bf16.mxu0 0
        %394 = vmatmul.mubr.bf16.gmra.mrb[0].mxu0 %v359
        %v395 = vpop.f32.mrb[0].mxu0
        %v396 = vadd.f32 0.0, %v395
        %v397 = vpop.f32.mrb[0].mxu0
        %v398 = vpop.f32.mrb[0].mxu0
        %v399 = vpop.f32.mrb[0].mxu0
        %400 = vdwg.mxu0
        %v401 = vadd.f32 %v344, %v396
        %v402 = vxor.u32 %v401, 2147483648
        %v403 = vmul.f32 %v402, 1.442695
        %v404 = vpow.pop %v403
        %v405 = vadd.f32 %v404, 1.0
        %v406 = vrcp.pop %v405
        %v407 = vmul.f32 1.0, %v406
        %v408 = vtanh.pop %v401
        %410 = vrot.lane.b32.xlu0 %v339, 32
        %v411 = vpop.permute.xlu0 %410
        %v413 = vmul.f32 %v407, %v411
        %415 = vrot.lane.b32.xlu0 %v408, 64
        %v416 = vpop.permute.xlu0 %415
        %v418 = vmul.f32 %v407, %v416
        %420 = vrot.lane.b32.xlu0 %v418, 32
        %v421 = vpop.permute.xlu0 %420
        %v423 = vadd.f32 %v413, %v421
        %v424 = vtanh.pop %v423
        %426 = vrot.lane.b32.xlu0 %v424, 64
        %v427 = vpop.permute.xlu0 %426
        %v429 = vmul.f32 %v407, %v427
        %v430 = vpack.c.bf16 %v429, %v429
        %v431 = vstv %s340
        %vm432 = vcmp.lt.s32.totalorder %v431, %v325
        %v433 = vsel %vm432, 1, 0
        %434 = vset.pattern.permute.xlu0 0
        %435 = vperm.xlu0 %434, %v433
        %v436 = vpop.permute.xlu0 %435
        %vm437 = vcmp.eq.s32.totalorder %v436, 1
        %vm438 = vmpackc.low %vm437, %vm437
        %v439 = vsel %vm438, %v430, 0
        %v441 = vunpack.c.l.b16 %v439
        %v442 = vpack.c.b16 %v441, %v441
        %443 = vrot.lane.b32.xlu0 %v442, 32
        %v444 = vpop.permute.xlu0 %443
        %s446 = smul.addr %s330, 4
        %s447 = scalar_lea.vmem %s310, %s446
        %vm448 = vcmask 257024
        %449 = vst.msk [vmem:[%s447] sm:$0xf] %vm448, %v444
        %v451 = vunpack.c.l.b16 %v338
        %v452 = vpack.c.b16 %v451, %v451
        %453 = vrot.lane.b32.xlu0 %v452, 96
        %v454 = vpop.permute.xlu0 %453
        %v456 = vsel %vm438, %v430, %v454
        %v457 = vsel %vm437, %v423, %v411
        %s458 = sadd.s32 %s330, %s332
        %s459 = sadd.s32 %s337, %s458
        %s460 = smul.addr %s458, 4
        %s461 = scalar_lea.vmem %s287, %s460
        %v462 = vld [vmem:[%s461] sm:$0xf]
        %v463 = vunpack.c.l.bf16 %v462
        %465 = vrot.lane.b32.xlu0 %v456, 32
        %v466 = vpop.permute.xlu0 %465
        %v468 = vsel %vm357, %v466, 0
        %470 = vmatprep.subr.bf16.mxu0 0
        %471 = vmatpush1.bf16.msra.mxu0 %v353
        %472 = vmatprep.subr.bf16.mxu0 0
        %473 = vmatpush1.bf16.msra.mxu0 %v354
        %474 = vmatprep.subr.bf16.mxu0 0
        %475 = vmatpush1.bf16.msra.mxu0 0
        %476 = vmatprep.subr.bf16.mxu0 0
        %477 = vmatpush1.bf16.msra.mxu0 0
        %478 = vmatprep.subr.bf16.mxu0 0
        %479 = vmatpush1.bf16.msra.mxu0 0
        %480 = vmatprep.subr.bf16.mxu0 0
        %481 = vmatpush1.bf16.msra.mxu0 0
        %482 = vmatprep.subr.bf16.mxu0 0
        %483 = vmatpush1.bf16.msra.mxu0 0
        %484 = vmatprep.subr.bf16.mxu0 0
        %485 = vmatpush1.bf16.msra.mxu0 0
        %486 = vmatprep.subr.bf16.mxu0 0
        %487 = vmatpush1.bf16.msra.mxu0 0
        %488 = vmatprep.subr.bf16.mxu0 0
        %489 = vmatpush1.bf16.msra.mxu0 0
        %490 = vmatprep.subr.bf16.mxu0 0
        %491 = vmatpush1.bf16.msra.mxu0 0
        %492 = vmatprep.subr.bf16.mxu0 0
        %493 = vmatpush1.bf16.msra.mxu0 0
        %494 = vmatprep.subr.bf16.mxu0 0
        %495 = vmatpush1.bf16.msra.mxu0 0
        %496 = vmatprep.subr.bf16.mxu0 0
        %497 = vmatpush1.bf16.msra.mxu0 0
        %498 = vmatprep.subr.bf16.mxu0 0
        %499 = vmatpush1.bf16.msra.mxu0 0
        %500 = vmatprep.subr.bf16.mxu0 0
        %501 = vmatpush1.bf16.msra.mxu0 0
        %502 = vmatprep.mubr.bf16.mxu0 0
        %503 = vmatmul.mubr.bf16.gmra.mrb[0].mxu0 %v468
        %v504 = vpop.f32.mrb[0].mxu0
        %v505 = vadd.f32 0.0, %v504
        %v506 = vpop.f32.mrb[0].mxu0
        %v507 = vpop.f32.mrb[0].mxu0
        %v508 = vpop.f32.mrb[0].mxu0
        %509 = vdwg.mxu0
        %v510 = vadd.f32 %v463, %v505
        %v511 = vxor.u32 %v510, 2147483648
        %v512 = vmul.f32 %v511, 1.442695
        %v513 = vpow.pop %v512
        %v514 = vadd.f32 %v513, 1.0
        %v515 = vrcp.pop %v514
        %v516 = vmul.f32 1.0, %v515
        %v517 = vtanh.pop %v510
        %v518 = vmul.f32 %v516, %v457
        %520 = vrot.lane.b32.xlu0 %v517, 64
        %v521 = vpop.permute.xlu0 %520
        %v523 = vmul.f32 %v516, %v521
        %525 = vrot.lane.b32.xlu0 %v523, 32
        %v526 = vpop.permute.xlu0 %525
        %v528 = vadd.f32 %v518, %v526
        %v529 = vtanh.pop %v528
        %531 = vrot.lane.b32.xlu0 %v529, 64
        %v532 = vpop.permute.xlu0 %531
        %v534 = vmul.f32 %v516, %v532
        %v535 = vpack.c.bf16 %v534, %v534
        %v536 = vstv %s459
        %vm537 = vcmp.lt.s32.totalorder %v536, %v325
        %v538 = vsel %vm537, 1, 0
        %539 = vset.pattern.permute.xlu0 0
        %540 = vperm.xlu0 %539, %v538
        %v541 = vpop.permute.xlu0 %540
        %vm542 = vcmp.eq.s32.totalorder %v541, 1
        %vm543 = vmpackc.low %vm542, %vm542
        %v544 = vsel %vm543, %v535, 0
        %v546 = vunpack.c.l.b16 %v544
        %v547 = vpack.c.b16 %v546, %v546
        %548 = vrot.lane.b32.xlu0 %v547, 32
        %v549 = vpop.permute.xlu0 %548
        %s551 = smul.addr %s458, 4
        %s552 = scalar_lea.vmem %s310, %s551
        %553 = vst.msk [vmem:[%s552] sm:$0xf] %vm448, %v549
        %v554 = vsel %vm543, %v535, %v456
        %v555 = vsel %vm542, %v528, %v457
        %s556 = smul.u32 %s332, 2
        %s557 = sadd.s32 %s330, %s556
        %s558 = sadd.s32 %s337, %s557
        %s559 = smul.addr %s557, 4
        %s560 = scalar_lea.vmem %s287, %s559
        %v561 = vld [vmem:[%s560] sm:$0xf]
        %v562 = vunpack.c.l.bf16 %v561
        %564 = vrot.lane.b32.xlu0 %v554, 32
        %v565 = vpop.permute.xlu0 %564
        %v567 = vsel %vm357, %v565, 0
        %569 = vmatprep.subr.bf16.mxu0 0
        %570 = vmatpush1.bf16.msra.mxu0 %v353
        %571 = vmatprep.subr.bf16.mxu0 0
        %572 = vmatpush1.bf16.msra.mxu0 %v354
        %573 = vmatprep.subr.bf16.mxu0 0
        %574 = vmatpush1.bf16.msra.mxu0 0
        %575 = vmatprep.subr.bf16.mxu0 0
        %576 = vmatpush1.bf16.msra.mxu0 0
        %577 = vmatprep.subr.bf16.mxu0 0
        %578 = vmatpush1.bf16.msra.mxu0 0
        %579 = vmatprep.subr.bf16.mxu0 0
        %580 = vmatpush1.bf16.msra.mxu0 0
        %581 = vmatprep.subr.bf16.mxu0 0
        %582 = vmatpush1.bf16.msra.mxu0 0
        %583 = vmatprep.subr.bf16.mxu0 0
        %584 = vmatpush1.bf16.msra.mxu0 0
        %585 = vmatprep.subr.bf16.mxu0 0
        %586 = vmatpush1.bf16.msra.mxu0 0
        %587 = vmatprep.subr.bf16.mxu0 0
        %588 = vmatpush1.bf16.msra.mxu0 0
        %589 = vmatprep.subr.bf16.mxu0 0
        %590 = vmatpush1.bf16.msra.mxu0 0
        %591 = vmatprep.subr.bf16.mxu0 0
        %592 = vmatpush1.bf16.msra.mxu0 0
        %593 = vmatprep.subr.bf16.mxu0 0
        %594 = vmatpush1.bf16.msra.mxu0 0
        %595 = vmatprep.subr.bf16.mxu0 0
        %596 = vmatpush1.bf16.msra.mxu0 0
        %597 = vmatprep.subr.bf16.mxu0 0
        %598 = vmatpush1.bf16.msra.mxu0 0
        %599 = vmatprep.subr.bf16.mxu0 0
        %600 = vmatpush1.bf16.msra.mxu0 0
        %601 = vmatprep.mubr.bf16.mxu0 0
        %602 = vmatmul.mubr.bf16.gmra.mrb[0].mxu0 %v567
        %v603 = vpop.f32.mrb[0].mxu0
        %v604 = vadd.f32 0.0, %v603
        %v605 = vpop.f32.mrb[0].mxu0
        %v606 = vpop.f32.mrb[0].mxu0
        %v607 = vpop.f32.mrb[0].mxu0
        %608 = vdwg.mxu0
        %v609 = vadd.f32 %v562, %v604
        %v610 = vxor.u32 %v609, 2147483648
        %v611 = vmul.f32 %v610, 1.442695
        %v612 = vpow.pop %v611
        %v613 = vadd.f32 %v612, 1.0
        %v614 = vrcp.pop %v613
        %v615 = vmul.f32 1.0, %v614
        %v616 = vtanh.pop %v609
        %v617 = vmul.f32 %v615, %v555
        %619 = vrot.lane.b32.xlu0 %v616, 64
        %v620 = vpop.permute.xlu0 %619
        %v622 = vmul.f32 %v615, %v620
        %624 = vrot.lane.b32.xlu0 %v622, 32
        %v625 = vpop.permute.xlu0 %624
        %v627 = vadd.f32 %v617, %v625
        %v628 = vtanh.pop %v627
        %630 = vrot.lane.b32.xlu0 %v628, 64
        %v631 = vpop.permute.xlu0 %630
        %v633 = vmul.f32 %v615, %v631
        %v634 = vpack.c.bf16 %v633, %v633
        %v635 = vstv %s558
        %vm636 = vcmp.lt.s32.totalorder %v635, %v325
        %v637 = vsel %vm636, 1, 0
        %638 = vset.pattern.permute.xlu0 0
        %639 = vperm.xlu0 %638, %v637
        %v640 = vpop.permute.xlu0 %639
        %vm641 = vcmp.eq.s32.totalorder %v640, 1
        %vm642 = vmpackc.low %vm641, %vm641
        %v643 = vsel %vm642, %v634, 0
        %v645 = vunpack.c.l.b16 %v643
        %v646 = vpack.c.b16 %v645, %v645
        %647 = vrot.lane.b32.xlu0 %v646, 32
        %v648 = vpop.permute.xlu0 %647
        %s650 = smul.addr %s557, 4
        %s651 = scalar_lea.vmem %s310, %s650
        %652 = vst.msk [vmem:[%s651] sm:$0xf] %vm448, %v648
        %v653 = vsel %vm642, %v634, %v554
        %v654 = vsel %vm641, %v627, %v555
        %s655 = smul.u32 %s332, 3
        %s656 = sadd.s32 %s330, %s655
        %s657 = sadd.s32 %s337, %s656
        %s658 = smul.addr %s656, 4
        %s659 = scalar_lea.vmem %s287, %s658
        %v660 = vld [vmem:[%s659] sm:$0xf]
        %v661 = vunpack.c.l.bf16 %v660
        %663 = vrot.lane.b32.xlu0 %v653, 32
        %v664 = vpop.permute.xlu0 %663
        %v666 = vsel %vm357, %v664, 0
        %668 = vmatprep.subr.bf16.mxu0 0
        %669 = vmatpush1.bf16.msra.mxu0 %v353
        %670 = vmatprep.subr.bf16.mxu0 0
        %671 = vmatpush1.bf16.msra.mxu0 %v354
        %672 = vmatprep.subr.bf16.mxu0 0
        %673 = vmatpush1.bf16.msra.mxu0 0
        %674 = vmatprep.subr.bf16.mxu0 0
        %675 = vmatpush1.bf16.msra.mxu0 0
        %676 = vmatprep.subr.bf16.mxu0 0
        %677 = vmatpush1.bf16.msra.mxu0 0
        %678 = vmatprep.subr.bf16.mxu0 0
        %679 = vmatpush1.bf16.msra.mxu0 0
        %680 = vmatprep.subr.bf16.mxu0 0
        %681 = vmatpush1.bf16.msra.mxu0 0
        %682 = vmatprep.subr.bf16.mxu0 0
        %683 = vmatpush1.bf16.msra.mxu0 0
        %684 = vmatprep.subr.bf16.mxu0 0
        %685 = vmatpush1.bf16.msra.mxu0 0
        %686 = vmatprep.subr.bf16.mxu0 0
        %687 = vmatpush1.bf16.msra.mxu0 0
        %688 = vmatprep.subr.bf16.mxu0 0
        %689 = vmatpush1.bf16.msra.mxu0 0
        %690 = vmatprep.subr.bf16.mxu0 0
        %691 = vmatpush1.bf16.msra.mxu0 0
        %692 = vmatprep.subr.bf16.mxu0 0
        %693 = vmatpush1.bf16.msra.mxu0 0
        %694 = vmatprep.subr.bf16.mxu0 0
        %695 = vmatpush1.bf16.msra.mxu0 0
        %696 = vmatprep.subr.bf16.mxu0 0
        %697 = vmatpush1.bf16.msra.mxu0 0
        %698 = vmatprep.subr.bf16.mxu0 0
        %699 = vmatpush1.bf16.msra.mxu0 0
        %700 = vmatprep.mubr.bf16.mxu0 0
        %701 = vmatmul.mubr.bf16.gmra.mrb[0].mxu0 %v666
        %v702 = vpop.f32.mrb[0].mxu0
        %v703 = vadd.f32 0.0, %v702
        %v704 = vpop.f32.mrb[0].mxu0
        %v705 = vpop.f32.mrb[0].mxu0
        %v706 = vpop.f32.mrb[0].mxu0
        %707 = vdwg.mxu0
        %v708 = vadd.f32 %v661, %v703
        %v709 = vxor.u32 %v708, 2147483648
        %v710 = vmul.f32 %v709, 1.442695
        %v711 = vpow.pop %v710
        %v712 = vadd.f32 %v711, 1.0
        %v713 = vrcp.pop %v712
        %v714 = vmul.f32 1.0, %v713
        %v715 = vtanh.pop %v708
        %v716 = vmul.f32 %v714, %v654
        %718 = vrot.lane.b32.xlu0 %v715, 64
        %v719 = vpop.permute.xlu0 %718
        %v721 = vmul.f32 %v714, %v719
        %723 = vrot.lane.b32.xlu0 %v721, 32
        %v724 = vpop.permute.xlu0 %723
        %v726 = vadd.f32 %v716, %v724
        %v727 = vtanh.pop %v726
        %729 = vrot.lane.b32.xlu0 %v727, 64
        %v730 = vpop.permute.xlu0 %729
        %v732 = vmul.f32 %v714, %v730
        %v733 = vpack.c.bf16 %v732, %v732
        %v734 = vstv %s657
        %vm735 = vcmp.lt.s32.totalorder %v734, %v325
        %v736 = vsel %vm735, 1, 0
        %737 = vset.pattern.permute.xlu0 0
        %738 = vperm.xlu0 %737, %v736
        %v739 = vpop.permute.xlu0 %738
        %vm740 = vcmp.eq.s32.totalorder %v739, 1
        %vm741 = vmpackc.low %vm740, %vm740
        %v742 = vsel %vm741, %v733, 0
        %v744 = vunpack.c.l.b16 %v742
        %v745 = vpack.c.b16 %v744, %v744
        %746 = vrot.lane.b32.xlu0 %v745, 32
        %v747 = vpop.permute.xlu0 %746
        %s749 = smul.addr %s656, 4
        %s750 = scalar_lea.vmem %s310, %s749
        %751 = vst.msk [vmem:[%s750] sm:$0xf] %vm448, %v747
        %v752 = vsel %vm741, %v733, %v653
        %v753 = vsel %vm740, %v726, %v654
        %s754 = smul.u32 %s332, 4
        %s755 = sadd.s32 %s330, %s754
        %s756 = sadd.s32 %s337, %s755
        %s757 = smul.addr %s755, 4
        %s758 = scalar_lea.vmem %s287, %s757
        %v759 = vld [vmem:[%s758] sm:$0xf]
        %v760 = vunpack.c.l.bf16 %v759
        %762 = vrot.lane.b32.xlu0 %v752, 32
        %v763 = vpop.permute.xlu0 %762
        %v765 = vsel %vm357, %v763, 0
        %767 = vmatprep.subr.bf16.mxu0 0
        %768 = vmatpush1.bf16.msra.mxu0 %v353
        %769 = vmatprep.subr.bf16.mxu0 0
        %770 = vmatpush1.bf16.msra.mxu0 %v354
        %771 = vmatprep.subr.bf16.mxu0 0
        %772 = vmatpush1.bf16.msra.mxu0 0
        %773 = vmatprep.subr.bf16.mxu0 0
        %774 = vmatpush1.bf16.msra.mxu0 0
        %775 = vmatprep.subr.bf16.mxu0 0
        %776 = vmatpush1.bf16.msra.mxu0 0
        %777 = vmatprep.subr.bf16.mxu0 0
        %778 = vmatpush1.bf16.msra.mxu0 0
        %779 = vmatprep.subr.bf16.mxu0 0
        %780 = vmatpush1.bf16.msra.mxu0 0
        %781 = vmatprep.subr.bf16.mxu0 0
        %782 = vmatpush1.bf16.msra.mxu0 0
        %783 = vmatprep.subr.bf16.mxu0 0
        %784 = vmatpush1.bf16.msra.mxu0 0
        %785 = vmatprep.subr.bf16.mxu0 0
        %786 = vmatpush1.bf16.msra.mxu0 0
        %787 = vmatprep.subr.bf16.mxu0 0
        %788 = vmatpush1.bf16.msra.mxu0 0
        %789 = vmatprep.subr.bf16.mxu0 0
        %790 = vmatpush1.bf16.msra.mxu0 0
        %791 = vmatprep.subr.bf16.mxu0 0
        %792 = vmatpush1.bf16.msra.mxu0 0
        %793 = vmatprep.subr.bf16.mxu0 0
        %794 = vmatpush1.bf16.msra.mxu0 0
        %795 = vmatprep.subr.bf16.mxu0 0
        %796 = vmatpush1.bf16.msra.mxu0 0
        %797 = vmatprep.subr.bf16.mxu0 0
        %798 = vmatpush1.bf16.msra.mxu0 0
        %799 = vmatprep.mubr.bf16.mxu0 0
        %800 = vmatmul.mubr.bf16.gmra.mrb[0].mxu0 %v765
        %v801 = vpop.f32.mrb[0].mxu0
        %v802 = vadd.f32 0.0, %v801
        %v803 = vpop.f32.mrb[0].mxu0
        %v804 = vpop.f32.mrb[0].mxu0
        %v805 = vpop.f32.mrb[0].mxu0
        %806 = vdwg.mxu0
        %v807 = vadd.f32 %v760, %v802
        %v808 = vxor.u32 %v807, 2147483648
        %v809 = vmul.f32 %v808, 1.442695
        %v810 = vpow.pop %v809
        %v811 = vadd.f32 %v810, 1.0
        %v812 = vrcp.pop %v811
        %v813 = vmul.f32 1.0, %v812
        %v814 = vtanh.pop %v807
        %v815 = vmul.f32 %v813, %v753
        %817 = vrot.lane.b32.xlu0 %v814, 64
        %v818 = vpop.permute.xlu0 %817
        %v820 = vmul.f32 %v813, %v818
        %822 = vrot.lane.b32.xlu0 %v820, 32
        %v823 = vpop.permute.xlu0 %822
        %v825 = vadd.f32 %v815, %v823
        %v826 = vtanh.pop %v825
        %828 = vrot.lane.b32.xlu0 %v826, 64
        %v829 = vpop.permute.xlu0 %828
        %v831 = vmul.f32 %v813, %v829
        %v832 = vpack.c.bf16 %v831, %v831
        %v833 = vstv %s756
        %vm834 = vcmp.lt.s32.totalorder %v833, %v325
        %v835 = vsel %vm834, 1, 0
        %836 = vset.pattern.permute.xlu0 0
        %837 = vperm.xlu0 %836, %v835
        %v838 = vpop.permute.xlu0 %837
        %vm839 = vcmp.eq.s32.totalorder %v838, 1
        %vm840 = vmpackc.low %vm839, %vm839
        %v841 = vsel %vm840, %v832, 0
        %v843 = vunpack.c.l.b16 %v841
        %v844 = vpack.c.b16 %v843, %v843
        %845 = vrot.lane.b32.xlu0 %v844, 32
        %v846 = vpop.permute.xlu0 %845
        %s848 = smul.addr %s755, 4
        %s849 = scalar_lea.vmem %s310, %s848
        %850 = vst.msk [vmem:[%s849] sm:$0xf] %vm448, %v846
        %v851 = vsel %vm840, %v832, %v752
        %v852 = vsel %vm839, %v825, %v753
        %s853 = smul.u32 %s332, 5
        %s854 = sadd.s32 %s330, %s853
        %s855 = sadd.s32 %s337, %s854
        %s856 = smul.addr %s854, 4
        %s857 = scalar_lea.vmem %s287, %s856
        %v858 = vld [vmem:[%s857] sm:$0xf]
        %v859 = vunpack.c.l.bf16 %v858
        %861 = vrot.lane.b32.xlu0 %v851, 32
        %v862 = vpop.permute.xlu0 %861
        %v864 = vsel %vm357, %v862, 0
        %866 = vmatprep.subr.bf16.mxu0 0
        %867 = vmatpush1.bf16.msra.mxu0 %v353
        %868 = vmatprep.subr.bf16.mxu0 0
        %869 = vmatpush1.bf16.msra.mxu0 %v354
        %870 = vmatprep.subr.bf16.mxu0 0
        %871 = vmatpush1.bf16.msra.mxu0 0
        %872 = vmatprep.subr.bf16.mxu0 0
        %873 = vmatpush1.bf16.msra.mxu0 0
        %874 = vmatprep.subr.bf16.mxu0 0
        %875 = vmatpush1.bf16.msra.mxu0 0
        %876 = vmatprep.subr.bf16.mxu0 0
        %877 = vmatpush1.bf16.msra.mxu0 0
        %878 = vmatprep.subr.bf16.mxu0 0
        %879 = vmatpush1.bf16.msra.mxu0 0
        %880 = vmatprep.subr.bf16.mxu0 0
        %881 = vmatpush1.bf16.msra.mxu0 0
        %882 = vmatprep.subr.bf16.mxu0 0
        %883 = vmatpush1.bf16.msra.mxu0 0
        %884 = vmatprep.subr.bf16.mxu0 0
        %885 = vmatpush1.bf16.msra.mxu0 0
        %886 = vmatprep.subr.bf16.mxu0 0
        %887 = vmatpush1.bf16.msra.mxu0 0
        %888 = vmatprep.subr.bf16.mxu0 0
        %889 = vmatpush1.bf16.msra.mxu0 0
        %890 = vmatprep.subr.bf16.mxu0 0
        %891 = vmatpush1.bf16.msra.mxu0 0
        %892 = vmatprep.subr.bf16.mxu0 0
        %893 = vmatpush1.bf16.msra.mxu0 0
        %894 = vmatprep.subr.bf16.mxu0 0
        %895 = vmatpush1.bf16.msra.mxu0 0
        %896 = vmatprep.subr.bf16.mxu0 0
        %897 = vmatpush1.bf16.msra.mxu0 0
        %898 = vmatprep.mubr.bf16.mxu0 0
        %899 = vmatmul.mubr.bf16.gmra.mrb[0].mxu0 %v864
        %v900 = vpop.f32.mrb[0].mxu0
        %v901 = vadd.f32 0.0, %v900
        %v902 = vpop.f32.mrb[0].mxu0
        %v903 = vpop.f32.mrb[0].mxu0
        %v904 = vpop.f32.mrb[0].mxu0
        %905 = vdwg.mxu0
        %v906 = vadd.f32 %v859, %v901
        %v907 = vxor.u32 %v906, 2147483648
        %v908 = vmul.f32 %v907, 1.442695
        %v909 = vpow.pop %v908
        %v910 = vadd.f32 %v909, 1.0
        %v911 = vrcp.pop %v910
        %v912 = vmul.f32 1.0, %v911
        %v913 = vtanh.pop %v906
        %v914 = vmul.f32 %v912, %v852
        %916 = vrot.lane.b32.xlu0 %v913, 64
        %v917 = vpop.permute.xlu0 %916
        %v919 = vmul.f32 %v912, %v917
        %921 = vrot.lane.b32.xlu0 %v919, 32
        %v922 = vpop.permute.xlu0 %921
        %v924 = vadd.f32 %v914, %v922
        %v925 = vtanh.pop %v924
        %927 = vrot.lane.b32.xlu0 %v925, 64
        %v928 = vpop.permute.xlu0 %927
        %v930 = vmul.f32 %v912, %v928
        %v931 = vpack.c.bf16 %v930, %v930
        %v932 = vstv %s855
        %vm933 = vcmp.lt.s32.totalorder %v932, %v325
        %v934 = vsel %vm933, 1, 0
        %935 = vset.pattern.permute.xlu0 0
        %936 = vperm.xlu0 %935, %v934
        %v937 = vpop.permute.xlu0 %936
        %vm938 = vcmp.eq.s32.totalorder %v937, 1
        %vm939 = vmpackc.low %vm938, %vm938
        %v940 = vsel %vm939, %v931, 0
        %v942 = vunpack.c.l.b16 %v940
        %v943 = vpack.c.b16 %v942, %v942
        %944 = vrot.lane.b32.xlu0 %v943, 32
        %v945 = vpop.permute.xlu0 %944
        %s947 = smul.addr %s854, 4
        %s948 = scalar_lea.vmem %s310, %s947
        %949 = vst.msk [vmem:[%s948] sm:$0xf] %vm448, %v945
        %v950 = vsel %vm939, %v931, %v851
        %v951 = vsel %vm938, %v924, %v852
        %s952 = smul.u32 %s332, 6
        %s953 = sadd.s32 %s330, %s952
        %s954 = sadd.s32 %s337, %s953
        %s955 = smul.addr %s953, 4
        %s956 = scalar_lea.vmem %s287, %s955
        %v957 = vld [vmem:[%s956] sm:$0xf]
        %v958 = vunpack.c.l.bf16 %v957
        %960 = vrot.lane.b32.xlu0 %v950, 32
        %v961 = vpop.permute.xlu0 %960
        %v963 = vsel %vm357, %v961, 0
        %965 = vmatprep.subr.bf16.mxu0 0
        %966 = vmatpush1.bf16.msra.mxu0 %v353
        %967 = vmatprep.subr.bf16.mxu0 0
        %968 = vmatpush1.bf16.msra.mxu0 %v354
        %969 = vmatprep.subr.bf16.mxu0 0
        %970 = vmatpush1.bf16.msra.mxu0 0
        %971 = vmatprep.subr.bf16.mxu0 0
        %972 = vmatpush1.bf16.msra.mxu0 0
        %973 = vmatprep.subr.bf16.mxu0 0
        %974 = vmatpush1.bf16.msra.mxu0 0
        %975 = vmatprep.subr.bf16.mxu0 0
        %976 = vmatpush1.bf16.msra.mxu0 0
        %977 = vmatprep.subr.bf16.mxu0 0
        %978 = vmatpush1.bf16.msra.mxu0 0
        %979 = vmatprep.subr.bf16.mxu0 0
        %980 = vmatpush1.bf16.msra.mxu0 0
        %981 = vmatprep.subr.bf16.mxu0 0
        %982 = vmatpush1.bf16.msra.mxu0 0
        %983 = vmatprep.subr.bf16.mxu0 0
        %984 = vmatpush1.bf16.msra.mxu0 0
        %985 = vmatprep.subr.bf16.mxu0 0
        %986 = vmatpush1.bf16.msra.mxu0 0
        %987 = vmatprep.subr.bf16.mxu0 0
        %988 = vmatpush1.bf16.msra.mxu0 0
        %989 = vmatprep.subr.bf16.mxu0 0
        %990 = vmatpush1.bf16.msra.mxu0 0
        %991 = vmatprep.subr.bf16.mxu0 0
        %992 = vmatpush1.bf16.msra.mxu0 0
        %993 = vmatprep.subr.bf16.mxu0 0
        %994 = vmatpush1.bf16.msra.mxu0 0
        %995 = vmatprep.subr.bf16.mxu0 0
        %996 = vmatpush1.bf16.msra.mxu0 0
        %997 = vmatprep.mubr.bf16.mxu0 0
        %998 = vmatmul.mubr.bf16.gmra.mrb[0].mxu0 %v963
        %v999 = vpop.f32.mrb[0].mxu0
        %v1000 = vadd.f32 0.0, %v999
        %v1001 = vpop.f32.mrb[0].mxu0
        %v1002 = vpop.f32.mrb[0].mxu0
        %v1003 = vpop.f32.mrb[0].mxu0
        %1004 = vdwg.mxu0
        %v1005 = vadd.f32 %v958, %v1000
        %v1006 = vxor.u32 %v1005, 2147483648
        %v1007 = vmul.f32 %v1006, 1.442695
        %v1008 = vpow.pop %v1007
        %v1009 = vadd.f32 %v1008, 1.0
        %v1010 = vrcp.pop %v1009
        %v1011 = vmul.f32 1.0, %v1010
        %v1012 = vtanh.pop %v1005
        %v1013 = vmul.f32 %v1011, %v951
        %1015 = vrot.lane.b32.xlu0 %v1012, 64
        %v1016 = vpop.permute.xlu0 %1015
        %v1018 = vmul.f32 %v1011, %v1016
        %1020 = vrot.lane.b32.xlu0 %v1018, 32
        %v1021 = vpop.permute.xlu0 %1020
        %v1023 = vadd.f32 %v1013, %v1021
        %v1024 = vtanh.pop %v1023
        %1026 = vrot.lane.b32.xlu0 %v1024, 64
        %v1027 = vpop.permute.xlu0 %1026
        %v1029 = vmul.f32 %v1011, %v1027
        %v1030 = vpack.c.bf16 %v1029, %v1029
        %v1031 = vstv %s954
        %vm1032 = vcmp.lt.s32.totalorder %v1031, %v325
        %v1033 = vsel %vm1032, 1, 0
        %1034 = vset.pattern.permute.xlu0 0
        %1035 = vperm.xlu0 %1034, %v1033
        %v1036 = vpop.permute.xlu0 %1035
        %vm1037 = vcmp.eq.s32.totalorder %v1036, 1
        %vm1038 = vmpackc.low %vm1037, %vm1037
        %v1039 = vsel %vm1038, %v1030, 0
        %v1041 = vunpack.c.l.b16 %v1039
        %v1042 = vpack.c.b16 %v1041, %v1041
        %1043 = vrot.lane.b32.xlu0 %v1042, 32
        %v1044 = vpop.permute.xlu0 %1043
        %s1046 = smul.addr %s953, 4
        %s1047 = scalar_lea.vmem %s310, %s1046
        %1048 = vst.msk [vmem:[%s1047] sm:$0xf] %vm448, %v1044
        %v1049 = vsel %vm1038, %v1030, %v950
        %v1050 = vsel %vm1037, %v1023, %v951
        %s1051 = smul.u32 %s332, 7
        %s1052 = sadd.s32 %s330, %s1051
        %s1053 = sadd.s32 %s337, %s1052
        %s1054 = smul.addr %s1052, 4
        %s1055 = scalar_lea.vmem %s287, %s1054
        %v1056 = vld [vmem:[%s1055] sm:$0xf]
        %v1057 = vunpack.c.l.bf16 %v1056
        %1059 = vrot.lane.b32.xlu0 %v1049, 32
        %v1060 = vpop.permute.xlu0 %1059
        %v1062 = vsel %vm357, %v1060, 0
        %1064 = vmatprep.subr.bf16.mxu0 0
        %1065 = vmatpush1.bf16.msra.mxu0 %v353
        %1066 = vmatprep.subr.bf16.mxu0 0
        %1067 = vmatpush1.bf16.msra.mxu0 %v354
        %1068 = vmatprep.subr.bf16.mxu0 0
        %1069 = vmatpush1.bf16.msra.mxu0 0
        %1070 = vmatprep.subr.bf16.mxu0 0
        %1071 = vmatpush1.bf16.msra.mxu0 0
        %1072 = vmatprep.subr.bf16.mxu0 0
        %1073 = vmatpush1.bf16.msra.mxu0 0
        %1074 = vmatprep.subr.bf16.mxu0 0
        %1075 = vmatpush1.bf16.msra.mxu0 0
        %1076 = vmatprep.subr.bf16.mxu0 0
        %1077 = vmatpush1.bf16.msra.mxu0 0
        %1078 = vmatprep.subr.bf16.mxu0 0
        %1079 = vmatpush1.bf16.msra.mxu0 0
        %1080 = vmatprep.subr.bf16.mxu0 0
        %1081 = vmatpush1.bf16.msra.mxu0 0
        %1082 = vmatprep.subr.bf16.mxu0 0
        %1083 = vmatpush1.bf16.msra.mxu0 0
        %1084 = vmatprep.subr.bf16.mxu0 0
        %1085 = vmatpush1.bf16.msra.mxu0 0
        %1086 = vmatprep.subr.bf16.mxu0 0
        %1087 = vmatpush1.bf16.msra.mxu0 0
        %1088 = vmatprep.subr.bf16.mxu0 0
        %1089 = vmatpush1.bf16.msra.mxu0 0
        %1090 = vmatprep.subr.bf16.mxu0 0
        %1091 = vmatpush1.bf16.msra.mxu0 0
        %1092 = vmatprep.subr.bf16.mxu0 0
        %1093 = vmatpush1.bf16.msra.mxu0 0
        %1094 = vmatprep.subr.bf16.mxu0 0
        %1095 = vmatpush1.bf16.msra.mxu0 0
        %1096 = vmatprep.mubr.bf16.mxu0 0
        %1097 = vmatmul.mubr.bf16.gmra.mrb[0].mxu0 %v1062
        %v1098 = vpop.f32.mrb[0].mxu0
        %v1099 = vadd.f32 0.0, %v1098
        %v1100 = vpop.f32.mrb[0].mxu0
        %v1101 = vpop.f32.mrb[0].mxu0
        %v1102 = vpop.f32.mrb[0].mxu0
        %1103 = vdwg.mxu0
        %v1104 = vadd.f32 %v1057, %v1099
        %v1105 = vxor.u32 %v1104, 2147483648
        %v1106 = vmul.f32 %v1105, 1.442695
        %v1107 = vpow.pop %v1106
        %v1108 = vadd.f32 %v1107, 1.0
        %v1109 = vrcp.pop %v1108
        %v1110 = vmul.f32 1.0, %v1109
        %v1111 = vtanh.pop %v1104
        %v1112 = vmul.f32 %v1110, %v1050
        %1114 = vrot.lane.b32.xlu0 %v1111, 64
        %v1115 = vpop.permute.xlu0 %1114
        %v1117 = vmul.f32 %v1110, %v1115
        %1119 = vrot.lane.b32.xlu0 %v1117, 32
        %v1120 = vpop.permute.xlu0 %1119
        %v1122 = vadd.f32 %v1112, %v1120
        %v1123 = vtanh.pop %v1122
        %1125 = vrot.lane.b32.xlu0 %v1123, 64
        %v1126 = vpop.permute.xlu0 %1125
        %v1128 = vmul.f32 %v1110, %v1126
        %v1129 = vpack.c.bf16 %v1128, %v1128
        %v1130 = vstv %s1053
        %vm1131 = vcmp.lt.s32.totalorder %v1130, %v325
        %v1132 = vsel %vm1131, 1, 0
        %1133 = vset.pattern.permute.xlu0 0
        %1134 = vperm.xlu0 %1133, %v1132
        %v1135 = vpop.permute.xlu0 %1134
        %vm1136 = vcmp.eq.s32.totalorder %v1135, 1
        %vm1137 = vmpackc.low %vm1136, %vm1136
        %v1138 = vsel %vm1137, %v1129, 0
        %v1140 = vunpack.c.l.b16 %v1138
        %v1141 = vpack.c.b16 %v1140, %v1140
        %1142 = vrot.lane.b32.xlu0 %v1141, 32
        %v1143 = vpop.permute.xlu0 %1142
        %s1145 = smul.addr %s1052, 4
        %s1146 = scalar_lea.vmem %s310, %s1145
        %1147 = vst.msk [vmem:[%s1146] sm:$0xf] %vm448, %v1143
        %v1148 = vsel %vm1137, %v1129, %v1049
        %v1149 = vsel %vm1136, %v1122, %v1050
        %v1151 = vunpack.c.l.b16 %v1148
        %v1152 = vpack.c.b16 %v1151, %v1151
        %1153 = vrot.lane.b32.xlu0 %v1152, 32
        %v1154 = vpop.permute.xlu0 %1153
        %1156 = vst.msk [vmem:[#allocation2] sm:$0xf] %vm448, %v1154
        %1158 = vrot.lane.b32.xlu0 %v1149, 96
        %v1159 = vpop.permute.xlu0 %1158
        %1161 = vst.msk [vmem:[#allocation3] sm:$0xff] %vm357, %v1159
        // Predicated region
        $region37: #{rnn_forward.5} parent=31 // pred_check
          %p1162 = pneg %p317
        $region38: #{rnn_forward.5} parent=31 // pred_check_branch
          %1164 = sbr.rel (%p1162) target = $region40
        $region39: #{rnn_forward.5} parent=31 // pred_region
          %v1165 = vunpack.c.l.bf16 %v1148
          %1167 = vrot.lane.b32.xlu0 %v1165, 32
          %v1168 = vpop.permute.xlu0 %1167
          %1170 = vst.msk [vmem:[%s274] sm:$0xff] %vm357, %v1168
        $region40: #{rnn_forward.5} parent=31 // pred_fallthru
          _
        %s1171 = smul.u32 %s24, 2
        %s1172 = ssub.s32 0, %s1171
        %s1173 = smul.u32 %s23, %s1172
        %s1174 = sadd.s32 %s24, %s1173
        %s1175 = smul.u32 8, %s1174
        %p1176 = scmp.lt.s32.totalorder %s23, 1
        %s1177 = scalar_select %p1176, %s23, 1
        %p1178 = scmp.lt.s32.totalorder %s1175, 7
        %s1179 = scalar_select %p1178, %s1175, 7
        %s1180 = smul.addr %s1177, 8
        %s1181 = sadd.s32 %s1179, %s1180
        %s1182 = smul.addr %s1181, 4
        %s1183 = scalar_lea.vmem %s3, %s1182
        %s1184 = sand.u32 %s158, 1
        %s1185 = scalar_lea.sflag [#allocation5], %s1184
        %s1186 = sand.u32 %s158, 1
        %s1187 = smul.addr %s1186, 8
        %s1188 = scalar_lea.vmem [#allocation4], %s1187
        // Predicated region
        $region41: #{rnn_forward.5} parent=31 // pred_check
          %p1189 = pneg %p142
        $region42: #{rnn_forward.5} parent=31 // pred_check_branch
          %1191 = sbr.rel (%p1189) target = $region44
        $region43: #{rnn_forward.5} parent=31 // pred_region
          %s1192 = smul.u32 %s24, 2
          %s1193 = ssub.s32 0, %s1192
          %s1194 = smul.u32 %s23, %s1193
          %s1195 = sadd.s32 %s24, %s1194
          %s1196 = smul.u32 8, %s1195
        $region44: #{rnn_forward.5} parent=31 // pred_fallthru
          _
        // Predicated region
        $region45: #{rnn_forward.5} parent=31 // pred_check
          %p1197 = pneg %p168
        $region46: #{rnn_forward.5} parent=31 // pred_check_branch
          %1199 = sbr.rel (%p1197) target = $region48
        $region47: #{rnn_forward.5} parent=31 // pred_region
          %s1201 = ssub.s32 128, 128
          %1202 = vsyncadd %s1185, %s1201
          %s1203 = smul.addr %s23, 128
          %s1204 = scalar_lea.hbm %s4, %s1203
          %s1206 = sshll.u32 %s1188, 4
          %s1207 = int_to_ptr.vmem [resolvable:$true] %s1206
          %1209 = dma.vmem_to_hbm [thread:$0]  %s1207, 128, %s1204, %s1185
        $region48: #{rnn_forward.5} parent=31 // pred_fallthru
          _
      $region32: #{rnn_forward.5} parent=5 // pred_fallthru
        _
      %p1210 = scmp.le.s32.totalorder 2, %s14
      // Predicated region
      $region49: #{rnn_forward.5} parent=5 // pred_check
        %p1211 = pneg %p1210
      $region50: #{rnn_forward.5} parent=5 // pred_check_branch
        %1213 = sbr.rel (%p1211) target = $region52
      $region51: #{rnn_forward.5} parent=5 // pred_region
        %s1214 = ssub.s32 %s14, 2
        // Predicated region
        $region53: #{rnn_forward.5} parent=51 // pred_check
          %p1215 = pneg %p148
        $region54: #{rnn_forward.5} parent=51 // pred_check_branch
          %1217 = sbr.rel (%p1215) target = $region56
        $region55: #{rnn_forward.5} parent=51 // pred_region
          %s1218 = smul.u32 %s26, 2
          %s1219 = ssub.s32 0, %s1218
          %s1220 = smul.u32 %s25, %s1219
          %s1221 = sadd.s32 %s26, %s1220
          %s1222 = smul.u32 8, %s1221
          %p1223 = scmp.lt.s32.totalorder %s25, 1
          %s1224 = scalar_select %p1223, %s25, 1
          %p1225 = scmp.lt.s32.totalorder %s1222, 7
          %s1226 = scalar_select %p1225, %s1222, 7
          %s1227 = smul.addr %s1224, 8
          %s1228 = sadd.s32 %s1226, %s1227
          %s1229 = smul.addr %s1228, 4
          %s1230 = scalar_lea.vmem %s3, %s1229
        $region56: #{rnn_forward.5} parent=51 // pred_fallthru
          _
        // Predicated region
        $region57: #{rnn_forward.5} parent=51 // pred_check
          %p1231 = pneg %p174
        $region58: #{rnn_forward.5} parent=51 // pred_check_branch
          %1233 = sbr.rel (%p1231) target = $region60
        $region59: #{rnn_forward.5} parent=51 // pred_region
          %s1234 = sand.u32 %s159, 1
          %s1235 = scalar_lea.sflag [#allocation5], %s1234
          %s1236 = sand.u32 %s159, 1
          %s1237 = smul.addr %s1236, 8
          %s1238 = scalar_lea.vmem [#allocation4], %s1237
          %1239 = dma.done %s1235, 128
        $region60: #{rnn_forward.5} parent=51 // pred_fallthru
          _
      $region52: #{rnn_forward.5} parent=5 // pred_fallthru
        _
    $region6: #{rnn_forward.5} parent=1 // loop_footer
      %s18 = sadd.s32 1, %s14
    $region7: #{rnn_forward.5} parent=1 // loop_footer_branch
      %13 = sbr.rel target = $region3
    $region8: #{rnn_forward.5} parent=1 // loop_exit
      _
    %1240 = vsyncpa [#allocation5], 1
    %s1241 = scalar_lea.sflag [#allocation5], 1
    %1242 = vsyncpa %s1241, 1

// kernel: rnn_forward.7
$region0: #{rnn_forward.7}
  #allocation0 [shape = 'u32[]', space=smem, size = 0x4, offset = 0x4, fixed_abs, tag = 'smem constant byte address 0x4 - core index']
  #allocation1 [shape = 'u32[144,128]{1,0:T(1,128)}', space=vmem, size = 0x12000, scoped, tag = 'internal scratch']
  #allocation2 [shape = 'bf16[8,32]{1,0:T(8,128)(2,1)}', space=vmem, size = 0x800, scoped, tag = 'scratch operand']
  #allocation3 [shape = 'f32[8,32]{1,0:T(8,128)}', space=vmem, size = 0x1000, scoped, tag = 'scratch operand']
  %s0 = inlined_call_operand.vmem [shape: bf16[2,8,8,128], index: 0, kind: input, shape index: {}]
  %s1 = inlined_call_operand.vmem [shape: s32[8,1], index: 1, kind: input, shape index: {}]
  %s2 = inlined_call_operand.vmem [shape: bf16[2,32,128], index: 2, kind: input, shape index: {}]
  %s3 = inlined_call_operand.hbm [shape: bf16[2,8,8,32], index: 3, kind: output, shape index: {0}]
  %s4 = inlined_call_operand.vmem [shape: f32[2,8,32], index: 4, kind: output, shape index: {1}]
  %5 = xla_tuple %s3, %s4
  %s6 = sld [smem:[#allocation0]]
  $region61: #{rnn_forward.7} parent=0
    _
  %s8 = ssub.s32 1, %s6
  %s9 = scalar_select 0, %s8, %s6
  $region1: #{rnn_forward.7} parent=0
    #allocation4 [shape = 'u8[32768]{0}', space=vmem, size = 0x8000, scoped, tag = 'output window, operand 0']
    #allocation5 [shape = 's32[2]{0}', space=sflag, size = 0x8, scoped, tag = 'scoped memory for rnn_forward.7']
    %10 = vsyncpa [#allocation5], 0
    %s11 = scalar_lea.sflag [#allocation5], 1
    %12 = vsyncpa %s11, 0
    loop: start=0, step=1, limit=4
    $region2: #{rnn_forward.7} parent=1 // loop_pre_header
      _
    $region3: #{rnn_forward.7} parent=1 // loop_header
      %s14 = sphi 0, %s18
      %p15 = scmp.ge.s32.totalorder %s14, 4
      %s21 = sphi 0, %s33
      %s22 = sphi 0, %s29
      %s23 = sphi 0, %s21
      %s24 = sphi 0, %s22
      %s25 = sphi 0, %s23
      %s26 = sphi 0, %s24
      %s46 = sphi 0, %s48
      %s49 = sphi 0, %s46
      %s50 = sphi 0, %s49
      %s66 = sphi 0, %s50
      %s70 = sphi 0, %s70
      %s72 = sphi 0, %s70
      %s73 = sphi 0, %s72
      %s87 = sphi 0, %s73
      %s93 = sphi 0, %s95
      %s96 = sphi 0, %s93
      %s97 = sphi 0, %s96
      %s113 = sphi 0, %s97
      %s129 = sphi 0, %s131
      %s132 = sphi 0, %s129
      %s133 = sphi 0, %s132
      %s149 = sphi 0, %s133
      %s155 = sphi 0, %s157
      %s158 = sphi 0, %s155
      %s159 = sphi 0, %s158
      %s175 = sphi 0, %s159
    $region4: #{rnn_forward.7} parent=1 // loop_header_branch
      %17 = sbr.rel (%p15) target = $region8
    $region5: #{rnn_forward.7} parent=1 // loop_body
      %s19 = ssub.s32 %s14, 1
      %s20 = ssub.s32 %s14, 2
      %s27 = sadd.s32 1, %s22
      %p28 = scmp.ge.s32.totalorder %s27, 1
      %s29 = scalar_select %p28, 0, %s27
      %s30 = sadd.s32 1, %s21
      %s31 = scalar_select %p28, %s30, %s21
      %p32 = scmp.ge.s32.totalorder %s31, 2
      %s33 = scalar_select %p32, 0, %s31
      %s34 = smul.u32 %s22, 2
      %s35 = ssub.s32 0, %s34
      %s36 = smul.u32 %s21, %s35
      %s37 = sadd.s32 %s22, %s36
      %s38 = smul.u32 %s29, 2
      %s39 = ssub.s32 0, %s38
      %s40 = smul.u32 %s33, %s39
      %s41 = sadd.s32 %s29, %s40
      %s42 = ssub.s32 %s21, %s33
      %s43 = ssub.s32 %s37, %s41
      %s44 = sor.u32 %s42, %s43
      %p45 = scmp.eq.s32.totalorder %s44, 0
      %s47 = sadd.s32 %s46, 1
      %s48 = scalar_select %p45, %s46, %s47
      %p51 = pneg %p45
      %p52 = scmp.eq.s32.totalorder %s14, 1
      %p53 = por %p51, %p52
      %p54 = scmp.ne.s32.totalorder %s46, %s49
      %p55 = scmp.eq.s32.totalorder %s14, 0
      %p56 = por %p54, %p55
      %p57 = scmp.ne.s32.totalorder %s46, %s49
      %p58 = scmp.eq.s32.totalorder %s19, 1
      %p59 = por %p57, %p58
      %p60 = scmp.ne.s32.totalorder %s49, %s50
      %p61 = scmp.eq.s32.totalorder %s19, 0
      %p62 = por %p60, %p61
      %p63 = scmp.ne.s32.totalorder %s49, %s50
      %p64 = scmp.eq.s32.totalorder %s20, 1
      %p65 = por %p63, %p64
      %p67 = scmp.ne.s32.totalorder %s50, %s66
      %p68 = scmp.eq.s32.totalorder %s20, 0
      %p69 = por %p67, %p68
      %s71 = sadd.s32 %s70, 1
      %p74 = scmp.eq.s32.totalorder %s14, 1
      %p75 = scmp.ne.s32.totalorder %s70, %s72
      %p76 = scmp.eq.s32.totalorder %s14, 0
      %p77 = por %p75, %p76
      %p78 = scmp.ne.s32.totalorder %s70, %s72
      %p79 = scmp.eq.s32.totalorder %s19, 1
      %p80 = por %p78, %p79
      %p81 = scmp.ne.s32.totalorder %s72, %s73
      %p82 = scmp.eq.s32.totalorder %s19, 0
      %p83 = por %p81, %p82
      %p84 = scmp.ne.s32.totalorder %s72, %s73
      %p85 = scmp.eq.s32.totalorder %s20, 1
      %p86 = por %p84, %p85
      %p88 = scmp.ne.s32.totalorder %s73, %s87
      %p89 = scmp.eq.s32.totalorder %s20, 0
      %p90 = por %p88, %p89
      %s91 = ssub.s32 %s21, %s33
      %p92 = scmp.eq.s32.totalorder %s91, 0
      %s94 = sadd.s32 %s93, 1
      %s95 = scalar_select %p92, %s93, %s94
      %p98 = pneg %p92
      %p99 = scmp.eq.s32.totalorder %s14, 1
      %p100 = por %p98, %p99
      %p101 = scmp.ne.s32.totalorder %s93, %s96
      %p102 = scmp.eq.s32.totalorder %s14, 0
      %p103 = por %p101, %p102
      %p104 = scmp.ne.s32.totalorder %s93, %s96
      %p105 = scmp.eq.s32.totalorder %s19, 1
      %p106 = por %p104, %p105
      %p107 = scmp.ne.s32.totalorder %s96, %s97
      %p108 = scmp.eq.s32.totalorder %s19, 0
      %p109 = por %p107, %p108
      %p110 = scmp.ne.s32.totalorder %s96, %s97
      %p111 = scmp.eq.s32.totalorder %s20, 1
      %p112 = por %p110, %p111
      %p114 = scmp.ne.s32.totalorder %s97, %s113
      %p115 = scmp.eq.s32.totalorder %s20, 0
      %p116 = por %p114, %p115
      %s117 = smul.u32 %s22, 2
      %s118 = ssub.s32 0, %s117
      %s119 = smul.u32 %s21, %s118
      %s120 = sadd.s32 %s22, %s119
      %s121 = smul.u32 %s29, 2
      %s122 = ssub.s32 0, %s121
      %s123 = smul.u32 %s33, %s122
      %s124 = sadd.s32 %s29, %s123
      %s125 = ssub.s32 %s21, %s33
      %s126 = ssub.s32 %s120, %s124
      %s127 = sor.u32 %s125, %s126
      %p128 = scmp.eq.s32.totalorder %s127, 0
      %s130 = sadd.s32 %s129, 1
      %s131 = scalar_select %p128, %s129, %s130
      %p134 = pneg %p128
      %p135 = scmp.eq.s32.totalorder %s14, 1
      %p136 = por %p134, %p135
      %p137 = scmp.ne.s32.totalorder %s129, %s132
      %p138 = scmp.eq.s32.totalorder %s14, 0
      %p139 = por %p137, %p138
      %p140 = scmp.ne.s32.totalorder %s129, %s132
      %p141 = scmp.eq.s32.totalorder %s19, 1
      %p142 = por %p140, %p141
      %p143 = scmp.ne.s32.totalorder %s132, %s133
      %p144 = scmp.eq.s32.totalorder %s19, 0
      %p145 = por %p143, %p144
      %p146 = scmp.ne.s32.totalorder %s132, %s133
      %p147 = scmp.eq.s32.totalorder %s20, 1
      %p148 = por %p146, %p147
      %p150 = scmp.ne.s32.totalorder %s133, %s149
      %p151 = scmp.eq.s32.totalorder %s20, 0
      %p152 = por %p150, %p151
      %s153 = ssub.s32 %s21, %s33
      %p154 = scmp.eq.s32.totalorder %s153, 0
      %s156 = sadd.s32 %s155, 1
      %s157 = scalar_select %p154, %s155, %s156
      %p160 = pneg %p154
      %p161 = scmp.eq.s32.totalorder %s14, 1
      %p162 = por %p160, %p161
      %p163 = scmp.ne.s32.totalorder %s155, %s158
      %p164 = scmp.eq.s32.totalorder %s14, 0
      %p165 = por %p163, %p164
      %p166 = scmp.ne.s32.totalorder %s155, %s158
      %p167 = scmp.eq.s32.totalorder %s19, 1
      %p168 = por %p166, %p167
      %p169 = scmp.ne.s32.totalorder %s158, %s159
      %p170 = scmp.eq.s32.totalorder %s19, 0
      %p171 = por %p169, %p170
      %p172 = scmp.ne.s32.totalorder %s158, %s159
      %p173 = scmp.eq.s32.totalorder %s20, 1
      %p174 = por %p172, %p173
      %p176 = scmp.ne.s32.totalorder %s159, %s175
      %p177 = scmp.eq.s32.totalorder %s20, 0
      %p178 = por %p176, %p177
      %p179 = scmp.le.s32.totalorder 1, %s14
      %p180 = scmp.lt.s32.totalorder %s14, 3
      %p181 = pnand %p179, %p180
      %p182 = pneg %p181
      // Predicated region
      $region9: #{rnn_forward.7} parent=5 // pred_check
        _
      $region10: #{rnn_forward.7} parent=5 // pred_check_branch
        %184 = sbr.rel (%p181) target = $region12
      $region11: #{rnn_forward.7} parent=5 // pred_region
        %s185 = ssub.s32 %s14, 1
        // Predicated region
        $region13: #{rnn_forward.7} parent=11 // pred_check
          %p186 = pneg %p83
        $region14: #{rnn_forward.7} parent=11 // pred_check_branch
          %188 = sbr.rel (%p186) target = $region16
        $region15: #{rnn_forward.7} parent=11 // pred_region
          _
        $region16: #{rnn_forward.7} parent=11 // pred_fallthru
          _
      $region12: #{rnn_forward.7} parent=5 // pred_fallthru
        _
      %p189 = scmp.lt.s32.totalorder %s14, 2
      // Predicated region
      $region17: #{rnn_forward.7} parent=5 // pred_check
        %p190 = pneg %p189
      $region18: #{rnn_forward.7} parent=5 // pred_check_branch
        %192 = sbr.rel (%p190) target = $region20
      $region19: #{rnn_forward.7} parent=5 // pred_region
        // Predicated region
        $region21: #{rnn_forward.7} parent=19 // pred_check
          %p193 = pneg %p56
        $region22: #{rnn_forward.7} parent=19 // pred_check_branch
          %195 = sbr.rel (%p193) target = $region24
        $region23: #{rnn_forward.7} parent=19 // pred_region
          %s196 = smul.u32 %s22, 2
          %s197 = ssub.s32 0, %s196
          %s198 = smul.u32 %s21, %s197
          %s199 = sadd.s32 %s22, %s198
          %s200 = smul.u32 8, %s199
          %p201 = scmp.lt.s32.totalorder %s21, 1
          %s202 = scalar_select %p201, %s21, 1
          %p203 = scmp.lt.s32.totalorder %s200, 7
          %s204 = scalar_select %p203, %s200, 7
          %s205 = smul.addr %s202, 8
          %s206 = sadd.s32 %s204, %s205
          %s207 = smul.addr %s206, 4
          %s208 = scalar_lea.vmem %s0, %s207
          %s209 = smul.u32 %s22, 2
          %s210 = ssub.s32 0, %s209
          %s211 = smul.u32 %s21, %s210
          %s212 = sadd.s32 %s22, %s211
          %s213 = smul.u32 8, %s212
        $region24: #{rnn_forward.7} parent=19 // pred_fallthru
          _
        // Predicated region
        $region25: #{rnn_forward.7} parent=19 // pred_check
          %p214 = pneg %p103
        $region26: #{rnn_forward.7} parent=19 // pred_check_branch
          %216 = sbr.rel (%p214) target = $region28
        $region27: #{rnn_forward.7} parent=19 // pred_region
          %p217 = scmp.lt.s32.totalorder %s21, 1
          %s218 = scalar_select %p217, %s21, 1
          %s219 = smul.addr %s218, 4
          %s220 = smul.addr %s219, 4
          %s221 = scalar_lea.vmem %s2, %s220
        $region28: #{rnn_forward.7} parent=19 // pred_fallthru
          _
      $region20: #{rnn_forward.7} parent=5 // pred_fallthru
        _
      %p222 = scmp.le.s32.totalorder 1, %s14
      %p223 = scmp.lt.s32.totalorder %s14, 3
      %p224 = pnand %p222, %p223
      %p225 = pneg %p224
      // Predicated region
      $region29: #{rnn_forward.7} parent=5 // pred_check
        _
      $region30: #{rnn_forward.7} parent=5 // pred_check_branch
        %227 = sbr.rel (%p224) target = $region32
      $region31: #{rnn_forward.7} parent=5 // pred_region
        %s228 = ssub.s32 %s14, 1
        %s229 = smul.u32 %s24, 2
        %s230 = ssub.s32 0, %s229
        %s231 = smul.u32 %s23, %s230
        %s232 = sadd.s32 %s24, %s231
        %s233 = smul.u32 8, %s232
        %p234 = scmp.lt.s32.totalorder %s23, 1
        %s235 = scalar_select %p234, %s23, 1
        %p236 = scmp.lt.s32.totalorder %s233, 7
        %s237 = scalar_select %p236, %s233, 7
        %s238 = smul.addr %s235, 8
        %s239 = sadd.s32 %s237, %s238
        %s240 = smul.addr %s239, 4
        %s241 = scalar_lea.vmem %s0, %s240
        %p242 = pneg %p62
        %p243 = pneg %p59
        %p244 = pneg %p83
        %p245 = pneg %p80
        %p246 = scmp.lt.s32.totalorder %s23, 1
        %s247 = scalar_select %p246, %s23, 1
        %s248 = smul.addr %s247, 4
        %s249 = smul.addr %s248, 4
        %s250 = scalar_lea.vmem %s2, %s249
        %p251 = pneg %p109
        %p252 = pneg %p106
        %p253 = pneg %p145
        %p254 = pneg %p142
        %s255 = sand.u32 %s132, 1
        %s256 = scalar_lea.sflag [#allocation5], %s255
        %s257 = sand.u32 %s132, 1
        %s258 = smul.addr %s257, 32
        %s259 = scalar_lea.vmem [#allocation4], %s258
        %p260 = pneg %p171
        %p261 = pneg %p168
        %p262 = scmp.lt.s32.totalorder %s23, 1
        %s263 = scalar_select %p262, %s23, 1
        %s264 = smul.addr %s263, 8
        %s265 = scalar_lea.vmem %s4, %s264
        %s266 = smul.u32 %s24, 2
        %s267 = ssub.s32 0, %s266
        %s268 = smul.u32 %s23, %s267
        %s269 = sadd.s32 %s24, %s268
        %s270 = smul.u32 8, %s269
        %p271 = scmp.lt.s32.totalorder %s23, 1
        %s272 = scalar_select %p271, %s23, 1
        %p273 = scmp.lt.s32.totalorder %s270, 7
        %s274 = scalar_select %p273, %s270, 7
        %s275 = smul.addr %s272, 8
        %s276 = sadd.s32 %s274, %s275
        %s277 = smul.addr %s276, 4
        %s278 = scalar_lea.vmem %s0, %s277
        %s279 = smul.u32 %s24, 2
        %s280 = ssub.s32 0, %s279
        %s281 = smul.u32 %s23, %s280
        %s282 = sadd.s32 %s24, %s281
        %s283 = smul.u32 8, %s282
        %p284 = scmp.lt.s32.totalorder %s23, 1
        %s285 = scalar_select %p284, %s23, 1
        %s286 = smul.addr %s285, 4
        %s287 = smul.addr %s286, 4
        %s288 = scalar_lea.vmem %s2, %s287
        %s289 = smul.u32 %s24, 2
        %s290 = ssub.s32 0, %s289
        %s291 = smul.u32 %s23, %s290
        %s292 = sadd.s32 %s24, %s291
        %s293 = smul.u32 8, %s292
        %p294 = scmp.lt.s32.totalorder %s23, 1
        %s295 = scalar_select %p294, %s23, 1
        %s296 = smul.addr %s295, 8
        %s297 = scalar_lea.vmem %s4, %s296
        %p299 = scmp.eq.s32.totalorder %s24, 0
        // Predicated region
        $region33: #{rnn_forward.7} parent=31 // pred_check
          %p300 = pneg %p299
        $region34: #{rnn_forward.7} parent=31 // pred_check_branch
          %302 = sbr.rel (%p300) target = $region36
        $region35: #{rnn_forward.7} parent=31 // pred_region
          %vm303 = vcmask 257024
          %304 = vst.msk [vmem:[#allocation2] sm:$0xf] %vm303, 0
          %vm305 = vcmask 261120
          %306 = vst.msk [vmem:[#allocation3] sm:$0xff] %vm305, 0.0
        $region36: #{rnn_forward.7} parent=31 // pred_fallthru
          _
        %v307 = vld [vmem:[%s1] sm:$0xff]
        %v308 = vld [vmem:[%s288] sm:$0xf]
        %v309 = vld [vmem:[%s288 + $0x4] sm:$0xf]
        %v310 = vld [vmem:[%s288 + $0x8] sm:$0xf]
        %v311 = vld [vmem:[%s288 + $0xc] sm:$0xf]
        %s312 = smul.u32 %s23, 7
        %s313 = smul.u32 %s23, 2
        %s314 = ssub.s32 1, %s313
        %s315 = smul.u32 %s24, 2
        %s316 = ssub.s32 0, %s315
        %s317 = smul.u32 %s23, %s316
        %s318 = sadd.s32 %s24, %s317
        %s319 = smul.u32 %s318, 8
        %v320 = vld [vmem:[#allocation2] sm:$0xf]
        %v321 = vld [vmem:[#allocation3] sm:$0xff]
        %s322 = sadd.s32 %s319, %s312
        %s323 = smul.addr %s312, 4
        %s324 = scalar_lea.vmem %s278, %s323
        %v325 = vld [vmem:[%s324] sm:$0xf]
        %v326 = vunpack.c.l.bf16 %v325
        %v331 = vunpack.c.l.b16 %v308
        %v332 = vunpack.c.l.b16 %v309
        %v333 = vunpack.c.l.b16 %v310
        %v334 = vunpack.c.l.b16 %v311
        %v335 = vpack.c.b16 %v332, %v331
        %v336 = vpack.c.b16 %v334, %v333
        %vm339 = vcmask 261120
        %v341 = vsel %vm339, %v320, 0
        %343 = vmatprep.subr.bf16.mxu0 0
        %344 = vmatpush1.bf16.msra.mxu0 %v335
        %345 = vmatprep.subr.bf16.mxu0 0
        %346 = vmatpush1.bf16.msra.mxu0 %v336
        %347 = vmatprep.subr.bf16.mxu0 0
        %348 = vmatpush1.bf16.msra.mxu0 0
        %349 = vmatprep.subr.bf16.mxu0 0
        %350 = vmatpush1.bf16.msra.mxu0 0
        %351 = vmatprep.subr.bf16.mxu0 0
        %352 = vmatpush1.bf16.msra.mxu0 0
        %353 = vmatprep.subr.bf16.mxu0 0
        %354 = vmatpush1.bf16.msra.mxu0 0
        %355 = vmatprep.subr.bf16.mxu0 0
        %356 = vmatpush1.bf16.msra.mxu0 0
        %357 = vmatprep.subr.bf16.mxu0 0
        %358 = vmatpush1.bf16.msra.mxu0 0
        %359 = vmatprep.subr.bf16.mxu0 0
        %360 = vmatpush1.bf16.msra.mxu0 0
        %361 = vmatprep.subr.bf16.mxu0 0
        %362 = vmatpush1.bf16.msra.mxu0 0
        %363 = vmatprep.subr.bf16.mxu0 0
        %364 = vmatpush1.bf16.msra.mxu0 0
        %365 = vmatprep.subr.bf16.mxu0 0
        %366 = vmatpush1.bf16.msra.mxu0 0
        %367 = vmatprep.subr.bf16.mxu0 0
        %368 = vmatpush1.bf16.msra.mxu0 0
        %369 = vmatprep.subr.bf16.mxu0 0
        %370 = vmatpush1.bf16.msra.mxu0 0
        %371 = vmatprep.subr.bf16.mxu0 0
        %372 = vmatpush1.bf16.msra.mxu0 0
        %373 = vmatprep.subr.bf16.mxu0 0
        %374 = vmatpush1.bf16.msra.mxu0 0
        %375 = vmatprep.mubr.bf16.mxu0 0
        %376 = vmatmul.mubr.bf16.gmra.mrb[0].mxu0 %v341
        %v377 = vpop.f32.mrb[0].mxu0
        %v378 = vadd.f32 0.0, %v377
        %v379 = vpop.f32.mrb[0].mxu0
        %v380 = vpop.f32.mrb[0].mxu0
        %v381 = vpop.f32.mrb[0].mxu0
        %382 = vdwg.mxu0
        %v383 = vadd.f32 %v326, %v378
        %v384 = vxor.u32 %v383, 2147483648
        %v385 = vmul.f32 %v384, 1.442695
        %v386 = vpow.pop %v385
        %v387 = vadd.f32 %v386, 1.0
        %v388 = vrcp.pop %v387
        %v389 = vmul.f32 1.0, %v388
        %v390 = vtanh.pop %v383
        %392 = vrot.lane.b32.xlu0 %v321, 32
        %v393 = vpop.permute.xlu0 %392
        %v395 = vmul.f32 %v389, %v393
        %397 = vrot.lane.b32.xlu0 %v390, 64
        %v398 = vpop.permute.xlu0 %397
        %v400 = vmul.f32 %v389, %v398
        %402 = vrot.lane.b32.xlu0 %v400, 32
        %v403 = vpop.permute.xlu0 %402
        %v405 = vadd.f32 %v395, %v403
        %v406 = vtanh.pop %v405
        %408 = vrot.lane.b32.xlu0 %v406, 64
        %v409 = vpop.permute.xlu0 %408
        %v411 = vmul.f32 %v389, %v409
        %v412 = vpack.c.bf16 %v411, %v411
        %v413 = vstv %s322
        %vm414 = vcmp.lt.s32.totalorder %v413, %v307
        %v415 = vsel %vm414, 1, 0
        %416 = vset.pattern.permute.xlu0 0
        %417 = vperm.xlu0 %416, %v415
        %v418 = vpop.permute.xlu0 %417
        %vm419 = vcmp.eq.s32.totalorder %v418, 1
        %vm420 = vmpackc.low %vm419, %vm419
        %v421 = vsel %vm420, %v412, 0
        %v423 = vunpack.c.l.b16 %v421
        %v424 = vpack.c.b16 %v423, %v423
        %425 = vrot.lane.b32.xlu0 %v424, 32
        %v426 = vpop.permute.xlu0 %425
        %s428 = smul.addr %s312, 4
        %s429 = scalar_lea.vmem %s259, %s428 [#allocation4]
        %vm430 = vcmask 257024
        %431 = vst.msk [vmem:[%s429] sm:$0xf] %vm430, %v426
        %v433 = vunpack.c.l.b16 %v320
        %v434 = vpack.c.b16 %v433, %v433
        %435 = vrot.lane.b32.xlu0 %v434, 96
        %v436 = vpop.permute.xlu0 %435
        %v438 = vsel %vm420, %v412, %v436
        %v439 = vsel %vm419, %v405, %v393
        %s440 = sadd.s32 %s312, %s314
        %s441 = sadd.s32 %s319, %s440
        %s442 = smul.addr %s440, 4
        %s443 = scalar_lea.vmem %s278, %s442
        %v444 = vld [vmem:[%s443] sm:$0xf]
        %v445 = vunpack.c.l.bf16 %v444
        %447 = vrot.lane.b32.xlu0 %v438, 32
        %v448 = vpop.permute.xlu0 %447
        %v450 = vsel %vm339, %v448, 0
        %452 = vmatprep.subr.bf16.mxu0 0
        %453 = vmatpush1.bf16.msra.mxu0 %v335
        %454 = vmatprep.subr.bf16.mxu0 0
        %455 = vmatpush1.bf16.msra.mxu0 %v336
        %456 = vmatprep.subr.bf16.mxu0 0
        %457 = vmatpush1.bf16.msra.mxu0 0
        %458 = vmatprep.subr.bf16.mxu0 0
        %459 = vmatpush1.bf16.msra.mxu0 0
        %460 = vmatprep.subr.bf16.mxu0 0
        %461 = vmatpush1.bf16.msra.mxu0 0
        %462 = vmatprep.subr.bf16.mxu0 0
        %463 = vmatpush1.bf16.msra.mxu0 0
        %464 = vmatprep.subr.bf16.mxu0 0
        %465 = vmatpush1.bf16.msra.mxu0 0
        %466 = vmatprep.subr.bf16.mxu0 0
        %467 = vmatpush1.bf16.msra.mxu0 0
        %468 = vmatprep.subr.bf16.mxu0 0
        %469 = vmatpush1.bf16.msra.mxu0 0
        %470 = vmatprep.subr.bf16.mxu0 0
        %471 = vmatpush1.bf16.msra.mxu0 0
        %472 = vmatprep.subr.bf16.mxu0 0
        %473 = vmatpush1.bf16.msra.mxu0 0
        %474 = vmatprep.subr.bf16.mxu0 0
        %475 = vmatpush1.bf16.msra.mxu0 0
        %476 = vmatprep.subr.bf16.mxu0 0
        %477 = vmatpush1.bf16.msra.mxu0 0
        %478 = vmatprep.subr.bf16.mxu0 0
        %479 = vmatpush1.bf16.msra.mxu0 0
        %480 = vmatprep.subr.bf16.mxu0 0
        %481 = vmatpush1.bf16.msra.mxu0 0
        %482 = vmatprep.subr.bf16.mxu0 0
        %483 = vmatpush1.bf16.msra.mxu0 0
        %484 = vmatprep.mubr.bf16.mxu0 0
        %485 = vmatmul.mubr.bf16.gmra.mrb[0].mxu0 %v450
        %v486 = vpop.f32.mrb[0].mxu0
        %v487 = vadd.f32 0.0, %v486
        %v488 = vpop.f32.mrb[0].mxu0
        %v489 = vpop.f32.mrb[0].mxu0
        %v490 = vpop.f32.mrb[0].mxu0
        %491 = vdwg.mxu0
        %v492 = vadd.f32 %v445, %v487
        %v493 = vxor.u32 %v492, 2147483648
        %v494 = vmul.f32 %v493, 1.442695
        %v495 = vpow.pop %v494
        %v496 = vadd.f32 %v495, 1.0
        %v497 = vrcp.pop %v496
        %v498 = vmul.f32 1.0, %v497
        %v499 = vtanh.pop %v492
        %v500 = vmul.f32 %v498, %v439
        %502 = vrot.lane.b32.xlu0 %v499, 64
        %v503 = vpop.permute.xlu0 %502
        %v505 = vmul.f32 %v498, %v503
        %507 = vrot.lane.b32.xlu0 %v505, 32
        %v508 = vpop.permute.xlu0 %507
        %v510 = vadd.f32 %v500, %v508
        %v511 = vtanh.pop %v510
        %513 = vrot.lane.b32.xlu0 %v511, 64
        %v514 = vpop.permute.xlu0 %513
        %v516 = vmul.f32 %v498, %v514
        %v517 = vpack.c.bf16 %v516, %v516
        %v518 = vstv %s441
        %vm519 = vcmp.lt.s32.totalorder %v518, %v307
        %v520 = vsel %vm519, 1, 0
        %521 = vset.pattern.permute.xlu0 0
        %522 = vperm.xlu0 %521, %v520
        %v523 = vpop.permute.xlu0 %522
        %vm524 = vcmp.eq.s32.totalorder %v523, 1
        %vm525 = vmpackc.low %vm524, %vm524
        %v526 = vsel %vm525, %v517, 0
        %v528 = vunpack.c.l.b16 %v526
        %v529 = vpack.c.b16 %v528, %v528
        %530 = vrot.lane.b32.xlu0 %v529, 32
        %v531 = vpop.permute.xlu0 %530
        %s533 = smul.addr %s440, 4
        %s534 = scalar_lea.vmem %s259, %s533 [#allocation4]
        %535 = vst.msk [vmem:[%s534] sm:$0xf] %vm430, %v531
        %v536 = vsel %vm525, %v517, %v438
        %v537 = vsel %vm524, %v510, %v439
        %s538 = smul.u32 %s314, 2
        %s539 = sadd.s32 %s312, %s538
        %s540 = sadd.s32 %s319, %s539
        %s541 = smul.addr %s539, 4
        %s542 = scalar_lea.vmem %s278, %s541
        %v543 = vld [vmem:[%s542] sm:$0xf]
        %v544 = vunpack.c.l.bf16 %v543
        %546 = vrot.lane.b32.xlu0 %v536, 32
        %v547 = vpop.permute.xlu0 %546
        %v549 = vsel %vm339, %v547, 0
        %551 = vmatprep.subr.bf16.mxu0 0
        %552 = vmatpush1.bf16.msra.mxu0 %v335
        %553 = vmatprep.subr.bf16.mxu0 0
        %554 = vmatpush1.bf16.msra.mxu0 %v336
        %555 = vmatprep.subr.bf16.mxu0 0
        %556 = vmatpush1.bf16.msra.mxu0 0
        %557 = vmatprep.subr.bf16.mxu0 0
        %558 = vmatpush1.bf16.msra.mxu0 0
        %559 = vmatprep.subr.bf16.mxu0 0
        %560 = vmatpush1.bf16.msra.mxu0 0
        %561 = vmatprep.subr.bf16.mxu0 0
        %562 = vmatpush1.bf16.msra.mxu0 0
        %563 = vmatprep.subr.bf16.mxu0 0
        %564 = vmatpush1.bf16.msra.mxu0 0
        %565 = vmatprep.subr.bf16.mxu0 0
        %566 = vmatpush1.bf16.msra.mxu0 0
        %567 = vmatprep.subr.bf16.mxu0 0
        %568 = vmatpush1.bf16.msra.mxu0 0
        %569 = vmatprep.subr.bf16.mxu0 0
        %570 = vmatpush1.bf16.msra.mxu0 0
        %571 = vmatprep.subr.bf16.mxu0 0
        %572 = vmatpush1.bf16.msra.mxu0 0
        %573 = vmatprep.subr.bf16.mxu0 0
        %574 = vmatpush1.bf16.msra.mxu0 0
        %575 = vmatprep.subr.bf16.mxu0 0
        %576 = vmatpush1.bf16.msra.mxu0 0
        %577 = vmatprep.subr.bf16.mxu0 0
        %578 = vmatpush1.bf16.msra.mxu0 0
        %579 = vmatprep.subr.bf16.mxu0 0
        %580 = vmatpush1.bf16.msra.mxu0 0
        %581 = vmatprep.subr.bf16.mxu0 0
        %582 = vmatpush1.bf16.msra.mxu0 0
        %583 = vmatprep.mubr.bf16.mxu0 0
        %584 = vmatmul.mubr.bf16.gmra.mrb[0].mxu0 %v549
        %v585 = vpop.f32.mrb[0].mxu0
        %v586 = vadd.f32 0.0, %v585
        %v587 = vpop.f32.mrb[0].mxu0
        %v588 = vpop.f32.mrb[0].mxu0
        %v589 = vpop.f32.mrb[0].mxu0
        %590 = vdwg.mxu0
        %v591 = vadd.f32 %v544, %v586
        %v592 = vxor.u32 %v591, 2147483648
        %v593 = vmul.f32 %v592, 1.442695
        %v594 = vpow.pop %v593
        %v595 = vadd.f32 %v594, 1.0
        %v596 = vrcp.pop %v595
        %v597 = vmul.f32 1.0, %v596
        %v598 = vtanh.pop %v591
        %v599 = vmul.f32 %v597, %v537
        %601 = vrot.lane.b32.xlu0 %v598, 64
        %v602 = vpop.permute.xlu0 %601
        %v604 = vmul.f32 %v597, %v602
        %606 = vrot.lane.b32.xlu0 %v604, 32
        %v607 = vpop.permute.xlu0 %606
        %v609 = vadd.f32 %v599, %v607
        %v610 = vtanh.pop %v609
        %612 = vrot.lane.b32.xlu0 %v610, 64
        %v613 = vpop.permute.xlu0 %612
        %v615 = vmul.f32 %v597, %v613
        %v616 = vpack.c.bf16 %v615, %v615
        %v617 = vstv %s540
        %vm618 = vcmp.lt.s32.totalorder %v617, %v307
        %v619 = vsel %vm618, 1, 0
        %620 = vset.pattern.permute.xlu0 0
        %621 = vperm.xlu0 %620, %v619
        %v622 = vpop.permute.xlu0 %621
        %vm623 = vcmp.eq.s32.totalorder %v622, 1
        %vm624 = vmpackc.low %vm623, %vm623
        %v625 = vsel %vm624, %v616, 0
        %v627 = vunpack.c.l.b16 %v625
        %v628 = vpack.c.b16 %v627, %v627
        %629 = vrot.lane.b32.xlu0 %v628, 32
        %v630 = vpop.permute.xlu0 %629
        %s632 = smul.addr %s539, 4
        %s633 = scalar_lea.vmem %s259, %s632 [#allocation4]
        %634 = vst.msk [vmem:[%s633] sm:$0xf] %vm430, %v630
        %v635 = vsel %vm624, %v616, %v536
        %v636 = vsel %vm623, %v609, %v537
        %s637 = smul.u32 %s314, 3
        %s638 = sadd.s32 %s312, %s637
        %s639 = sadd.s32 %s319, %s638
        %s640 = smul.addr %s638, 4
        %s641 = scalar_lea.vmem %s278, %s640
        %v642 = vld [vmem:[%s641] sm:$0xf]
        %v643 = vunpack.c.l.bf16 %v642
        %645 = vrot.lane.b32.xlu0 %v635, 32
        %v646 = vpop.permute.xlu0 %645
        %v648 = vsel %vm339, %v646, 0
        %650 = vmatprep.subr.bf16.mxu0 0
        %651 = vmatpush1.bf16.msra.mxu0 %v335
        %652 = vmatprep.subr.bf16.mxu0 0
        %653 = vmatpush1.bf16.msra.mxu0 %v336
        %654 = vmatprep.subr.bf16.mxu0 0
        %655 = vmatpush1.bf16.msra.mxu0 0
        %656 = vmatprep.subr.bf16.mxu0 0
        %657 = vmatpush1.bf16.msra.mxu0 0
        %658 = vmatprep.subr.bf16.mxu0 0
        %659 = vmatpush1.bf16.msra.mxu0 0
        %660 = vmatprep.subr.bf16.mxu0 0
        %661 = vmatpush1.bf16.msra.mxu0 0
        %662 = vmatprep.subr.bf16.mxu0 0
        %663 = vmatpush1.bf16.msra.mxu0 0
        %664 = vmatprep.subr.bf16.mxu0 0
        %665 = vmatpush1.bf16.msra.mxu0 0
        %666 = vmatprep.subr.bf16.mxu0 0
        %667 = vmatpush1.bf16.msra.mxu0 0
        %668 = vmatprep.subr.bf16.mxu0 0
        %669 = vmatpush1.bf16.msra.mxu0 0
        %670 = vmatprep.subr.bf16.mxu0 0
        %671 = vmatpush1.bf16.msra.mxu0 0
        %672 = vmatprep.subr.bf16.mxu0 0
        %673 = vmatpush1.bf16.msra.mxu0 0
        %674 = vmatprep.subr.bf16.mxu0 0
        %675 = vmatpush1.bf16.msra.mxu0 0
        %676 = vmatprep.subr.bf16.mxu0 0
        %677 = vmatpush1.bf16.msra.mxu0 0
        %678 = vmatprep.subr.bf16.mxu0 0
        %679 = vmatpush1.bf16.msra.mxu0 0
        %680 = vmatprep.subr.bf16.mxu0 0
        %681 = vmatpush1.bf16.msra.mxu0 0
        %682 = vmatprep.mubr.bf16.mxu0 0
        %683 = vmatmul.mubr.bf16.gmra.mrb[0].mxu0 %v648
        %v684 = vpop.f32.mrb[0].mxu0
        %v685 = vadd.f32 0.0, %v684
        %v686 = vpop.f32.mrb[0].mxu0
        %v687 = vpop.f32.mrb[0].mxu0
        %v688 = vpop.f32.mrb[0].mxu0
        %689 = vdwg.mxu0
        %v690 = vadd.f32 %v643, %v685
        %v691 = vxor.u32 %v690, 2147483648
        %v692 = vmul.f32 %v691, 1.442695
        %v693 = vpow.pop %v692
        %v694 = vadd.f32 %v693, 1.0
        %v695 = vrcp.pop %v694
        %v696 = vmul.f32 1.0, %v695
        %v697 = vtanh.pop %v690
        %v698 = vmul.f32 %v696, %v636
        %700 = vrot.lane.b32.xlu0 %v697, 64
        %v701 = vpop.permute.xlu0 %700
        %v703 = vmul.f32 %v696, %v701
        %705 = vrot.lane.b32.xlu0 %v703, 32
        %v706 = vpop.permute.xlu0 %705
        %v708 = vadd.f32 %v698, %v706
        %v709 = vtanh.pop %v708
        %711 = vrot.lane.b32.xlu0 %v709, 64
        %v712 = vpop.permute.xlu0 %711
        %v714 = vmul.f32 %v696, %v712
        %v715 = vpack.c.bf16 %v714, %v714
        %v716 = vstv %s639
        %vm717 = vcmp.lt.s32.totalorder %v716, %v307
        %v718 = vsel %vm717, 1, 0
        %719 = vset.pattern.permute.xlu0 0
        %720 = vperm.xlu0 %719, %v718
        %v721 = vpop.permute.xlu0 %720
        %vm722 = vcmp.eq.s32.totalorder %v721, 1
        %vm723 = vmpackc.low %vm722, %vm722
        %v724 = vsel %vm723, %v715, 0
        %v726 = vunpack.c.l.b16 %v724
        %v727 = vpack.c.b16 %v726, %v726
        %728 = vrot.lane.b32.xlu0 %v727, 32
        %v729 = vpop.permute.xlu0 %728
        %s731 = smul.addr %s638, 4
        %s732 = scalar_lea.vmem %s259, %s731 [#allocation4]
        %733 = vst.msk [vmem:[%s732] sm:$0xf] %vm430, %v729
        %v734 = vsel %vm723, %v715, %v635
        %v735 = vsel %vm722, %v708, %v636
        %s736 = smul.u32 %s314, 4
        %s737 = sadd.s32 %s312, %s736
        %s738 = sadd.s32 %s319, %s737
        %s739 = smul.addr %s737, 4
        %s740 = scalar_lea.vmem %s278, %s739
        %v741 = vld [vmem:[%s740] sm:$0xf]
        %v742 = vunpack.c.l.bf16 %v741
        %744 = vrot.lane.b32.xlu0 %v734, 32
        %v745 = vpop.permute.xlu0 %744
        %v747 = vsel %vm339, %v745, 0
        %749 = vmatprep.subr.bf16.mxu0 0
        %750 = vmatpush1.bf16.msra.mxu0 %v335
        %751 = vmatprep.subr.bf16.mxu0 0
        %752 = vmatpush1.bf16.msra.mxu0 %v336
        %753 = vmatprep.subr.bf16.mxu0 0
        %754 = vmatpush1.bf16.msra.mxu0 0
        %755 = vmatprep.subr.bf16.mxu0 0
        %756 = vmatpush1.bf16.msra.mxu0 0
        %757 = vmatprep.subr.bf16.mxu0 0
        %758 = vmatpush1.bf16.msra.mxu0 0
        %759 = vmatprep.subr.bf16.mxu0 0
        %760 = vmatpush1.bf16.msra.mxu0 0
        %761 = vmatprep.subr.bf16.mxu0 0
        %762 = vmatpush1.bf16.msra.mxu0 0
        %763 = vmatprep.subr.bf16.mxu0 0
        %764 = vmatpush1.bf16.msra.mxu0 0
        %765 = vmatprep.subr.bf16.mxu0 0
        %766 = vmatpush1.bf16.msra.mxu0 0
        %767 = vmatprep.subr.bf16.mxu0 0
        %768 = vmatpush1.bf16.msra.mxu0 0
        %769 = vmatprep.subr.bf16.mxu0 0
        %770 = vmatpush1.bf16.msra.mxu0 0
        %771 = vmatprep.subr.bf16.mxu0 0
        %772 = vmatpush1.bf16.msra.mxu0 0
        %773 = vmatprep.subr.bf16.mxu0 0
        %774 = vmatpush1.bf16.msra.mxu0 0
        %775 = vmatprep.subr.bf16.mxu0 0
        %776 = vmatpush1.bf16.msra.mxu0 0
        %777 = vmatprep.subr.bf16.mxu0 0
        %778 = vmatpush1.bf16.msra.mxu0 0
        %779 = vmatprep.subr.bf16.mxu0 0
        %780 = vmatpush1.bf16.msra.mxu0 0
        %781 = vmatprep.mubr.bf16.mxu0 0
        %782 = vmatmul.mubr.bf16.gmra.mrb[0].mxu0 %v747
        %v783 = vpop.f32.mrb[0].mxu0
        %v784 = vadd.f32 0.0, %v783
        %v785 = vpop.f32.mrb[0].mxu0
        %v786 = vpop.f32.mrb[0].mxu0
        %v787 = vpop.f32.mrb[0].mxu0
        %788 = vdwg.mxu0
        %v789 = vadd.f32 %v742, %v784
        %v790 = vxor.u32 %v789, 2147483648
        %v791 = vmul.f32 %v790, 1.442695
        %v792 = vpow.pop %v791
        %v793 = vadd.f32 %v792, 1.0
        %v794 = vrcp.pop %v793
        %v795 = vmul.f32 1.0, %v794
        %v796 = vtanh.pop %v789
        %v797 = vmul.f32 %v795, %v735
        %799 = vrot.lane.b32.xlu0 %v796, 64
        %v800 = vpop.permute.xlu0 %799
        %v802 = vmul.f32 %v795, %v800
        %804 = vrot.lane.b32.xlu0 %v802, 32
        %v805 = vpop.permute.xlu0 %804
        %v807 = vadd.f32 %v797, %v805
        %v808 = vtanh.pop %v807
        %810 = vrot.lane.b32.xlu0 %v808, 64
        %v811 = vpop.permute.xlu0 %810
        %v813 = vmul.f32 %v795, %v811
        %v814 = vpack.c.bf16 %v813, %v813
        %v815 = vstv %s738
        %vm816 = vcmp.lt.s32.totalorder %v815, %v307
        %v817 = vsel %vm816, 1, 0
        %818 = vset.pattern.permute.xlu0 0
        %819 = vperm.xlu0 %818, %v817
        %v820 = vpop.permute.xlu0 %819
        %vm821 = vcmp.eq.s32.totalorder %v820, 1
        %vm822 = vmpackc.low %vm821, %vm821
        %v823 = vsel %vm822, %v814, 0
        %v825 = vunpack.c.l.b16 %v823
        %v826 = vpack.c.b16 %v825, %v825
        %827 = vrot.lane.b32.xlu0 %v826, 32
        %v828 = vpop.permute.xlu0 %827
        %s830 = smul.addr %s737, 4
        %s831 = scalar_lea.vmem %s259, %s830 [#allocation4]
        %832 = vst.msk [vmem:[%s831] sm:$0xf] %vm430, %v828
        %v833 = vsel %vm822, %v814, %v734
        %v834 = vsel %vm821, %v807, %v735
        %s835 = smul.u32 %s314, 5
        %s836 = sadd.s32 %s312, %s835
        %s837 = sadd.s32 %s319, %s836
        %s838 = smul.addr %s836, 4
        %s839 = scalar_lea.vmem %s278, %s838
        %v840 = vld [vmem:[%s839] sm:$0xf]
        %v841 = vunpack.c.l.bf16 %v840
        %843 = vrot.lane.b32.xlu0 %v833, 32
        %v844 = vpop.permute.xlu0 %843
        %v846 = vsel %vm339, %v844, 0
        %848 = vmatprep.subr.bf16.mxu0 0
        %849 = vmatpush1.bf16.msra.mxu0 %v335
        %850 = vmatprep.subr.bf16.mxu0 0
        %851 = vmatpush1.bf16.msra.mxu0 %v336
        %852 = vmatprep.subr.bf16.mxu0 0
        %853 = vmatpush1.bf16.msra.mxu0 0
        %854 = vmatprep.subr.bf16.mxu0 0
        %855 = vmatpush1.bf16.msra.mxu0 0
        %856 = vmatprep.subr.bf16.mxu0 0
        %857 = vmatpush1.bf16.msra.mxu0 0
        %858 = vmatprep.subr.bf16.mxu0 0
        %859 = vmatpush1.bf16.msra.mxu0 0
        %860 = vmatprep.subr.bf16.mxu0 0
        %861 = vmatpush1.bf16.msra.mxu0 0
        %862 = vmatprep.subr.bf16.mxu0 0
        %863 = vmatpush1.bf16.msra.mxu0 0
        %864 = vmatprep.subr.bf16.mxu0 0
        %865 = vmatpush1.bf16.msra.mxu0 0
        %866 = vmatprep.subr.bf16.mxu0 0
        %867 = vmatpush1.bf16.msra.mxu0 0
        %868 = vmatprep.subr.bf16.mxu0 0
        %869 = vmatpush1.bf16.msra.mxu0 0
        %870 = vmatprep.subr.bf16.mxu0 0
        %871 = vmatpush1.bf16.msra.mxu0 0
        %872 = vmatprep.subr.bf16.mxu0 0
        %873 = vmatpush1.bf16.msra.mxu0 0
        %874 = vmatprep.subr.bf16.mxu0 0
        %875 = vmatpush1.bf16.msra.mxu0 0
        %876 = vmatprep.subr.bf16.mxu0 0
        %877 = vmatpush1.bf16.msra.mxu0 0
        %878 = vmatprep.subr.bf16.mxu0 0
        %879 = vmatpush1.bf16.msra.mxu0 0
        %880 = vmatprep.mubr.bf16.mxu0 0
        %881 = vmatmul.mubr.bf16.gmra.mrb[0].mxu0 %v846
        %v882 = vpop.f32.mrb[0].mxu0
        %v883 = vadd.f32 0.0, %v882
        %v884 = vpop.f32.mrb[0].mxu0
        %v885 = vpop.f32.mrb[0].mxu0
        %v886 = vpop.f32.mrb[0].mxu0
        %887 = vdwg.mxu0
        %v888 = vadd.f32 %v841, %v883
        %v889 = vxor.u32 %v888, 2147483648
        %v890 = vmul.f32 %v889, 1.442695
        %v891 = vpow.pop %v890
        %v892 = vadd.f32 %v891, 1.0
        %v893 = vrcp.pop %v892
        %v894 = vmul.f32 1.0, %v893
        %v895 = vtanh.pop %v888
        %v896 = vmul.f32 %v894, %v834
        %898 = vrot.lane.b32.xlu0 %v895, 64
        %v899 = vpop.permute.xlu0 %898
        %v901 = vmul.f32 %v894, %v899
        %903 = vrot.lane.b32.xlu0 %v901, 32
        %v904 = vpop.permute.xlu0 %903
        %v906 = vadd.f32 %v896, %v904
        %v907 = vtanh.pop %v906
        %909 = vrot.lane.b32.xlu0 %v907, 64
        %v910 = vpop.permute.xlu0 %909
        %v912 = vmul.f32 %v894, %v910
        %v913 = vpack.c.bf16 %v912, %v912
        %v914 = vstv %s837
        %vm915 = vcmp.lt.s32.totalorder %v914, %v307
        %v916 = vsel %vm915, 1, 0
        %917 = vset.pattern.permute.xlu0 0
        %918 = vperm.xlu0 %917, %v916
        %v919 = vpop.permute.xlu0 %918
        %vm920 = vcmp.eq.s32.totalorder %v919, 1
        %vm921 = vmpackc.low %vm920, %vm920
        %v922 = vsel %vm921, %v913, 0
        %v924 = vunpack.c.l.b16 %v922
        %v925 = vpack.c.b16 %v924, %v924
        %926 = vrot.lane.b32.xlu0 %v925, 32
        %v927 = vpop.permute.xlu0 %926
        %s929 = smul.addr %s836, 4
        %s930 = scalar_lea.vmem %s259, %s929 [#allocation4]
        %931 = vst.msk [vmem:[%s930] sm:$0xf] %vm430, %v927
        %v932 = vsel %vm921, %v913, %v833
        %v933 = vsel %vm920, %v906, %v834
        %s934 = smul.u32 %s314, 6
        %s935 = sadd.s32 %s312, %s934
        %s936 = sadd.s32 %s319, %s935
        %s937 = smul.addr %s935, 4
        %s938 = scalar_lea.vmem %s278, %s937
        %v939 = vld [vmem:[%s938] sm:$0xf]
        %v940 = vunpack.c.l.bf16 %v939
        %942 = vrot.lane.b32.xlu0 %v932, 32
        %v943 = vpop.permute.xlu0 %942
        %v945 = vsel %vm339, %v943, 0
        %947 = vmatprep.subr.bf16.mxu0 0
        %948 = vmatpush1.bf16.msra.mxu0 %v335
        %949 = vmatprep.subr.bf16.mxu0 0
        %950 = vmatpush1.bf16.msra.mxu0 %v336
        %951 = vmatprep.subr.bf16.mxu0 0
        %952 = vmatpush1.bf16.msra.mxu0 0
        %953 = vmatprep.subr.bf16.mxu0 0
        %954 = vmatpush1.bf16.msra.mxu0 0
        %955 = vmatprep.subr.bf16.mxu0 0
        %956 = vmatpush1.bf16.msra.mxu0 0
        %957 = vmatprep.subr.bf16.mxu0 0
        %958 = vmatpush1.bf16.msra.mxu0 0
        %959 = vmatprep.subr.bf16.mxu0 0
        %960 = vmatpush1.bf16.msra.mxu0 0
        %961 = vmatprep.subr.bf16.mxu0 0
        %962 = vmatpush1.bf16.msra.mxu0 0
        %963 = vmatprep.subr.bf16.mxu0 0
        %964 = vmatpush1.bf16.msra.mxu0 0
        %965 = vmatprep.subr.bf16.mxu0 0
        %966 = vmatpush1.bf16.msra.mxu0 0
        %967 = vmatprep.subr.bf16.mxu0 0
        %968 = vmatpush1.bf16.msra.mxu0 0
        %969 = vmatprep.subr.bf16.mxu0 0
        %970 = vmatpush1.bf16.msra.mxu0 0
        %971 = vmatprep.subr.bf16.mxu0 0
        %972 = vmatpush1.bf16.msra.mxu0 0
        %973 = vmatprep.subr.bf16.mxu0 0
        %974 = vmatpush1.bf16.msra.mxu0 0
        %975 = vmatprep.subr.bf16.mxu0 0
        %976 = vmatpush1.bf16.msra.mxu0 0
        %977 = vmatprep.subr.bf16.mxu0 0
        %978 = vmatpush1.bf16.msra.mxu0 0
        %979 = vmatprep.mubr.bf16.mxu0 0
        %980 = vmatmul.mubr.bf16.gmra.mrb[0].mxu0 %v945
        %v981 = vpop.f32.mrb[0].mxu0
        %v982 = vadd.f32 0.0, %v981
        %v983 = vpop.f32.mrb[0].mxu0
        %v984 = vpop.f32.mrb[0].mxu0
        %v985 = vpop.f32.mrb[0].mxu0
        %986 = vdwg.mxu0
        %v987 = vadd.f32 %v940, %v982
        %v988 = vxor.u32 %v987, 2147483648
        %v989 = vmul.f32 %v988, 1.442695
        %v990 = vpow.pop %v989
        %v991 = vadd.f32 %v990, 1.0
        %v992 = vrcp.pop %v991
        %v993 = vmul.f32 1.0, %v992
        %v994 = vtanh.pop %v987
        %v995 = vmul.f32 %v993, %v933
        %997 = vrot.lane.b32.xlu0 %v994, 64
        %v998 = vpop.permute.xlu0 %997
        %v1000 = vmul.f32 %v993, %v998
        %1002 = vrot.lane.b32.xlu0 %v1000, 32
        %v1003 = vpop.permute.xlu0 %1002
        %v1005 = vadd.f32 %v995, %v1003
        %v1006 = vtanh.pop %v1005
        %1008 = vrot.lane.b32.xlu0 %v1006, 64
        %v1009 = vpop.permute.xlu0 %1008
        %v1011 = vmul.f32 %v993, %v1009
        %v1012 = vpack.c.bf16 %v1011, %v1011
        %v1013 = vstv %s936
        %vm1014 = vcmp.lt.s32.totalorder %v1013, %v307
        %v1015 = vsel %vm1014, 1, 0
        %1016 = vset.pattern.permute.xlu0 0
        %1017 = vperm.xlu0 %1016, %v1015
        %v1018 = vpop.permute.xlu0 %1017
        %vm1019 = vcmp.eq.s32.totalorder %v1018, 1
        %vm1020 = vmpackc.low %vm1019, %vm1019
        %v1021 = vsel %vm1020, %v1012, 0
        %v1023 = vunpack.c.l.b16 %v1021
        %v1024 = vpack.c.b16 %v1023, %v1023
        %1025 = vrot.lane.b32.xlu0 %v1024, 32
        %v1026 = vpop.permute.xlu0 %1025
        %s1028 = smul.addr %s935, 4
        %s1029 = scalar_lea.vmem %s259, %s1028 [#allocation4]
        %1030 = vst.msk [vmem:[%s1029] sm:$0xf] %vm430, %v1026
        %v1031 = vsel %vm1020, %v1012, %v932
        %v1032 = vsel %vm1019, %v1005, %v933
        %s1033 = smul.u32 %s314, 7
        %s1034 = sadd.s32 %s312, %s1033
        %s1035 = sadd.s32 %s319, %s1034
        %s1036 = smul.addr %s1034, 4
        %s1037 = scalar_lea.vmem %s278, %s1036
        %v1038 = vld [vmem:[%s1037] sm:$0xf]
        %v1039 = vunpack.c.l.bf16 %v1038
        %1041 = vrot.lane.b32.xlu0 %v1031, 32
        %v1042 = vpop.permute.xlu0 %1041
        %v1044 = vsel %vm339, %v1042, 0
        %1046 = vmatprep.subr.bf16.mxu0 0
        %1047 = vmatpush1.bf16.msra.mxu0 %v335
        %1048 = vmatprep.subr.bf16.mxu0 0
        %1049 = vmatpush1.bf16.msra.mxu0 %v336
        %1050 = vmatprep.subr.bf16.mxu0 0
        %1051 = vmatpush1.bf16.msra.mxu0 0
        %1052 = vmatprep.subr.bf16.mxu0 0
        %1053 = vmatpush1.bf16.msra.mxu0 0
        %1054 = vmatprep.subr.bf16.mxu0 0
        %1055 = vmatpush1.bf16.msra.mxu0 0
        %1056 = vmatprep.subr.bf16.mxu0 0
        %1057 = vmatpush1.bf16.msra.mxu0 0
        %1058 = vmatprep.subr.bf16.mxu0 0
        %1059 = vmatpush1.bf16.msra.mxu0 0
        %1060 = vmatprep.subr.bf16.mxu0 0
        %1061 = vmatpush1.bf16.msra.mxu0 0
        %1062 = vmatprep.subr.bf16.mxu0 0
        %1063 = vmatpush1.bf16.msra.mxu0 0
        %1064 = vmatprep.subr.bf16.mxu0 0
        %1065 = vmatpush1.bf16.msra.mxu0 0
        %1066 = vmatprep.subr.bf16.mxu0 0
        %1067 = vmatpush1.bf16.msra.mxu0 0
        %1068 = vmatprep.subr.bf16.mxu0 0
        %1069 = vmatpush1.bf16.msra.mxu0 0
        %1070 = vmatprep.subr.bf16.mxu0 0
        %1071 = vmatpush1.bf16.msra.mxu0 0
        %1072 = vmatprep.subr.bf16.mxu0 0
        %1073 = vmatpush1.bf16.msra.mxu0 0
        %1074 = vmatprep.subr.bf16.mxu0 0
        %1075 = vmatpush1.bf16.msra.mxu0 0
        %1076 = vmatprep.subr.bf16.mxu0 0
        %1077 = vmatpush1.bf16.msra.mxu0 0
        %1078 = vmatprep.mubr.bf16.mxu0 0
        %1079 = vmatmul.mubr.bf16.gmra.mrb[0].mxu0 %v1044
        %v1080 = vpop.f32.mrb[0].mxu0
        %v1081 = vadd.f32 0.0, %v1080
        %v1082 = vpop.f32.mrb[0].mxu0
        %v1083 = vpop.f32.mrb[0].mxu0
        %v1084 = vpop.f32.mrb[0].mxu0
        %1085 = vdwg.mxu0
        %v1086 = vadd.f32 %v1039, %v1081
        %v1087 = vxor.u32 %v1086, 2147483648
        %v1088 = vmul.f32 %v1087, 1.442695
        %v1089 = vpow.pop %v1088
        %v1090 = vadd.f32 %v1089, 1.0
        %v1091 = vrcp.pop %v1090
        %v1092 = vmul.f32 1.0, %v1091
        %v1093 = vtanh.pop %v1086
        %v1094 = vmul.f32 %v1092, %v1032
        %1096 = vrot.lane.b32.xlu0 %v1093, 64
        %v1097 = vpop.permute.xlu0 %1096
        %v1099 = vmul.f32 %v1092, %v1097
        %1101 = vrot.lane.b32.xlu0 %v1099, 32
        %v1102 = vpop.permute.xlu0 %1101
        %v1104 = vadd.f32 %v1094, %v1102
        %v1105 = vtanh.pop %v1104
        %1107 = vrot.lane.b32.xlu0 %v1105, 64
        %v1108 = vpop.permute.xlu0 %1107
        %v1110 = vmul.f32 %v1092, %v1108
        %v1111 = vpack.c.bf16 %v1110, %v1110
        %v1112 = vstv %s1035
        %vm1113 = vcmp.lt.s32.totalorder %v1112, %v307
        %v1114 = vsel %vm1113, 1, 0
        %1115 = vset.pattern.permute.xlu0 0
        %1116 = vperm.xlu0 %1115, %v1114
        %v1117 = vpop.permute.xlu0 %1116
        %vm1118 = vcmp.eq.s32.totalorder %v1117, 1
        %vm1119 = vmpackc.low %vm1118, %vm1118
        %v1120 = vsel %vm1119, %v1111, 0
        %v1122 = vunpack.c.l.b16 %v1120
        %v1123 = vpack.c.b16 %v1122, %v1122
        %1124 = vrot.lane.b32.xlu0 %v1123, 32
        %v1125 = vpop.permute.xlu0 %1124
        %s1127 = smul.addr %s1034, 4
        %s1128 = scalar_lea.vmem %s259, %s1127 [#allocation4]
        %1129 = vst.msk [vmem:[%s1128] sm:$0xf] %vm430, %v1125
        %v1130 = vsel %vm1119, %v1111, %v1031
        %v1131 = vsel %vm1118, %v1104, %v1032
        %v1133 = vunpack.c.l.b16 %v1130
        %v1134 = vpack.c.b16 %v1133, %v1133
        %1135 = vrot.lane.b32.xlu0 %v1134, 32
        %v1136 = vpop.permute.xlu0 %1135
        %1138 = vst.msk [vmem:[#allocation2] sm:$0xf] %vm430, %v1136
        %1140 = vrot.lane.b32.xlu0 %v1131, 96
        %v1141 = vpop.permute.xlu0 %1140
        %1143 = vst.msk [vmem:[#allocation3] sm:$0xff] %vm339, %v1141
        // Predicated region
        $region37: #{rnn_forward.7} parent=31 // pred_check
          %p1144 = pneg %p299
        $region38: #{rnn_forward.7} parent=31 // pred_check_branch
          %1146 = sbr.rel (%p1144) target = $region40
        $region39: #{rnn_forward.7} parent=31 // pred_region
          %v1147 = vunpack.c.l.bf16 %v1130
          %1149 = vrot.lane.b32.xlu0 %v1147, 32
          %v1150 = vpop.permute.xlu0 %1149
          %1152 = vst.msk [vmem:[%s297] sm:$0xff] %vm339, %v1150
        $region40: #{rnn_forward.7} parent=31 // pred_fallthru
          _
        %s1153 = sand.u32 %s132, 1
        %s1154 = scalar_lea.sflag [#allocation5], %s1153
        %s1155 = sand.u32 %s132, 1
        %s1156 = smul.addr %s1155, 32
        %s1157 = scalar_lea.vmem [#allocation4], %s1156
        %p1158 = scmp.lt.s32.totalorder %s23, 1
        %s1159 = scalar_select %p1158, %s23, 1
        %s1160 = smul.addr %s1159, 8
        %s1161 = scalar_lea.vmem %s4, %s1160
        // Predicated region
        $region41: #{rnn_forward.7} parent=31 // pred_check
          %p1162 = pneg %p142
        $region42: #{rnn_forward.7} parent=31 // pred_check_branch
          %1164 = sbr.rel (%p1162) target = $region44
        $region43: #{rnn_forward.7} parent=31 // pred_region
          %s1165 = smul.u32 %s24, 2
          %s1166 = ssub.s32 0, %s1165
          %s1167 = smul.u32 %s23, %s1166
          %s1168 = sadd.s32 %s24, %s1167
          %s1169 = smul.u32 8, %s1168
          %s1171 = ssub.s32 512, 512
          %1172 = vsyncadd %s1154, %s1171
          %s1173 = smul.addr %s23, 8
          %s1174 = sadd.s32 %s1169, %s1173
          %s1175 = smul.addr %s1174, 64
          %s1176 = scalar_lea.hbm %s3, %s1175
          %s1177 = sshll.u32 %s1157, 4
          %s1178 = int_to_ptr.vmem [resolvable:$true] %s1177
          %1183 = dma.vmem_to_hbm [thread:$0]  %s1178, 512, %s1176, %s1154, 64, 64, 4
        $region44: #{rnn_forward.7} parent=31 // pred_fallthru
          _
        // Predicated region
        $region45: #{rnn_forward.7} parent=31 // pred_check
          %p1184 = pneg %p168
        $region46: #{rnn_forward.7} parent=31 // pred_check_branch
          %1186 = sbr.rel (%p1184) target = $region48
        $region47: #{rnn_forward.7} parent=31 // pred_region
          _
        $region48: #{rnn_forward.7} parent=31 // pred_fallthru
          _
      $region32: #{rnn_forward.7} parent=5 // pred_fallthru
        _
      %p1187 = scmp.le.s32.totalorder 2, %s14
      // Predicated region
      $region49: #{rnn_forward.7} parent=5 // pred_check
        %p1188 = pneg %p1187
      $region50: #{rnn_forward.7} parent=5 // pred_check_branch
        %1190 = sbr.rel (%p1188) target = $region52
      $region51: #{rnn_forward.7} parent=5 // pred_region
        %s1191 = ssub.s32 %s14, 2
        // Predicated region
        $region53: #{rnn_forward.7} parent=51 // pred_check
          %p1192 = pneg %p148
        $region54: #{rnn_forward.7} parent=51 // pred_check_branch
          %1194 = sbr.rel (%p1192) target = $region56
        $region55: #{rnn_forward.7} parent=51 // pred_region
          %s1195 = sand.u32 %s133, 1
          %s1196 = scalar_lea.sflag [#allocation5], %s1195
          %s1197 = sand.u32 %s133, 1
          %s1198 = smul.addr %s1197, 32
          %s1199 = scalar_lea.vmem [#allocation4], %s1198
          %1200 = dma.done %s1196, 512
        $region56: #{rnn_forward.7} parent=51 // pred_fallthru
          _
        // Predicated region
        $region57: #{rnn_forward.7} parent=51 // pred_check
          %p1201 = pneg %p174
        $region58: #{rnn_forward.7} parent=51 // pred_check_branch
          %1203 = sbr.rel (%p1201) target = $region60
        $region59: #{rnn_forward.7} parent=51 // pred_region
          %p1204 = scmp.lt.s32.totalorder %s25, 1
          %s1205 = scalar_select %p1204, %s25, 1
          %s1206 = smul.addr %s1205, 8
          %s1207 = scalar_lea.vmem %s4, %s1206
        $region60: #{rnn_forward.7} parent=51 // pred_fallthru
          _
      $region52: #{rnn_forward.7} parent=5 // pred_fallthru
        _
    $region6: #{rnn_forward.7} parent=1 // loop_footer
      %s18 = sadd.s32 1, %s14
    $region7: #{rnn_forward.7} parent=1 // loop_footer_branch
      %13 = sbr.rel target = $region3
    $region8: #{rnn_forward.7} parent=1 // loop_exit
      _
    %1208 = vsyncpa [#allocation5], 1
    %s1209 = scalar_lea.sflag [#allocation5], 1
    %1210 = vsyncpa %s1209, 1

</llo_original>
